<compile_context>
chip_gen: v7x
topology: tpu7x:2x2x1
jax: 0.10.0
libtpu: 0.0.40
codegen_flags: <defaults>
</compile_context>

<pallas_src>
import jax
import jax.numpy as jnp
import numpy as np
from jax.experimental import pallas as pl
from jax.experimental.pallas import tpu as pltpu

# ----------------------------- hyper-params ---------------------------------
V = 64            # vocab size (len(vocab))
VP = 128          # vocab padded to a full lane tile (lane-dense output)
E = 32            # emb_dim
H = 32            # enc_hidden == dec_hidden (enc_layers = 1)
CH = 16           # cls_hidden (DomainClassifier hidden)
B = 8             # batch
S = 8             # sequence length (src_len.max())
PAD = 0           # vocab.pad()
UNK = 1           # vocab.unk()

HL = 128          # lane-aligned hidden tile (one full lane tile per gate)
GW = 3 * HL       # per-GRU gate slab width (r | z | n)
ENC_W = 2 * GW    # fused rec+cls encoder gate width (gate-major, rec|cls minor)
TOT_W = ENC_W + GW  # all three GRUs' input-projection width (1152)
SENTI_LANE = V    # lane of output row-block 0 that carries the classifier out


# ----------------------------- fused Pallas kernel ---------------------------
def lm_kernel(ids_ref, embwih_ref, whhe_ref, whhd_ref, bias_ref,
              projw_ref, projb_ref, out_ref):
    f32, bf16 = jnp.float32, jnp.bfloat16
    SB = S * B

    # ---- embedding gather + input-gate projections fused into ONE matmul ----
    # emb_wih = embedding @ [wih_rec | wih_cls | wih_dec] is precomputed in the
    # wrapper, so onehot @ emb_wih == (onehot @ emb) @ wih (exact row select).
    ids = ids_ref[...]                                      # [S*B, 1] int32
    ids = jnp.where(ids >= V, UNK, ids)                     # filter_oov
    iota = jax.lax.broadcasted_iota(jnp.int32, (SB, V), 1)
    onehot = (ids == iota).astype(bf16)                     # [S*B, V], exact
    # r/z-gate biases have bhh folded in (they only ever appear as gi + gh).
    gi_all = jnp.dot(onehot, embwih_ref[...],
                     preferred_element_type=f32) + bias_ref[0:1, :]  # [64,1152]

    whh_enc = whhe_ref[...]                                 # [256, 768] bf16
    whh_dec = whhd_ref[...]                                 # [128, 384] bf16
    # n-gate recurrent bias (must stay inside r*(.)): broadcast ONCE, not per step.
    bhhn_enc = jnp.broadcast_to(bias_ref[1:2, :2 * HL], (B, 2 * HL))
    bhhn_dec = jnp.broadcast_to(bias_ref[1:2, 2 * HL:3 * HL], (B, HL))

    def gru_step(gi, h, whh, bhh_n, w):
        # gi:[B,3w], h:[B,w]; gate tiles r|z|n are 128-lane aligned slices.
        gh = jnp.dot(h.astype(bf16), whh, preferred_element_type=f32)
        r = jax.nn.sigmoid(gi[:, :w] + gh[:, :w])
        z = jax.nn.sigmoid(gi[:, w:2 * w] + gh[:, w:2 * w])
        n = jnp.tanh(gi[:, 2 * w:] + r * (gh[:, 2 * w:] + bhh_n))
        return (1.0 - z) * n + z * h

    # ---- both encoders fused into one block-diagonal recurrence ----
    # h_cat lanes [0:128]=rec, [128:256]=cls (only first H of each meaningful).
    h_cat = jnp.zeros((B, 2 * HL), f32)
    for t in range(S):                                      # static unroll
        h_cat = gru_step(gi_all[t * B:(t + 1) * B, :ENC_W], h_cat,
                         whh_enc, bhhn_enc, 2 * HL)

    # ---- enc -> dec bridge: tanh(fc(.)) per encoder ----
    h0 = jnp.tanh(jnp.dot(h_cat[:, :HL].astype(bf16), projw_ref[0],
                          preferred_element_type=f32) + projb_ref[0])
    h_cls = jnp.tanh(jnp.dot(h_cat[:, HL:].astype(bf16), projw_ref[1],
                             preferred_element_type=f32) + projb_ref[1])

    # ---- domain classifier: Linear -> ReLU -> Linear; result lands in lane V
    z1 = jnp.maximum(jnp.dot(h_cls.astype(bf16), projw_ref[2],
                             preferred_element_type=f32) + projb_ref[2], 0.0)
    senti_blk = jnp.dot(z1.astype(bf16), projw_ref[3],
                        preferred_element_type=f32) + projb_ref[3]   # [B, VP]

    # Row block 0 doubles as the t=0 all-zero vocab dist (lanes 0:V are exactly
    # zero) and carries senti in lane V -> one lane-dense output, one DMA.
    out_ref[pl.ds(0, B), :] = senti_blk

    # ---- decoder recurrence (teacher forcing), collect hidden states ----
    h_d = h0
    hs = []
    for t in range(S - 1):                                  # static unroll
        h_d = gru_step(gi_all[t * B:(t + 1) * B, ENC_W:], h_d,
                       whh_dec, bhhn_dec, HL)
        hs.append(h_d)
    hs = jnp.concatenate(hs, axis=0)                        # [(S-1)*B, 128]

    # ---- single fused vocab projection; direct lane-dense store ----
    dists = jnp.dot(hs.astype(bf16), projw_ref[4],
                    preferred_element_type=f32) + projb_ref[4]       # [56, VP]
    out_ref[pl.ds(B, (S - 1) * B), :] = dists


# ----------------------------- param packing (one-time, outside jit) ---------
def pack_params(p):
    """Repack the per-module params into a few lane-aligned MXU-friendly slabs."""
    er, ec, d, c = p["enc_rec"], p["enc_cls"], p["dec"], p["cls"]

    def gate(a, g):                       # gate g block of a [*, 3H] GRU param
        return a[:, g * H:(g + 1) * H]

    wih_all = jnp.zeros((E, TOT_W), jnp.float32)
    bias = jnp.zeros((2, TOT_W), jnp.float32)    # row0: gi bias, row1: bhh_n
    whh_enc = jnp.zeros((2 * HL, ENC_W), jnp.float32)
    whh_dec = jnp.zeros((HL, GW), jnp.float32)

    # fused encoders: gate-major / (rec|cls)-minor 128-lane column tiles
    for e, gp in enumerate((er, ec)):
        for g in range(3):
            col = (2 * g + e) * HL
            wih_all = wih_all.at[:, col:col + H].set(gate(gp["wih"], g))
            gib = gate(gp["bih"], g) + (gate(gp["bhh"], g) if g < 2 else 0.0)
            bias = bias.at[0:1, col:col + H].set(gib)
            whh_enc = whh_enc.at[e * HL:e * HL + H,
                                 col:col + H].set(gate(gp["whh"], g))
        bias = bias.at[1:2, e * HL:e * HL + H].set(gate(gp["bhh"], 2))

    # decoder GRU
    for g in range(3):
        col = ENC_W + g * HL
        wih_all = wih_all.at[:, col:col + H].set(gate(d["wih"], g))
        gib = gate(d["bih"], g) + (gate(d["bhh"], g) if g < 2 else 0.0)
        bias = bias.at[0:1, col:col + H].set(gib)
        whh_dec = whh_dec.at[:H, g * HL:g * HL + H].set(gate(d["whh"], g))
    bias = bias.at[1:2, 2 * HL:2 * HL + H].set(gate(d["bhh"], 2))

    # fold the embedding into the input projections (exact for row selection)
    emb_wih = p["embedding"] @ wih_all                       # [V, TOT_W]

    def pad_block(a, rows, col0=0):
        out = jnp.zeros((rows, HL), jnp.float32)
        return out.at[:a.shape[0], col0:col0 + a.shape[1]].set(a)

    proj_w = jnp.stack([pad_block(er["wfc"], HL), pad_block(ec["wfc"], HL),
                        pad_block(c["w1"], HL),
                        pad_block(c["w2"], HL, col0=SENTI_LANE),
                        pad_block(d["wout"], HL)])
    proj_b = jnp.stack([pad_block(er["bfc"], 1), pad_block(ec["bfc"], 1),
                        pad_block(c["b1"], 1),
                        pad_block(c["b2"], 1, col0=SENTI_LANE),
                        pad_block(d["bout"], 1)])

    return dict(emb_wih=emb_wih.astype(jnp.bfloat16),
                whh_enc=whh_enc.astype(jnp.bfloat16),
                whh_dec=whh_dec.astype(jnp.bfloat16),
                bias=bias,
                proj_w=proj_w.astype(jnp.bfloat16),
                proj_b=proj_b)


# ----------------------------- model glue ------------------------------------
def language_model_forward(packed, src_input, src_senti, src_len,
                           gamma=0.5, tf_ratio=0.5):
    # TODO(synk): src_len is ignored (all sequences full length) -> no
    #             pad-position masking in the recurrences.
    # TODO(synk): sample_target_docs / GradReversal / stochastic teacher
    #             forcing are training-time python RNG over undefined globals;
    #             the classifier is applied to the cls-encoder bridge output
    #             and decoding is deterministic teacher forcing.
    ids_flat = src_input.reshape(S * B, 1).astype(jnp.int32)    # row = s*B + b
    vspec = pl.BlockSpec(memory_space=pltpu.MemorySpace.VMEM)
    dist_flat = pl.pallas_call(
        lm_kernel,
        out_shape=jax.ShapeDtypeStruct((S * B, VP), jnp.float32),
        in_specs=[vspec] * 7,
        out_specs=vspec,
    )(ids_flat, packed["emb_wih"], packed["whh_enc"], packed["whh_dec"],
      packed["bias"], packed["proj_w"], packed["proj_b"])

    senti_preds = dist_flat[:B, SENTI_LANE]                      # squeeze(1)
    rec_final_dists = jnp.transpose(
        dist_flat.reshape(S, B, VP)[:, :, :V], (1, 2, 0))        # [B, V, S]
    return senti_preds, rec_final_dists


# ----------------------------- pure-JAX reference -----------------------------
def reference_forward(params, src_input):
    emb = params["embedding"]

    def embed(ids):
        return emb[jnp.where(ids >= V, UNK, ids)]

    def gru_seq(x_seq, h, p):
        hs = []
        for t in range(x_seq.shape[0]):
            gi = x_seq[t] @ p["wih"] + p["bih"]
            gh = h @ p["whh"] + p["bhh"]
            r = jax.nn.sigmoid(gi[:, :H] + gh[:, :H])
            z = jax.nn.sigmoid(gi[:, H:2 * H] + gh[:, H:2 * H])
            n = jnp.tanh(gi[:, 2 * H:] + r * gh[:, 2 * H:])
            h = (1.0 - z) * n + z * h
            hs.append(h)
        return jnp.stack(hs), h

    x = embed(src_input)                                         # [S, B, E]
    _, h_r = gru_seq(x, jnp.zeros((B, H), jnp.float32), params["enc_rec"])
    _, h_c = gru_seq(x, jnp.zeros((B, H), jnp.float32), params["enc_cls"])
    H_rec = jnp.tanh(h_r @ params["enc_rec"]["wfc"] + params["enc_rec"]["bfc"])
    H_cls = jnp.tanh(h_c @ params["enc_cls"]["wfc"] + params["enc_cls"]["bfc"])
    c = params["cls"]
    senti = (jnp.maximum(H_cls @ c["w1"] + c["b1"], 0.0) @ c["w2"] + c["b2"])[:, 0]
    dec_x = embed(src_input[:S - 1])
    hs, _ = gru_seq(dec_x, H_rec, params["dec"])
    dists = hs @ params["dec"]["wout"] + params["dec"]["bout"]   # [S-1, B, V]
    dists = jnp.transpose(dists, (1, 2, 0))
    return senti, jnp.concatenate(
        [jnp.zeros((B, V, 1), jnp.float32), dists], axis=-1)


# ----------------------------- params -----------------------------------------
def init_params(key):
    ks = iter(jax.random.split(key, 32))

    def w(shape, scale=0.1):
        return (scale * jax.random.normal(next(ks), shape)).astype(jnp.float32)

    emb = w((V, E)).at[PAD].set(0.0)  # padding_idx row zeroed

    def gru(in_dim):
        return dict(wih=w((in_dim, 3 * H)), whh=w((H, 3 * H)),
                    bih=w((1, 3 * H)), bhh=w((1, 3 * H)))

    enc_rec = gru(E); enc_rec.update(wfc=w((H, H)), bfc=w((1, H)))
    enc_cls = gru(E); enc_cls.update(wfc=w((H, H)), bfc=w((1, H)))
    dec = gru(E); dec.update(wout=w((H, V)), bout=w((1, V)))
    cls = dict(w1=w((H, CH)), b1=w((1, CH)), w2=w((CH, 1)), b2=w((1, 1)))
    return dict(embedding=emb, enc_rec=enc_rec, enc_cls=enc_cls, dec=dec, cls=cls)


# ----------------------------- main --------------------------------------------
if __name__ == "__main__":
    key = jax.random.PRNGKey(0)
    pkey, dkey, skey = jax.random.split(key, 3)

    params = init_params(pkey)
    packed = pack_params(params)            # one-time repack, outside the jit
    src_input = jax.random.randint(dkey, (S, B), 2, V, dtype=jnp.int32)  # [S, B]
    src_senti = jax.random.randint(skey, (B,), 0, 2, dtype=jnp.int32)
    src_len = jnp.full((B,), S, dtype=jnp.int32)

    fwd = jax.jit(language_model_forward)
    senti_preds, rec_final_dists = fwd(packed, src_input, src_senti, src_len)
    jax.block_until_ready((senti_preds, rec_final_dists))

    assert senti_preds.shape == (B,)
    assert rec_final_dists.shape == (B, V, S)

    ref_s, ref_d = reference_forward(params, src_input)
    # bf16 MXU operands (per perf review) -> ~1e-3 abs error vs f32 reference.
    np.testing.assert_allclose(np.asarray(senti_preds), np.asarray(ref_s),
                               atol=1e-2, rtol=0)
    np.testing.assert_allclose(np.asarray(rec_final_dists), np.asarray(ref_d),
                               atol=1e-2, rtol=0)
    print("KERNEL_OK")
</pallas_src>

<mosaic_0001>
module attributes {stable_mosaic.version = 11 : i64} {
  func.func @lm_kernel(%arg0: memref<64x1xi32, #tpu.memory_space<vmem>>, %arg1: memref<64x1152xbf16, #tpu.memory_space<vmem>>, %arg2: memref<256x768xbf16, #tpu.memory_space<vmem>>, %arg3: memref<128x384xbf16, #tpu.memory_space<vmem>>, %arg4: memref<2x1152xf32, #tpu.memory_space<vmem>>, %arg5: memref<5x128x128xbf16, #tpu.memory_space<vmem>>, %arg6: memref<5x1x128xf32, #tpu.memory_space<vmem>>, %arg7: memref<64x128xf32, #tpu.memory_space<vmem>>) attributes {dimension_semantics = [], scalar_prefetch = 0 : i64, scratch_operands = 0 : i64, tpu.core_type = #tpu.core_type<tc>} {
    %c0 = arith.constant 0 : index
    %c0_0 = arith.constant 0 : index
    %0 = vector.load %arg0[%c0, %c0_0] : memref<64x1xi32, #tpu.memory_space<vmem>>, vector<64x1xi32>
    %c64_i32 = arith.constant 64 : i32
    %1 = vector.broadcast %c64_i32 : i32 to vector<64x1xi32>
    %2 = arith.cmpi sge, %0, %1 : vector<64x1xi32>
    %c1_i32 = arith.constant 1 : i32
    %3 = vector.broadcast %c1_i32 : i32 to vector<64x1xi32>
    %4 = arith.select %2, %3, %0 : vector<64x1xi1>, vector<64x1xi32>
    %5 = tpu.iota {dimensions = array<i32: 1>} : vector<64x64xi32>
    %6 = vector.broadcast %4 : vector<64x1xi32> to vector<64x64xi32>
    %7 = arith.cmpi eq, %6, %5 : vector<64x64xi32>
    %8 = arith.extui %7 : vector<64x64xi1> to vector<64x64xi32>
    %9 = arith.sitofp %8 : vector<64x64xi32> to vector<64x64xf32>
    %10 = arith.truncf %9 : vector<64x64xf32> to vector<64x64xbf16>
    %c0_1 = arith.constant 0 : index
    %c0_2 = arith.constant 0 : index
    %11 = vector.load %arg1[%c0_1, %c0_2] : memref<64x1152xbf16, #tpu.memory_space<vmem>>, vector<64x1152xbf16>
    %cst = arith.constant dense<0.000000e+00> : vector<64x1152xf32>
    %12 = tpu.matmul %10, %11, %cst {dimension_numbers = #tpu.dot_dimension_numbers<[1], [0], [0], [1], [0, 0, 1, 1], [], []>} : vector<64x64xbf16>, vector<64x1152xbf16>, vector<64x1152xf32> -> vector<64x1152xf32>
    %c0_3 = arith.constant 0 : index
    %c0_4 = arith.constant 0 : index
    %13 = vector.load %arg4[%c0_3, %c0_4] : memref<2x1152xf32, #tpu.memory_space<vmem>>, vector<1x1152xf32>
    %14 = vector.broadcast %13 : vector<1x1152xf32> to vector<64x1152xf32>
    %15 = arith.addf %12, %14 : vector<64x1152xf32>
    %c0_5 = arith.constant 0 : index
    %c0_6 = arith.constant 0 : index
    %16 = vector.load %arg2[%c0_5, %c0_6] : memref<256x768xbf16, #tpu.memory_space<vmem>>, vector<256x768xbf16>
    %c0_7 = arith.constant 0 : index
    %c0_8 = arith.constant 0 : index
    %17 = vector.load %arg3[%c0_7, %c0_8] : memref<128x384xbf16, #tpu.memory_space<vmem>>, vector<128x384xbf16>
    %c1 = arith.constant 1 : index
    %c0_9 = arith.constant 0 : index
    %18 = vector.load %arg4[%c1, %c0_9] : memref<2x1152xf32, #tpu.memory_space<vmem>>, vector<1x256xf32>
    %19 = vector.shape_cast %18 : vector<1x256xf32> to vector<1x256xf32>
    %20 = vector.broadcast %19 : vector<1x256xf32> to vector<8x256xf32>
    %c1_10 = arith.constant 1 : index
    %c256 = arith.constant 256 : index
    %21 = vector.load %arg4[%c1_10, %c256] : memref<2x1152xf32, #tpu.memory_space<vmem>>, vector<1x128xf32>
    %22 = vector.shape_cast %21 : vector<1x128xf32> to vector<1x128xf32>
    %23 = vector.broadcast %22 : vector<1x128xf32> to vector<8x128xf32>
    %cst_11 = arith.constant 0.000000e+00 : f32
    %24 = vector.broadcast %cst_11 : f32 to vector<8x256xf32>
    %25 = vector.extract_strided_slice %15 {offsets = [0, 0], sizes = [8, 768], strides = [1, 1]} : vector<64x1152xf32> to vector<8x768xf32>
    %26 = arith.truncf %24 : vector<8x256xf32> to vector<8x256xbf16>
    %cst_12 = arith.constant dense<0.000000e+00> : vector<8x768xf32>
    %27 = tpu.matmul %26, %16, %cst_12 {dimension_numbers = #tpu.dot_dimension_numbers<[1], [0], [0], [1], [0, 0, 1, 1], [], []>} : vector<8x256xbf16>, vector<256x768xbf16>, vector<8x768xf32> -> vector<8x768xf32>
    %28 = vector.extract_strided_slice %25 {offsets = [0, 0], sizes = [8, 256], strides = [1, 1]} : vector<8x768xf32> to vector<8x256xf32>
    %29 = vector.extract_strided_slice %27 {offsets = [0, 0], sizes = [8, 256], strides = [1, 1]} : vector<8x768xf32> to vector<8x256xf32>
    %30 = arith.addf %28, %29 : vector<8x256xf32>
    %31 = arith.negf %30 : vector<8x256xf32>
    %32 = math.exp %31 : vector<8x256xf32>
    %cst_13 = arith.constant 1.000000e+00 : f32
    %33 = vector.broadcast %cst_13 : f32 to vector<8x256xf32>
    %34 = arith.addf %33, %32 : vector<8x256xf32>
    %35 = arith.divf %33, %34 : vector<8x256xf32>
    %36 = vector.extract_strided_slice %25 {offsets = [0, 256], sizes = [8, 256], strides = [1, 1]} : vector<8x768xf32> to vector<8x256xf32>
    %37 = vector.extract_strided_slice %27 {offsets = [0, 256], sizes = [8, 256], strides = [1, 1]} : vector<8x768xf32> to vector<8x256xf32>
    %38 = arith.addf %36, %37 : vector<8x256xf32>
    %39 = arith.negf %38 : vector<8x256xf32>
    %40 = math.exp %39 : vector<8x256xf32>
    %cst_14 = arith.constant 1.000000e+00 : f32
    %41 = vector.broadcast %cst_14 : f32 to vector<8x256xf32>
    %42 = arith.addf %41, %40 : vector<8x256xf32>
    %43 = arith.divf %41, %42 : vector<8x256xf32>
    %44 = vector.extract_strided_slice %25 {offsets = [0, 512], sizes = [8, 256], strides = [1, 1]} : vector<8x768xf32> to vector<8x256xf32>
    %45 = vector.extract_strided_slice %27 {offsets = [0, 512], sizes = [8, 256], strides = [1, 1]} : vector<8x768xf32> to vector<8x256xf32>
    %46 = arith.addf %45, %20 : vector<8x256xf32>
    %47 = arith.mulf %35, %46 : vector<8x256xf32>
    %48 = arith.addf %44, %47 : vector<8x256xf32>
    %49 = math.tanh %48 : vector<8x256xf32>
    %cst_15 = arith.constant 1.000000e+00 : f32
    %50 = vector.broadcast %cst_15 : f32 to vector<8x256xf32>
    %51 = arith.subf %50, %43 : vector<8x256xf32>
    %52 = arith.mulf %51, %49 : vector<8x256xf32>
    %53 = arith.mulf %43, %24 : vector<8x256xf32>
    %54 = arith.addf %52, %53 : vector<8x256xf32>
    %55 = vector.extract_strided_slice %15 {offsets = [8, 0], sizes = [8, 768], strides = [1, 1]} : vector<64x1152xf32> to vector<8x768xf32>
    %56 = arith.truncf %54 : vector<8x256xf32> to vector<8x256xbf16>
    %cst_16 = arith.constant dense<0.000000e+00> : vector<8x768xf32>
    %57 = tpu.matmul %56, %16, %cst_16 {dimension_numbers = #tpu.dot_dimension_numbers<[1], [0], [0], [1], [0, 0, 1, 1], [], []>} : vector<8x256xbf16>, vector<256x768xbf16>, vector<8x768xf32> -> vector<8x768xf32>
    %58 = vector.extract_strided_slice %55 {offsets = [0, 0], sizes = [8, 256], strides = [1, 1]} : vector<8x768xf32> to vector<8x256xf32>
    %59 = vector.extract_strided_slice %57 {offsets = [0, 0], sizes = [8, 256], strides = [1, 1]} : vector<8x768xf32> to vector<8x256xf32>
    %60 = arith.addf %58, %59 : vector<8x256xf32>
    %61 = arith.negf %60 : vector<8x256xf32>
    %62 = math.exp %61 : vector<8x256xf32>
    %cst_17 = arith.constant 1.000000e+00 : f32
    %63 = vector.broadcast %cst_17 : f32 to vector<8x256xf32>
    %64 = arith.addf %63, %62 : vector<8x256xf32>
    %65 = arith.divf %63, %64 : vector<8x256xf32>
    %66 = vector.extract_strided_slice %55 {offsets = [0, 256], sizes = [8, 256], strides = [1, 1]} : vector<8x768xf32> to vector<8x256xf32>
    %67 = vector.extract_strided_slice %57 {offsets = [0, 256], sizes = [8, 256], strides = [1, 1]} : vector<8x768xf32> to vector<8x256xf32>
    %68 = arith.addf %66, %67 : vector<8x256xf32>
    %69 = arith.negf %68 : vector<8x256xf32>
    %70 = math.exp %69 : vector<8x256xf32>
    %cst_18 = arith.constant 1.000000e+00 : f32
    %71 = vector.broadcast %cst_18 : f32 to vector<8x256xf32>
    %72 = arith.addf %71, %70 : vector<8x256xf32>
    %73 = arith.divf %71, %72 : vector<8x256xf32>
    %74 = vector.extract_strided_slice %55 {offsets = [0, 512], sizes = [8, 256], strides = [1, 1]} : vector<8x768xf32> to vector<8x256xf32>
    %75 = vector.extract_strided_slice %57 {offsets = [0, 512], sizes = [8, 256], strides = [1, 1]} : vector<8x768xf32> to vector<8x256xf32>
    %76 = arith.addf %75, %20 : vector<8x256xf32>
    %77 = arith.mulf %65, %76 : vector<8x256xf32>
    %78 = arith.addf %74, %77 : vector<8x256xf32>
    %79 = math.tanh %78 : vector<8x256xf32>
    %cst_19 = arith.constant 1.000000e+00 : f32
    %80 = vector.broadcast %cst_19 : f32 to vector<8x256xf32>
    %81 = arith.subf %80, %73 : vector<8x256xf32>
    %82 = arith.mulf %81, %79 : vector<8x256xf32>
    %83 = arith.mulf %73, %54 : vector<8x256xf32>
    %84 = arith.addf %82, %83 : vector<8x256xf32>
    %85 = vector.extract_strided_slice %15 {offsets = [16, 0], sizes = [8, 768], strides = [1, 1]} : vector<64x1152xf32> to vector<8x768xf32>
    %86 = arith.truncf %84 : vector<8x256xf32> to vector<8x256xbf16>
    %cst_20 = arith.constant dense<0.000000e+00> : vector<8x768xf32>
    %87 = tpu.matmul %86, %16, %cst_20 {dimension_numbers = #tpu.dot_dimension_numbers<[1], [0], [0], [1], [0, 0, 1, 1], [], []>} : vector<8x256xbf16>, vector<256x768xbf16>, vector<8x768xf32> -> vector<8x768xf32>
    %88 = vector.extract_strided_slice %85 {offsets = [0, 0], sizes = [8, 256], strides = [1, 1]} : vector<8x768xf32> to vector<8x256xf32>
    %89 = vector.extract_strided_slice %87 {offsets = [0, 0], sizes = [8, 256], strides = [1, 1]} : vector<8x768xf32> to vector<8x256xf32>
    %90 = arith.addf %88, %89 : vector<8x256xf32>
    %91 = arith.negf %90 : vector<8x256xf32>
    %92 = math.exp %91 : vector<8x256xf32>
    %cst_21 = arith.constant 1.000000e+00 : f32
    %93 = vector.broadcast %cst_21 : f32 to vector<8x256xf32>
    %94 = arith.addf %93, %92 : vector<8x256xf32>
    %95 = arith.divf %93, %94 : vector<8x256xf32>
    %96 = vector.extract_strided_slice %85 {offsets = [0, 256], sizes = [8, 256], strides = [1, 1]} : vector<8x768xf32> to vector<8x256xf32>
    %97 = vector.extract_strided_slice %87 {offsets = [0, 256], sizes = [8, 256], strides = [1, 1]} : vector<8x768xf32> to vector<8x256xf32>
    %98 = arith.addf %96, %97 : vector<8x256xf32>
    %99 = arith.negf %98 : vector<8x256xf32>
    %100 = math.exp %99 : vector<8x256xf32>
    %cst_22 = arith.constant 1.000000e+00 : f32
    %101 = vector.broadcast %cst_22 : f32 to vector<8x256xf32>
    %102 = arith.addf %101, %100 : vector<8x256xf32>
    %103 = arith.divf %101, %102 : vector<8x256xf32>
    %104 = vector.extract_strided_slice %85 {offsets = [0, 512], sizes = [8, 256], strides = [1, 1]} : vector<8x768xf32> to vector<8x256xf32>
    %105 = vector.extract_strided_slice %87 {offsets = [0, 512], sizes = [8, 256], strides = [1, 1]} : vector<8x768xf32> to vector<8x256xf32>
    %106 = arith.addf %105, %20 : vector<8x256xf32>
    %107 = arith.mulf %95, %106 : vector<8x256xf32>
    %108 = arith.addf %104, %107 : vector<8x256xf32>
    %109 = math.tanh %108 : vector<8x256xf32>
    %cst_23 = arith.constant 1.000000e+00 : f32
    %110 = vector.broadcast %cst_23 : f32 to vector<8x256xf32>
    %111 = arith.subf %110, %103 : vector<8x256xf32>
    %112 = arith.mulf %111, %109 : vector<8x256xf32>
    %113 = arith.mulf %103, %84 : vector<8x256xf32>
    %114 = arith.addf %112, %113 : vector<8x256xf32>
    %115 = vector.extract_strided_slice %15 {offsets = [24, 0], sizes = [8, 768], strides = [1, 1]} : vector<64x1152xf32> to vector<8x768xf32>
    %116 = arith.truncf %114 : vector<8x256xf32> to vector<8x256xbf16>
    %cst_24 = arith.constant dense<0.000000e+00> : vector<8x768xf32>
    %117 = tpu.matmul %116, %16, %cst_24 {dimension_numbers = #tpu.dot_dimension_numbers<[1], [0], [0], [1], [0, 0, 1, 1], [], []>} : vector<8x256xbf16>, vector<256x768xbf16>, vector<8x768xf32> -> vector<8x768xf32>
    %118 = vector.extract_strided_slice %115 {offsets = [0, 0], sizes = [8, 256], strides = [1, 1]} : vector<8x768xf32> to vector<8x256xf32>
    %119 = vector.extract_strided_slice %117 {offsets = [0, 0], sizes = [8, 256], strides = [1, 1]} : vector<8x768xf32> to vector<8x256xf32>
    %120 = arith.addf %118, %119 : vector<8x256xf32>
    %121 = arith.negf %120 : vector<8x256xf32>
    %122 = math.exp %121 : vector<8x256xf32>
    %cst_25 = arith.constant 1.000000e+00 : f32
    %123 = vector.broadcast %cst_25 : f32 to vector<8x256xf32>
    %124 = arith.addf %123, %122 : vector<8x256xf32>
    %125 = arith.divf %123, %124 : vector<8x256xf32>
    %126 = vector.extract_strided_slice %115 {offsets = [0, 256], sizes = [8, 256], strides = [1, 1]} : vector<8x768xf32> to vector<8x256xf32>
    %127 = vector.extract_strided_slice %117 {offsets = [0, 256], sizes = [8, 256], strides = [1, 1]} : vector<8x768xf32> to vector<8x256xf32>
    %128 = arith.addf %126, %127 : vector<8x256xf32>
    %129 = arith.negf %128 : vector<8x256xf32>
    %130 = math.exp %129 : vector<8x256xf32>
    %cst_26 = arith.constant 1.000000e+00 : f32
    %131 = vector.broadcast %cst_26 : f32 to vector<8x256xf32>
    %132 = arith.addf %131, %130 : vector<8x256xf32>
    %133 = arith.divf %131, %132 : vector<8x256xf32>
    %134 = vector.extract_strided_slice %115 {offsets = [0, 512], sizes = [8, 256], strides = [1, 1]} : vector<8x768xf32> to vector<8x256xf32>
    %135 = vector.extract_strided_slice %117 {offsets = [0, 512], sizes = [8, 256], strides = [1, 1]} : vector<8x768xf32> to vector<8x256xf32>
    %136 = arith.addf %135, %20 : vector<8x256xf32>
    %137 = arith.mulf %125, %136 : vector<8x256xf32>
    %138 = arith.addf %134, %137 : vector<8x256xf32>
    %139 = math.tanh %138 : vector<8x256xf32>
    %cst_27 = arith.constant 1.000000e+00 : f32
    %140 = vector.broadcast %cst_27 : f32 to vector<8x256xf32>
    %141 = arith.subf %140, %133 : vector<8x256xf32>
    %142 = arith.mulf %141, %139 : vector<8x256xf32>
    %143 = arith.mulf %133, %114 : vector<8x256xf32>
    %144 = arith.addf %142, %143 : vector<8x256xf32>
    %145 = vector.extract_strided_slice %15 {offsets = [32, 0], sizes = [8, 768], strides = [1, 1]} : vector<64x1152xf32> to vector<8x768xf32>
    %146 = arith.truncf %144 : vector<8x256xf32> to vector<8x256xbf16>
    %cst_28 = arith.constant dense<0.000000e+00> : vector<8x768xf32>
    %147 = tpu.matmul %146, %16, %cst_28 {dimension_numbers = #tpu.dot_dimension_numbers<[1], [0], [0], [1], [0, 0, 1, 1], [], []>} : vector<8x256xbf16>, vector<256x768xbf16>, vector<8x768xf32> -> vector<8x768xf32>
    %148 = vector.extract_strided_slice %145 {offsets = [0, 0], sizes = [8, 256], strides = [1, 1]} : vector<8x768xf32> to vector<8x256xf32>
    %149 = vector.extract_strided_slice %147 {offsets = [0, 0], sizes = [8, 256], strides = [1, 1]} : vector<8x768xf32> to vector<8x256xf32>
    %150 = arith.addf %148, %149 : vector<8x256xf32>
    %151 = arith.negf %150 : vector<8x256xf32>
    %152 = math.exp %151 : vector<8x256xf32>
    %cst_29 = arith.constant 1.000000e+00 : f32
    %153 = vector.broadcast %cst_29 : f32 to vector<8x256xf32>
    %154 = arith.addf %153, %152 : vector<8x256xf32>
    %155 = arith.divf %153, %154 : vector<8x256xf32>
    %156 = vector.extract_strided_slice %145 {offsets = [0, 256], sizes = [8, 256], strides = [1, 1]} : vector<8x768xf32> to vector<8x256xf32>
    %157 = vector.extract_strided_slice %147 {offsets = [0, 256], sizes = [8, 256], strides = [1, 1]} : vector<8x768xf32> to vector<8x256xf32>
    %158 = arith.addf %156, %157 : vector<8x256xf32>
    %159 = arith.negf %158 : vector<8x256xf32>
    %160 = math.exp %159 : vector<8x256xf32>
    %cst_30 = arith.constant 1.000000e+00 : f32
    %161 = vector.broadcast %cst_30 : f32 to vector<8x256xf32>
    %162 = arith.addf %161, %160 : vector<8x256xf32>
    %163 = arith.divf %161, %162 : vector<8x256xf32>
    %164 = vector.extract_strided_slice %145 {offsets = [0, 512], sizes = [8, 256], strides = [1, 1]} : vector<8x768xf32> to vector<8x256xf32>
    %165 = vector.extract_strided_slice %147 {offsets = [0, 512], sizes = [8, 256], strides = [1, 1]} : vector<8x768xf32> to vector<8x256xf32>
    %166 = arith.addf %165, %20 : vector<8x256xf32>
    %167 = arith.mulf %155, %166 : vector<8x256xf32>
    %168 = arith.addf %164, %167 : vector<8x256xf32>
    %169 = math.tanh %168 : vector<8x256xf32>
    %cst_31 = arith.constant 1.000000e+00 : f32
    %170 = vector.broadcast %cst_31 : f32 to vector<8x256xf32>
    %171 = arith.subf %170, %163 : vector<8x256xf32>
    %172 = arith.mulf %171, %169 : vector<8x256xf32>
    %173 = arith.mulf %163, %144 : vector<8x256xf32>
    %174 = arith.addf %172, %173 : vector<8x256xf32>
    %175 = vector.extract_strided_slice %15 {offsets = [40, 0], sizes = [8, 768], strides = [1, 1]} : vector<64x1152xf32> to vector<8x768xf32>
    %176 = arith.truncf %174 : vector<8x256xf32> to vector<8x256xbf16>
    %cst_32 = arith.constant dense<0.000000e+00> : vector<8x768xf32>
    %177 = tpu.matmul %176, %16, %cst_32 {dimension_numbers = #tpu.dot_dimension_numbers<[1], [0], [0], [1], [0, 0, 1, 1], [], []>} : vector<8x256xbf16>, vector<256x768xbf16>, vector<8x768xf32> -> vector<8x768xf32>
    %178 = vector.extract_strided_slice %175 {offsets = [0, 0], sizes = [8, 256], strides = [1, 1]} : vector<8x768xf32> to vector<8x256xf32>
    %179 = vector.extract_strided_slice %177 {offsets = [0, 0], sizes = [8, 256], strides = [1, 1]} : vector<8x768xf32> to vector<8x256xf32>
    %180 = arith.addf %178, %179 : vector<8x256xf32>
    %181 = arith.negf %180 : vector<8x256xf32>
    %182 = math.exp %181 : vector<8x256xf32>
    %cst_33 = arith.constant 1.000000e+00 : f32
    %183 = vector.broadcast %cst_33 : f32 to vector<8x256xf32>
    %184 = arith.addf %183, %182 : vector<8x256xf32>
    %185 = arith.divf %183, %184 : vector<8x256xf32>
    %186 = vector.extract_strided_slice %175 {offsets = [0, 256], sizes = [8, 256], strides = [1, 1]} : vector<8x768xf32> to vector<8x256xf32>
    %187 = vector.extract_strided_slice %177 {offsets = [0, 256], sizes = [8, 256], strides = [1, 1]} : vector<8x768xf32> to vector<8x256xf32>
    %188 = arith.addf %186, %187 : vector<8x256xf32>
    %189 = arith.negf %188 : vector<8x256xf32>
    %190 = math.exp %189 : vector<8x256xf32>
    %cst_34 = arith.constant 1.000000e+00 : f32
    %191 = vector.broadcast %cst_34 : f32 to vector<8x256xf32>
    %192 = arith.addf %191, %190 : vector<8x256xf32>
    %193 = arith.divf %191, %192 : vector<8x256xf32>
    %194 = vector.extract_strided_slice %175 {offsets = [0, 512], sizes = [8, 256], strides = [1, 1]} : vector<8x768xf32> to vector<8x256xf32>
    %195 = vector.extract_strided_slice %177 {offsets = [0, 512], sizes = [8, 256], strides = [1, 1]} : vector<8x768xf32> to vector<8x256xf32>
    %196 = arith.addf %195, %20 : vector<8x256xf32>
    %197 = arith.mulf %185, %196 : vector<8x256xf32>
    %198 = arith.addf %194, %197 : vector<8x256xf32>
    %199 = math.tanh %198 : vector<8x256xf32>
    %cst_35 = arith.constant 1.000000e+00 : f32
    %200 = vector.broadcast %cst_35 : f32 to vector<8x256xf32>
    %201 = arith.subf %200, %193 : vector<8x256xf32>
    %202 = arith.mulf %201, %199 : vector<8x256xf32>
    %203 = arith.mulf %193, %174 : vector<8x256xf32>
    %204 = arith.addf %202, %203 : vector<8x256xf32>
    %205 = vector.extract_strided_slice %15 {offsets = [48, 0], sizes = [8, 768], strides = [1, 1]} : vector<64x1152xf32> to vector<8x768xf32>
    %206 = arith.truncf %204 : vector<8x256xf32> to vector<8x256xbf16>
    %cst_36 = arith.constant dense<0.000000e+00> : vector<8x768xf32>
    %207 = tpu.matmul %206, %16, %cst_36 {dimension_numbers = #tpu.dot_dimension_numbers<[1], [0], [0], [1], [0, 0, 1, 1], [], []>} : vector<8x256xbf16>, vector<256x768xbf16>, vector<8x768xf32> -> vector<8x768xf32>
    %208 = vector.extract_strided_slice %205 {offsets = [0, 0], sizes = [8, 256], strides = [1, 1]} : vector<8x768xf32> to vector<8x256xf32>
    %209 = vector.extract_strided_slice %207 {offsets = [0, 0], sizes = [8, 256], strides = [1, 1]} : vector<8x768xf32> to vector<8x256xf32>
    %210 = arith.addf %208, %209 : vector<8x256xf32>
    %211 = arith.negf %210 : vector<8x256xf32>
    %212 = math.exp %211 : vector<8x256xf32>
    %cst_37 = arith.constant 1.000000e+00 : f32
    %213 = vector.broadcast %cst_37 : f32 to vector<8x256xf32>
    %214 = arith.addf %213, %212 : vector<8x256xf32>
    %215 = arith.divf %213, %214 : vector<8x256xf32>
    %216 = vector.extract_strided_slice %205 {offsets = [0, 256], sizes = [8, 256], strides = [1, 1]} : vector<8x768xf32> to vector<8x256xf32>
    %217 = vector.extract_strided_slice %207 {offsets = [0, 256], sizes = [8, 256], strides = [1, 1]} : vector<8x768xf32> to vector<8x256xf32>
    %218 = arith.addf %216, %217 : vector<8x256xf32>
    %219 = arith.negf %218 : vector<8x256xf32>
    %220 = math.exp %219 : vector<8x256xf32>
    %cst_38 = arith.constant 1.000000e+00 : f32
    %221 = vector.broadcast %cst_38 : f32 to vector<8x256xf32>
    %222 = arith.addf %221, %220 : vector<8x256xf32>
    %223 = arith.divf %221, %222 : vector<8x256xf32>
    %224 = vector.extract_strided_slice %205 {offsets = [0, 512], sizes = [8, 256], strides = [1, 1]} : vector<8x768xf32> to vector<8x256xf32>
    %225 = vector.extract_strided_slice %207 {offsets = [0, 512], sizes = [8, 256], strides = [1, 1]} : vector<8x768xf32> to vector<8x256xf32>
    %226 = arith.addf %225, %20 : vector<8x256xf32>
    %227 = arith.mulf %215, %226 : vector<8x256xf32>
    %228 = arith.addf %224, %227 : vector<8x256xf32>
    %229 = math.tanh %228 : vector<8x256xf32>
    %cst_39 = arith.constant 1.000000e+00 : f32
    %230 = vector.broadcast %cst_39 : f32 to vector<8x256xf32>
    %231 = arith.subf %230, %223 : vector<8x256xf32>
    %232 = arith.mulf %231, %229 : vector<8x256xf32>
    %233 = arith.mulf %223, %204 : vector<8x256xf32>
    %234 = arith.addf %232, %233 : vector<8x256xf32>
    %235 = vector.extract_strided_slice %15 {offsets = [56, 0], sizes = [8, 768], strides = [1, 1]} : vector<64x1152xf32> to vector<8x768xf32>
    %236 = arith.truncf %234 : vector<8x256xf32> to vector<8x256xbf16>
    %cst_40 = arith.constant dense<0.000000e+00> : vector<8x768xf32>
    %237 = tpu.matmul %236, %16, %cst_40 {dimension_numbers = #tpu.dot_dimension_numbers<[1], [0], [0], [1], [0, 0, 1, 1], [], []>} : vector<8x256xbf16>, vector<256x768xbf16>, vector<8x768xf32> -> vector<8x768xf32>
    %238 = vector.extract_strided_slice %235 {offsets = [0, 0], sizes = [8, 256], strides = [1, 1]} : vector<8x768xf32> to vector<8x256xf32>
    %239 = vector.extract_strided_slice %237 {offsets = [0, 0], sizes = [8, 256], strides = [1, 1]} : vector<8x768xf32> to vector<8x256xf32>
    %240 = arith.addf %238, %239 : vector<8x256xf32>
    %241 = arith.negf %240 : vector<8x256xf32>
    %242 = math.exp %241 : vector<8x256xf32>
    %cst_41 = arith.constant 1.000000e+00 : f32
    %243 = vector.broadcast %cst_41 : f32 to vector<8x256xf32>
    %244 = arith.addf %243, %242 : vector<8x256xf32>
    %245 = arith.divf %243, %244 : vector<8x256xf32>
    %246 = vector.extract_strided_slice %235 {offsets = [0, 256], sizes = [8, 256], strides = [1, 1]} : vector<8x768xf32> to vector<8x256xf32>
    %247 = vector.extract_strided_slice %237 {offsets = [0, 256], sizes = [8, 256], strides = [1, 1]} : vector<8x768xf32> to vector<8x256xf32>
    %248 = arith.addf %246, %247 : vector<8x256xf32>
    %249 = arith.negf %248 : vector<8x256xf32>
    %250 = math.exp %249 : vector<8x256xf32>
    %cst_42 = arith.constant 1.000000e+00 : f32
    %251 = vector.broadcast %cst_42 : f32 to vector<8x256xf32>
    %252 = arith.addf %251, %250 : vector<8x256xf32>
    %253 = arith.divf %251, %252 : vector<8x256xf32>
    %254 = vector.extract_strided_slice %235 {offsets = [0, 512], sizes = [8, 256], strides = [1, 1]} : vector<8x768xf32> to vector<8x256xf32>
    %255 = vector.extract_strided_slice %237 {offsets = [0, 512], sizes = [8, 256], strides = [1, 1]} : vector<8x768xf32> to vector<8x256xf32>
    %256 = arith.addf %255, %20 : vector<8x256xf32>
    %257 = arith.mulf %245, %256 : vector<8x256xf32>
    %258 = arith.addf %254, %257 : vector<8x256xf32>
    %259 = math.tanh %258 : vector<8x256xf32>
    %cst_43 = arith.constant 1.000000e+00 : f32
    %260 = vector.broadcast %cst_43 : f32 to vector<8x256xf32>
    %261 = arith.subf %260, %253 : vector<8x256xf32>
    %262 = arith.mulf %261, %259 : vector<8x256xf32>
    %263 = arith.mulf %253, %234 : vector<8x256xf32>
    %264 = arith.addf %262, %263 : vector<8x256xf32>
    %265 = vector.extract_strided_slice %264 {offsets = [0, 0], sizes = [8, 128], strides = [1, 1]} : vector<8x256xf32> to vector<8x128xf32>
    %266 = arith.truncf %265 : vector<8x128xf32> to vector<8x128xbf16>
    %c0_44 = arith.constant 0 : index
    %c0_45 = arith.constant 0 : index
    %c0_46 = arith.constant 0 : index
    %267 = vector.load %arg5[%c0_44, %c0_45, %c0_46] : memref<5x128x128xbf16, #tpu.memory_space<vmem>>, vector<1x128x128xbf16>
    %268 = vector.shape_cast %267 : vector<1x128x128xbf16> to vector<128x128xbf16>
    %cst_47 = arith.constant dense<0.000000e+00> : vector<8x128xf32>
    %269 = tpu.matmul %266, %268, %cst_47 {dimension_numbers = #tpu.dot_dimension_numbers<[1], [0], [0], [1], [0, 0, 1, 1], [], []>} : vector<8x128xbf16>, vector<128x128xbf16>, vector<8x128xf32> -> vector<8x128xf32>
    %c0_48 = arith.constant 0 : index
    %c0_49 = arith.constant 0 : index
    %c0_50 = arith.constant 0 : index
    %270 = vector.load %arg6[%c0_48, %c0_49, %c0_50] : memref<5x1x128xf32, #tpu.memory_space<vmem>>, vector<1x1x128xf32>
    %271 = vector.shape_cast %270 : vector<1x1x128xf32> to vector<1x128xf32>
    %272 = vector.broadcast %271 : vector<1x128xf32> to vector<8x128xf32>
    %273 = arith.addf %269, %272 : vector<8x128xf32>
    %274 = math.tanh %273 : vector<8x128xf32>
    %275 = vector.extract_strided_slice %264 {offsets = [0, 128], sizes = [8, 128], strides = [1, 1]} : vector<8x256xf32> to vector<8x128xf32>
    %276 = arith.truncf %275 : vector<8x128xf32> to vector<8x128xbf16>
    %c1_51 = arith.constant 1 : index
    %c0_52 = arith.constant 0 : index
    %c0_53 = arith.constant 0 : index
    %277 = vector.load %arg5[%c1_51, %c0_52, %c0_53] : memref<5x128x128xbf16, #tpu.memory_space<vmem>>, vector<1x128x128xbf16>
    %278 = vector.shape_cast %277 : vector<1x128x128xbf16> to vector<128x128xbf16>
    %cst_54 = arith.constant dense<0.000000e+00> : vector<8x128xf32>
    %279 = tpu.matmul %276, %278, %cst_54 {dimension_numbers = #tpu.dot_dimension_numbers<[1], [0], [0], [1], [0, 0, 1, 1], [], []>} : vector<8x128xbf16>, vector<128x128xbf16>, vector<8x128xf32> -> vector<8x128xf32>
    %c1_55 = arith.constant 1 : index
    %c0_56 = arith.constant 0 : index
    %c0_57 = arith.constant 0 : index
    %280 = vector.load %arg6[%c1_55, %c0_56, %c0_57] : memref<5x1x128xf32, #tpu.memory_space<vmem>>, vector<1x1x128xf32>
    %281 = vector.shape_cast %280 : vector<1x1x128xf32> to vector<1x128xf32>
    %282 = vector.broadcast %281 : vector<1x128xf32> to vector<8x128xf32>
    %283 = arith.addf %279, %282 : vector<8x128xf32>
    %284 = math.tanh %283 : vector<8x128xf32>
    %285 = arith.truncf %284 : vector<8x128xf32> to vector<8x128xbf16>
    %c2 = arith.constant 2 : index
    %c0_58 = arith.constant 0 : index
    %c0_59 = arith.constant 0 : index
    %286 = vector.load %arg5[%c2, %c0_58, %c0_59] : memref<5x128x128xbf16, #tpu.memory_space<vmem>>, vector<1x128x128xbf16>
    %287 = vector.shape_cast %286 : vector<1x128x128xbf16> to vector<128x128xbf16>
    %cst_60 = arith.constant dense<0.000000e+00> : vector<8x128xf32>
    %288 = tpu.matmul %285, %287, %cst_60 {dimension_numbers = #tpu.dot_dimension_numbers<[1], [0], [0], [1], [0, 0, 1, 1], [], []>} : vector<8x128xbf16>, vector<128x128xbf16>, vector<8x128xf32> -> vector<8x128xf32>
    %c2_61 = arith.constant 2 : index
    %c0_62 = arith.constant 0 : index
    %c0_63 = arith.constant 0 : index
    %289 = vector.load %arg6[%c2_61, %c0_62, %c0_63] : memref<5x1x128xf32, #tpu.memory_space<vmem>>, vector<1x1x128xf32>
    %290 = vector.shape_cast %289 : vector<1x1x128xf32> to vector<1x128xf32>
    %291 = vector.broadcast %290 : vector<1x128xf32> to vector<8x128xf32>
    %292 = arith.addf %288, %291 : vector<8x128xf32>
    %cst_64 = arith.constant 0.000000e+00 : f32
    %293 = vector.broadcast %cst_64 : f32 to vector<8x128xf32>
    %294 = arith.maximumf %292, %293 : vector<8x128xf32>
    %295 = arith.truncf %294 : vector<8x128xf32> to vector<8x128xbf16>
    %c3 = arith.constant 3 : index
    %c0_65 = arith.constant 0 : index
    %c0_66 = arith.constant 0 : index
    %296 = vector.load %arg5[%c3, %c0_65, %c0_66] : memref<5x128x128xbf16, #tpu.memory_space<vmem>>, vector<1x128x128xbf16>
    %297 = vector.shape_cast %296 : vector<1x128x128xbf16> to vector<128x128xbf16>
    %cst_67 = arith.constant dense<0.000000e+00> : vector<8x128xf32>
    %298 = tpu.matmul %295, %297, %cst_67 {dimension_numbers = #tpu.dot_dimension_numbers<[1], [0], [0], [1], [0, 0, 1, 1], [], []>} : vector<8x128xbf16>, vector<128x128xbf16>, vector<8x128xf32> -> vector<8x128xf32>
    %c3_68 = arith.constant 3 : index
    %c0_69 = arith.constant 0 : index
    %c0_70 = arith.constant 0 : index
    %299 = vector.load %arg6[%c3_68, %c0_69, %c0_70] : memref<5x1x128xf32, #tpu.memory_space<vmem>>, vector<1x1x128xf32>
    %300 = vector.shape_cast %299 : vector<1x1x128xf32> to vector<1x128xf32>
    %301 = vector.broadcast %300 : vector<1x128xf32> to vector<8x128xf32>
    %302 = arith.addf %298, %301 : vector<8x128xf32>
    %c0_71 = arith.constant 0 : index
    %c0_72 = arith.constant 0 : index
    %303 = vector.load %arg7[%c0_71, %c0_72] : memref<64x128xf32, #tpu.memory_space<vmem>>, vector<8x128xf32>
    tpu.vector_store %arg7[%c0_71, %c0_72], %302 {strides = array<i32>} : memref<64x128xf32, #tpu.memory_space<vmem>>, vector<8x128xf32>,
    %304 = vector.extract_strided_slice %15 {offsets = [0, 768], sizes = [8, 384], strides = [1, 1]} : vector<64x1152xf32> to vector<8x384xf32>
    %305 = arith.truncf %274 : vector<8x128xf32> to vector<8x128xbf16>
    %cst_73 = arith.constant dense<0.000000e+00> : vector<8x384xf32>
    %306 = tpu.matmul %305, %17, %cst_73 {dimension_numbers = #tpu.dot_dimension_numbers<[1], [0], [0], [1], [0, 0, 1, 1], [], []>} : vector<8x128xbf16>, vector<128x384xbf16>, vector<8x384xf32> -> vector<8x384xf32>
    %307 = vector.extract_strided_slice %304 {offsets = [0, 0], sizes = [8, 128], strides = [1, 1]} : vector<8x384xf32> to vector<8x128xf32>
    %308 = vector.extract_strided_slice %306 {offsets = [0, 0], sizes = [8, 128], strides = [1, 1]} : vector<8x384xf32> to vector<8x128xf32>
    %309 = arith.addf %307, %308 : vector<8x128xf32>
    %310 = arith.negf %309 : vector<8x128xf32>
    %311 = math.exp %310 : vector<8x128xf32>
    %cst_74 = arith.constant 1.000000e+00 : f32
    %312 = vector.broadcast %cst_74 : f32 to vector<8x128xf32>
    %313 = arith.addf %312, %311 : vector<8x128xf32>
    %314 = arith.divf %312, %313 : vector<8x128xf32>
    %315 = vector.extract_strided_slice %304 {offsets = [0, 128], sizes = [8, 128], strides = [1, 1]} : vector<8x384xf32> to vector<8x128xf32>
    %316 = vector.extract_strided_slice %306 {offsets = [0, 128], sizes = [8, 128], strides = [1, 1]} : vector<8x384xf32> to vector<8x128xf32>
    %317 = arith.addf %315, %316 : vector<8x128xf32>
    %318 = arith.negf %317 : vector<8x128xf32>
    %319 = math.exp %318 : vector<8x128xf32>
    %cst_75 = arith.constant 1.000000e+00 : f32
    %320 = vector.broadcast %cst_75 : f32 to vector<8x128xf32>
    %321 = arith.addf %320, %319 : vector<8x128xf32>
    %322 = arith.divf %320, %321 : vector<8x128xf32>
    %323 = vector.extract_strided_slice %304 {offsets = [0, 256], sizes = [8, 128], strides = [1, 1]} : vector<8x384xf32> to vector<8x128xf32>
    %324 = vector.extract_strided_slice %306 {offsets = [0, 256], sizes = [8, 128], strides = [1, 1]} : vector<8x384xf32> to vector<8x128xf32>
    %325 = arith.addf %324, %23 : vector<8x128xf32>
    %326 = arith.mulf %314, %325 : vector<8x128xf32>
    %327 = arith.addf %323, %326 : vector<8x128xf32>
    %328 = math.tanh %327 : vector<8x128xf32>
    %cst_76 = arith.constant 1.000000e+00 : f32
    %329 = vector.broadcast %cst_76 : f32 to vector<8x128xf32>
    %330 = arith.subf %329, %322 : vector<8x128xf32>
    %331 = arith.mulf %330, %328 : vector<8x128xf32>
    %332 = arith.mulf %322, %274 : vector<8x128xf32>
    %333 = arith.addf %331, %332 : vector<8x128xf32>
    %334 = vector.extract_strided_slice %15 {offsets = [8, 768], sizes = [8, 384], strides = [1, 1]} : vector<64x1152xf32> to vector<8x384xf32>
    %335 = arith.truncf %333 : vector<8x128xf32> to vector<8x128xbf16>
    %cst_77 = arith.constant dense<0.000000e+00> : vector<8x384xf32>
    %336 = tpu.matmul %335, %17, %cst_77 {dimension_numbers = #tpu.dot_dimension_numbers<[1], [0], [0], [1], [0, 0, 1, 1], [], []>} : vector<8x128xbf16>, vector<128x384xbf16>, vector<8x384xf32> -> vector<8x384xf32>
    %337 = vector.extract_strided_slice %334 {offsets = [0, 0], sizes = [8, 128], strides = [1, 1]} : vector<8x384xf32> to vector<8x128xf32>
    %338 = vector.extract_strided_slice %336 {offsets = [0, 0], sizes = [8, 128], strides = [1, 1]} : vector<8x384xf32> to vector<8x128xf32>
    %339 = arith.addf %337, %338 : vector<8x128xf32>
    %340 = arith.negf %339 : vector<8x128xf32>
    %341 = math.exp %340 : vector<8x128xf32>
    %cst_78 = arith.constant 1.000000e+00 : f32
    %342 = vector.broadcast %cst_78 : f32 to vector<8x128xf32>
    %343 = arith.addf %342, %341 : vector<8x128xf32>
    %344 = arith.divf %342, %343 : vector<8x128xf32>
    %345 = vector.extract_strided_slice %334 {offsets = [0, 128], sizes = [8, 128], strides = [1, 1]} : vector<8x384xf32> to vector<8x128xf32>
    %346 = vector.extract_strided_slice %336 {offsets = [0, 128], sizes = [8, 128], strides = [1, 1]} : vector<8x384xf32> to vector<8x128xf32>
    %347 = arith.addf %345, %346 : vector<8x128xf32>
    %348 = arith.negf %347 : vector<8x128xf32>
    %349 = math.exp %348 : vector<8x128xf32>
    %cst_79 = arith.constant 1.000000e+00 : f32
    %350 = vector.broadcast %cst_79 : f32 to vector<8x128xf32>
    %351 = arith.addf %350, %349 : vector<8x128xf32>
    %352 = arith.divf %350, %351 : vector<8x128xf32>
    %353 = vector.extract_strided_slice %334 {offsets = [0, 256], sizes = [8, 128], strides = [1, 1]} : vector<8x384xf32> to vector<8x128xf32>
    %354 = vector.extract_strided_slice %336 {offsets = [0, 256], sizes = [8, 128], strides = [1, 1]} : vector<8x384xf32> to vector<8x128xf32>
    %355 = arith.addf %354, %23 : vector<8x128xf32>
    %356 = arith.mulf %344, %355 : vector<8x128xf32>
    %357 = arith.addf %353, %356 : vector<8x128xf32>
    %358 = math.tanh %357 : vector<8x128xf32>
    %cst_80 = arith.constant 1.000000e+00 : f32
    %359 = vector.broadcast %cst_80 : f32 to vector<8x128xf32>
    %360 = arith.subf %359, %352 : vector<8x128xf32>
    %361 = arith.mulf %360, %358 : vector<8x128xf32>
    %362 = arith.mulf %352, %333 : vector<8x128xf32>
    %363 = arith.addf %361, %362 : vector<8x128xf32>
    %364 = vector.extract_strided_slice %15 {offsets = [16, 768], sizes = [8, 384], strides = [1, 1]} : vector<64x1152xf32> to vector<8x384xf32>
    %365 = arith.truncf %363 : vector<8x128xf32> to vector<8x128xbf16>
    %cst_81 = arith.constant dense<0.000000e+00> : vector<8x384xf32>
    %366 = tpu.matmul %365, %17, %cst_81 {dimension_numbers = #tpu.dot_dimension_numbers<[1], [0], [0], [1], [0, 0, 1, 1], [], []>} : vector<8x128xbf16>, vector<128x384xbf16>, vector<8x384xf32> -> vector<8x384xf32>
    %367 = vector.extract_strided_slice %364 {offsets = [0, 0], sizes = [8, 128], strides = [1, 1]} : vector<8x384xf32> to vector<8x128xf32>
    %368 = vector.extract_strided_slice %366 {offsets = [0, 0], sizes = [8, 128], strides = [1, 1]} : vector<8x384xf32> to vector<8x128xf32>
    %369 = arith.addf %367, %368 : vector<8x128xf32>
    %370 = arith.negf %369 : vector<8x128xf32>
    %371 = math.exp %370 : vector<8x128xf32>
    %cst_82 = arith.constant 1.000000e+00 : f32
    %372 = vector.broadcast %cst_82 : f32 to vector<8x128xf32>
    %373 = arith.addf %372, %371 : vector<8x128xf32>
    %374 = arith.divf %372, %373 : vector<8x128xf32>
    %375 = vector.extract_strided_slice %364 {offsets = [0, 128], sizes = [8, 128], strides = [1, 1]} : vector<8x384xf32> to vector<8x128xf32>
    %376 = vector.extract_strided_slice %366 {offsets = [0, 128], sizes = [8, 128], strides = [1, 1]} : vector<8x384xf32> to vector<8x128xf32>
    %377 = arith.addf %375, %376 : vector<8x128xf32>
    %378 = arith.negf %377 : vector<8x128xf32>
    %379 = math.exp %378 : vector<8x128xf32>
    %cst_83 = arith.constant 1.000000e+00 : f32
    %380 = vector.broadcast %cst_83 : f32 to vector<8x128xf32>
    %381 = arith.addf %380, %379 : vector<8x128xf32>
    %382 = arith.divf %380, %381 : vector<8x128xf32>
    %383 = vector.extract_strided_slice %364 {offsets = [0, 256], sizes = [8, 128], strides = [1, 1]} : vector<8x384xf32> to vector<8x128xf32>
    %384 = vector.extract_strided_slice %366 {offsets = [0, 256], sizes = [8, 128], strides = [1, 1]} : vector<8x384xf32> to vector<8x128xf32>
    %385 = arith.addf %384, %23 : vector<8x128xf32>
    %386 = arith.mulf %374, %385 : vector<8x128xf32>
    %387 = arith.addf %383, %386 : vector<8x128xf32>
    %388 = math.tanh %387 : vector<8x128xf32>
    %cst_84 = arith.constant 1.000000e+00 : f32
    %389 = vector.broadcast %cst_84 : f32 to vector<8x128xf32>
    %390 = arith.subf %389, %382 : vector<8x128xf32>
    %391 = arith.mulf %390, %388 : vector<8x128xf32>
    %392 = arith.mulf %382, %363 : vector<8x128xf32>
    %393 = arith.addf %391, %392 : vector<8x128xf32>
    %394 = vector.extract_strided_slice %15 {offsets = [24, 768], sizes = [8, 384], strides = [1, 1]} : vector<64x1152xf32> to vector<8x384xf32>
    %395 = arith.truncf %393 : vector<8x128xf32> to vector<8x128xbf16>
    %cst_85 = arith.constant dense<0.000000e+00> : vector<8x384xf32>
    %396 = tpu.matmul %395, %17, %cst_85 {dimension_numbers = #tpu.dot_dimension_numbers<[1], [0], [0], [1], [0, 0, 1, 1], [], []>} : vector<8x128xbf16>, vector<128x384xbf16>, vector<8x384xf32> -> vector<8x384xf32>
    %397 = vector.extract_strided_slice %394 {offsets = [0, 0], sizes = [8, 128], strides = [1, 1]} : vector<8x384xf32> to vector<8x128xf32>
    %398 = vector.extract_strided_slice %396 {offsets = [0, 0], sizes = [8, 128], strides = [1, 1]} : vector<8x384xf32> to vector<8x128xf32>
    %399 = arith.addf %397, %398 : vector<8x128xf32>
    %400 = arith.negf %399 : vector<8x128xf32>
    %401 = math.exp %400 : vector<8x128xf32>
    %cst_86 = arith.constant 1.000000e+00 : f32
    %402 = vector.broadcast %cst_86 : f32 to vector<8x128xf32>
    %403 = arith.addf %402, %401 : vector<8x128xf32>
    %404 = arith.divf %402, %403 : vector<8x128xf32>
    %405 = vector.extract_strided_slice %394 {offsets = [0, 128], sizes = [8, 128], strides = [1, 1]} : vector<8x384xf32> to vector<8x128xf32>
    %406 = vector.extract_strided_slice %396 {offsets = [0, 128], sizes = [8, 128], strides = [1, 1]} : vector<8x384xf32> to vector<8x128xf32>
    %407 = arith.addf %405, %406 : vector<8x128xf32>
    %408 = arith.negf %407 : vector<8x128xf32>
    %409 = math.exp %408 : vector<8x128xf32>
    %cst_87 = arith.constant 1.000000e+00 : f32
    %410 = vector.broadcast %cst_87 : f32 to vector<8x128xf32>
    %411 = arith.addf %410, %409 : vector<8x128xf32>
    %412 = arith.divf %410, %411 : vector<8x128xf32>
    %413 = vector.extract_strided_slice %394 {offsets = [0, 256], sizes = [8, 128], strides = [1, 1]} : vector<8x384xf32> to vector<8x128xf32>
    %414 = vector.extract_strided_slice %396 {offsets = [0, 256], sizes = [8, 128], strides = [1, 1]} : vector<8x384xf32> to vector<8x128xf32>
    %415 = arith.addf %414, %23 : vector<8x128xf32>
    %416 = arith.mulf %404, %415 : vector<8x128xf32>
    %417 = arith.addf %413, %416 : vector<8x128xf32>
    %418 = math.tanh %417 : vector<8x128xf32>
    %cst_88 = arith.constant 1.000000e+00 : f32
    %419 = vector.broadcast %cst_88 : f32 to vector<8x128xf32>
    %420 = arith.subf %419, %412 : vector<8x128xf32>
    %421 = arith.mulf %420, %418 : vector<8x128xf32>
    %422 = arith.mulf %412, %393 : vector<8x128xf32>
    %423 = arith.addf %421, %422 : vector<8x128xf32>
    %424 = vector.extract_strided_slice %15 {offsets = [32, 768], sizes = [8, 384], strides = [1, 1]} : vector<64x1152xf32> to vector<8x384xf32>
    %425 = arith.truncf %423 : vector<8x128xf32> to vector<8x128xbf16>
    %cst_89 = arith.constant dense<0.000000e+00> : vector<8x384xf32>
    %426 = tpu.matmul %425, %17, %cst_89 {dimension_numbers = #tpu.dot_dimension_numbers<[1], [0], [0], [1], [0, 0, 1, 1], [], []>} : vector<8x128xbf16>, vector<128x384xbf16>, vector<8x384xf32> -> vector<8x384xf32>
    %427 = vector.extract_strided_slice %424 {offsets = [0, 0], sizes = [8, 128], strides = [1, 1]} : vector<8x384xf32> to vector<8x128xf32>
    %428 = vector.extract_strided_slice %426 {offsets = [0, 0], sizes = [8, 128], strides = [1, 1]} : vector<8x384xf32> to vector<8x128xf32>
    %429 = arith.addf %427, %428 : vector<8x128xf32>
    %430 = arith.negf %429 : vector<8x128xf32>
    %431 = math.exp %430 : vector<8x128xf32>
    %cst_90 = arith.constant 1.000000e+00 : f32
    %432 = vector.broadcast %cst_90 : f32 to vector<8x128xf32>
    %433 = arith.addf %432, %431 : vector<8x128xf32>
    %434 = arith.divf %432, %433 : vector<8x128xf32>
    %435 = vector.extract_strided_slice %424 {offsets = [0, 128], sizes = [8, 128], strides = [1, 1]} : vector<8x384xf32> to vector<8x128xf32>
    %436 = vector.extract_strided_slice %426 {offsets = [0, 128], sizes = [8, 128], strides = [1, 1]} : vector<8x384xf32> to vector<8x128xf32>
    %437 = arith.addf %435, %436 : vector<8x128xf32>
    %438 = arith.negf %437 : vector<8x128xf32>
    %439 = math.exp %438 : vector<8x128xf32>
    %cst_91 = arith.constant 1.000000e+00 : f32
    %440 = vector.broadcast %cst_91 : f32 to vector<8x128xf32>
    %441 = arith.addf %440, %439 : vector<8x128xf32>
    %442 = arith.divf %440, %441 : vector<8x128xf32>
    %443 = vector.extract_strided_slice %424 {offsets = [0, 256], sizes = [8, 128], strides = [1, 1]} : vector<8x384xf32> to vector<8x128xf32>
    %444 = vector.extract_strided_slice %426 {offsets = [0, 256], sizes = [8, 128], strides = [1, 1]} : vector<8x384xf32> to vector<8x128xf32>
    %445 = arith.addf %444, %23 : vector<8x128xf32>
    %446 = arith.mulf %434, %445 : vector<8x128xf32>
    %447 = arith.addf %443, %446 : vector<8x128xf32>
    %448 = math.tanh %447 : vector<8x128xf32>
    %cst_92 = arith.constant 1.000000e+00 : f32
    %449 = vector.broadcast %cst_92 : f32 to vector<8x128xf32>
    %450 = arith.subf %449, %442 : vector<8x128xf32>
    %451 = arith.mulf %450, %448 : vector<8x128xf32>
    %452 = arith.mulf %442, %423 : vector<8x128xf32>
    %453 = arith.addf %451, %452 : vector<8x128xf32>
    %454 = vector.extract_strided_slice %15 {offsets = [40, 768], sizes = [8, 384], strides = [1, 1]} : vector<64x1152xf32> to vector<8x384xf32>
    %455 = arith.truncf %453 : vector<8x128xf32> to vector<8x128xbf16>
    %cst_93 = arith.constant dense<0.000000e+00> : vector<8x384xf32>
    %456 = tpu.matmul %455, %17, %cst_93 {dimension_numbers = #tpu.dot_dimension_numbers<[1], [0], [0], [1], [0, 0, 1, 1], [], []>} : vector<8x128xbf16>, vector<128x384xbf16>, vector<8x384xf32> -> vector<8x384xf32>
    %457 = vector.extract_strided_slice %454 {offsets = [0, 0], sizes = [8, 128], strides = [1, 1]} : vector<8x384xf32> to vector<8x128xf32>
    %458 = vector.extract_strided_slice %456 {offsets = [0, 0], sizes = [8, 128], strides = [1, 1]} : vector<8x384xf32> to vector<8x128xf32>
    %459 = arith.addf %457, %458 : vector<8x128xf32>
    %460 = arith.negf %459 : vector<8x128xf32>
    %461 = math.exp %460 : vector<8x128xf32>
    %cst_94 = arith.constant 1.000000e+00 : f32
    %462 = vector.broadcast %cst_94 : f32 to vector<8x128xf32>
    %463 = arith.addf %462, %461 : vector<8x128xf32>
    %464 = arith.divf %462, %463 : vector<8x128xf32>
    %465 = vector.extract_strided_slice %454 {offsets = [0, 128], sizes = [8, 128], strides = [1, 1]} : vector<8x384xf32> to vector<8x128xf32>
    %466 = vector.extract_strided_slice %456 {offsets = [0, 128], sizes = [8, 128], strides = [1, 1]} : vector<8x384xf32> to vector<8x128xf32>
    %467 = arith.addf %465, %466 : vector<8x128xf32>
    %468 = arith.negf %467 : vector<8x128xf32>
    %469 = math.exp %468 : vector<8x128xf32>
    %cst_95 = arith.constant 1.000000e+00 : f32
    %470 = vector.broadcast %cst_95 : f32 to vector<8x128xf32>
    %471 = arith.addf %470, %469 : vector<8x128xf32>
    %472 = arith.divf %470, %471 : vector<8x128xf32>
    %473 = vector.extract_strided_slice %454 {offsets = [0, 256], sizes = [8, 128], strides = [1, 1]} : vector<8x384xf32> to vector<8x128xf32>
    %474 = vector.extract_strided_slice %456 {offsets = [0, 256], sizes = [8, 128], strides = [1, 1]} : vector<8x384xf32> to vector<8x128xf32>
    %475 = arith.addf %474, %23 : vector<8x128xf32>
    %476 = arith.mulf %464, %475 : vector<8x128xf32>
    %477 = arith.addf %473, %476 : vector<8x128xf32>
    %478 = math.tanh %477 : vector<8x128xf32>
    %cst_96 = arith.constant 1.000000e+00 : f32
    %479 = vector.broadcast %cst_96 : f32 to vector<8x128xf32>
    %480 = arith.subf %479, %472 : vector<8x128xf32>
    %481 = arith.mulf %480, %478 : vector<8x128xf32>
    %482 = arith.mulf %472, %453 : vector<8x128xf32>
    %483 = arith.addf %481, %482 : vector<8x128xf32>
    %484 = vector.extract_strided_slice %15 {offsets = [48, 768], sizes = [8, 384], strides = [1, 1]} : vector<64x1152xf32> to vector<8x384xf32>
    %485 = arith.truncf %483 : vector<8x128xf32> to vector<8x128xbf16>
    %cst_97 = arith.constant dense<0.000000e+00> : vector<8x384xf32>
    %486 = tpu.matmul %485, %17, %cst_97 {dimension_numbers = #tpu.dot_dimension_numbers<[1], [0], [0], [1], [0, 0, 1, 1], [], []>} : vector<8x128xbf16>, vector<128x384xbf16>, vector<8x384xf32> -> vector<8x384xf32>
    %487 = vector.extract_strided_slice %484 {offsets = [0, 0], sizes = [8, 128], strides = [1, 1]} : vector<8x384xf32> to vector<8x128xf32>
    %488 = vector.extract_strided_slice %486 {offsets = [0, 0], sizes = [8, 128], strides = [1, 1]} : vector<8x384xf32> to vector<8x128xf32>
    %489 = arith.addf %487, %488 : vector<8x128xf32>
    %490 = arith.negf %489 : vector<8x128xf32>
    %491 = math.exp %490 : vector<8x128xf32>
    %cst_98 = arith.constant 1.000000e+00 : f32
    %492 = vector.broadcast %cst_98 : f32 to vector<8x128xf32>
    %493 = arith.addf %492, %491 : vector<8x128xf32>
    %494 = arith.divf %492, %493 : vector<8x128xf32>
    %495 = vector.extract_strided_slice %484 {offsets = [0, 128], sizes = [8, 128], strides = [1, 1]} : vector<8x384xf32> to vector<8x128xf32>
    %496 = vector.extract_strided_slice %486 {offsets = [0, 128], sizes = [8, 128], strides = [1, 1]} : vector<8x384xf32> to vector<8x128xf32>
    %497 = arith.addf %495, %496 : vector<8x128xf32>
    %498 = arith.negf %497 : vector<8x128xf32>
    %499 = math.exp %498 : vector<8x128xf32>
    %cst_99 = arith.constant 1.000000e+00 : f32
    %500 = vector.broadcast %cst_99 : f32 to vector<8x128xf32>
    %501 = arith.addf %500, %499 : vector<8x128xf32>
    %502 = arith.divf %500, %501 : vector<8x128xf32>
    %503 = vector.extract_strided_slice %484 {offsets = [0, 256], sizes = [8, 128], strides = [1, 1]} : vector<8x384xf32> to vector<8x128xf32>
    %504 = vector.extract_strided_slice %486 {offsets = [0, 256], sizes = [8, 128], strides = [1, 1]} : vector<8x384xf32> to vector<8x128xf32>
    %505 = arith.addf %504, %23 : vector<8x128xf32>
    %506 = arith.mulf %494, %505 : vector<8x128xf32>
    %507 = arith.addf %503, %506 : vector<8x128xf32>
    %508 = math.tanh %507 : vector<8x128xf32>
    %cst_100 = arith.constant 1.000000e+00 : f32
    %509 = vector.broadcast %cst_100 : f32 to vector<8x128xf32>
    %510 = arith.subf %509, %502 : vector<8x128xf32>
    %511 = arith.mulf %510, %508 : vector<8x128xf32>
    %512 = arith.mulf %502, %483 : vector<8x128xf32>
    %513 = arith.addf %511, %512 : vector<8x128xf32>
    %514 = tpu.concatenate %333, %363, %393, %423, %453, %483, %513 in 0 : vector<8x128xf32>, vector<8x128xf32>, vector<8x128xf32>, vector<8x128xf32>, vector<8x128xf32>, vector<8x128xf32>, vector<8x128xf32> -> vector<56x128xf32>
    %515 = arith.truncf %514 : vector<56x128xf32> to vector<56x128xbf16>
    %c4 = arith.constant 4 : index
    %c0_101 = arith.constant 0 : index
    %c0_102 = arith.constant 0 : index
    %516 = vector.load %arg5[%c4, %c0_101, %c0_102] : memref<5x128x128xbf16, #tpu.memory_space<vmem>>, vector<1x128x128xbf16>
    %517 = vector.shape_cast %516 : vector<1x128x128xbf16> to vector<128x128xbf16>
    %cst_103 = arith.constant dense<0.000000e+00> : vector<56x128xf32>
    %518 = tpu.matmul %515, %517, %cst_103 {dimension_numbers = #tpu.dot_dimension_numbers<[1], [0], [0], [1], [0, 0, 1, 1], [], []>} : vector<56x128xbf16>, vector<128x128xbf16>, vector<56x128xf32> -> vector<56x128xf32>
    %c4_104 = arith.constant 4 : index
    %c0_105 = arith.constant 0 : index
    %c0_106 = arith.constant 0 : index
    %519 = vector.load %arg6[%c4_104, %c0_105, %c0_106] : memref<5x1x128xf32, #tpu.memory_space<vmem>>, vector<1x1x128xf32>
    %520 = vector.shape_cast %519 : vector<1x1x128xf32> to vector<1x128xf32>
    %521 = vector.broadcast %520 : vector<1x128xf32> to vector<56x128xf32>
    %522 = arith.addf %518, %521 : vector<56x128xf32>
    %c8 = arith.constant 8 : index
    %c0_107 = arith.constant 0 : index
    %523 = vector.load %arg7[%c8, %c0_107] : memref<64x128xf32, #tpu.memory_space<vmem>>, vector<56x128xf32>
    tpu.vector_store %arg7[%c8, %c0_107], %522 {strides = array<i32>} : memref<64x128xf32, #tpu.memory_space<vmem>>, vector<56x128xf32>,
    return
  }
}

</mosaic_0001>

<llo_original>
// kernel: language_model_forward.1
$region0: #{language_model_forward.1}
  #allocation0 [shape = 'u32[]', space=smem, size = 0x4, offset = 0x4, fixed_abs, tag = 'smem constant byte address 0x4 - core index']
  #allocation1 [shape = 'u32[144,128]{1,0:T(1,128)}', space=vmem, size = 0x12000, scoped, tag = 'internal scratch']
  %s0 = inlined_call_operand.vmem [shape: s32[64,1], index: 0, kind: input, shape index: {}]
  %s1 = inlined_call_operand.hbm [shape: bf16[64,1152], index: 1, kind: input, shape index: {}]
  %s2 = inlined_call_operand.hbm [shape: bf16[256,768], index: 2, kind: input, shape index: {}]
  %s3 = inlined_call_operand.hbm [shape: bf16[128,384], index: 3, kind: input, shape index: {}]
  %s4 = inlined_call_operand.vmem [shape: f32[2,1152], index: 4, kind: input, shape index: {}]
  %s5 = inlined_call_operand.hbm [shape: bf16[5,128,128], index: 5, kind: input, shape index: {}]
  %s6 = inlined_call_operand.vmem [shape: f32[5,1,128], index: 6, kind: input, shape index: {}]
  %s7 = inlined_call_operand.vmem [shape: f32[64,128], index: 7, kind: output, shape index: {}]
  %s8 = sld [smem:[#allocation0]]
  $region54: #{language_model_forward.1} parent=0
    _
  %s10 = ssub.s32 1, %s8
  %s11 = scalar_select 0, %s10, %s8
  $region1: #{language_model_forward.1} parent=0
    #allocation2 [shape = 'u8[147456]{0}', space=vmem, size = 0x24000, scoped, tag = 'input window, operand 1, single buffered']
    #allocation3 [shape = 's32[1]{0}', space=sflag, size = 0x4, scoped, tag = 'scoped memory for language_model_forward.1']
    #allocation4 [shape = 'u8[393216]{0}', space=vmem, size = 0x60000, scoped, tag = 'input window, operand 2, single buffered']
    #allocation5 [shape = 's32[1]{0}', space=sflag, size = 0x4, scoped, tag = 'scoped memory for language_model_forward.1']
    #allocation6 [shape = 'u8[98304]{0}', space=vmem, size = 0x18000, scoped, tag = 'input window, operand 3, single buffered']
    #allocation7 [shape = 'u8[163840]{0}', space=vmem, size = 0x28000, scoped, tag = 'input window, operand 5, single buffered']
    #allocation8 [shape = 's32[1]{0}', space=sflag, size = 0x4, scoped, tag = 'scoped memory for language_model_forward.1']
    %12 = vsyncpa [#allocation3], 0
    %13 = vsyncpa [#allocation5], 0
    %14 = vsyncpa [#allocation8], 0
    // Predicated region
    $region2: #{language_model_forward.1} parent=1 // pred_check
      _
    $region3: #{language_model_forward.1} parent=1 // pred_check_branch
      %16 = sbr.rel (0) target = $region5
    $region4: #{language_model_forward.1} parent=1 // pred_region
      _
    $region5: #{language_model_forward.1} parent=1 // pred_fallthru
      _
    // Predicated region
    $region6: #{language_model_forward.1} parent=1 // pred_check
      _
    $region7: #{language_model_forward.1} parent=1 // pred_check_branch
      %18 = sbr.rel (0) target = $region9
    $region8: #{language_model_forward.1} parent=1 // pred_region
      %s20 = ssub.s32 4608, 4608
      %21 = vsyncadd [#allocation3], %s20
      %s22 = sshll.u32 [#allocation2], 4
      %s23 = int_to_ptr.vmem [resolvable:$true] %s22
      %28 = dma.hbm_to_vmem [thread:$0]  %s1, 4608, %s23, [#allocation3], 576, 576, 36
    $region9: #{language_model_forward.1} parent=1 // pred_fallthru
      _
    // Predicated region
    $region10: #{language_model_forward.1} parent=1 // pred_check
      _
    $region11: #{language_model_forward.1} parent=1 // pred_check_branch
      %30 = sbr.rel (0) target = $region13
    $region12: #{language_model_forward.1} parent=1 // pred_region
      %s32 = ssub.s32 12288, 12288
      %33 = vsyncadd [#allocation5], %s32
      %s34 = sshll.u32 [#allocation4], 4
      %s35 = int_to_ptr.vmem [resolvable:$true] %s34
      %40 = dma.hbm_to_vmem [thread:$0]  %s2, 12288, %s35, [#allocation5], 384, 384, 24
    $region13: #{language_model_forward.1} parent=1 // pred_fallthru
      _
    // Predicated region
    $region14: #{language_model_forward.1} parent=1 // pred_check
      _
    $region15: #{language_model_forward.1} parent=1 // pred_check_branch
      %42 = sbr.rel (0) target = $region17
    $region16: #{language_model_forward.1} parent=1 // pred_region
      %s44 = ssub.s32 3072, 3072
      %45 = vsyncadd [#allocation5], %s44
      %s46 = sshll.u32 [#allocation6], 4
      %s47 = int_to_ptr.vmem [resolvable:$true] %s46
      %52 = dma.hbm_to_vmem [thread:$0]  %s3, 3072, %s47, [#allocation5], 192, 192, 12
    $region17: #{language_model_forward.1} parent=1 // pred_fallthru
      _
    // Predicated region
    $region18: #{language_model_forward.1} parent=1 // pred_check
      _
    $region19: #{language_model_forward.1} parent=1 // pred_check_branch
      %54 = sbr.rel (0) target = $region21
    $region20: #{language_model_forward.1} parent=1 // pred_region
      _
    $region21: #{language_model_forward.1} parent=1 // pred_fallthru
      _
    // Predicated region
    $region22: #{language_model_forward.1} parent=1 // pred_check
      _
    $region23: #{language_model_forward.1} parent=1 // pred_check_branch
      %56 = sbr.rel (0) target = $region25
    $region24: #{language_model_forward.1} parent=1 // pred_region
      %s58 = ssub.s32 5120, 5120
      %59 = vsyncadd [#allocation8], %s58
      %s60 = sshll.u32 [#allocation7], 4
      %s61 = int_to_ptr.vmem [resolvable:$true] %s60
      %66 = dma.hbm_to_vmem [thread:$0]  %s5, 5120, %s61, [#allocation8], 64, 64, 4
    $region25: #{language_model_forward.1} parent=1 // pred_fallthru
      _
    // Predicated region
    $region26: #{language_model_forward.1} parent=1 // pred_check
      _
    $region27: #{language_model_forward.1} parent=1 // pred_check_branch
      %68 = sbr.rel (0) target = $region29
    $region28: #{language_model_forward.1} parent=1 // pred_region
      _
    $region29: #{language_model_forward.1} parent=1 // pred_fallthru
      _
    // Predicated region
    $region30: #{language_model_forward.1} parent=1 // pred_check
      _
    $region31: #{language_model_forward.1} parent=1 // pred_check_branch
      %70 = sbr.rel (0) target = $region33
    $region32: #{language_model_forward.1} parent=1 // pred_region
      %71 = dma.done [#allocation3], 4608
    $region33: #{language_model_forward.1} parent=1 // pred_fallthru
      _
    // Predicated region
    $region34: #{language_model_forward.1} parent=1 // pred_check
      _
    $region35: #{language_model_forward.1} parent=1 // pred_check_branch
      %73 = sbr.rel (0) target = $region37
    $region36: #{language_model_forward.1} parent=1 // pred_region
      %74 = dma.done [#allocation5], 12288
    $region37: #{language_model_forward.1} parent=1 // pred_fallthru
      _
    // Predicated region
    $region38: #{language_model_forward.1} parent=1 // pred_check
      _
    $region39: #{language_model_forward.1} parent=1 // pred_check_branch
      %76 = sbr.rel (0) target = $region41
    $region40: #{language_model_forward.1} parent=1 // pred_region
      %77 = dma.done [#allocation5], 3072
    $region41: #{language_model_forward.1} parent=1 // pred_fallthru
      _
    // Predicated region
    $region42: #{language_model_forward.1} parent=1 // pred_check
      _
    $region43: #{language_model_forward.1} parent=1 // pred_check_branch
      %79 = sbr.rel (0) target = $region45
    $region44: #{language_model_forward.1} parent=1 // pred_region
      %80 = dma.done [#allocation8], 5120
    $region45: #{language_model_forward.1} parent=1 // pred_fallthru
      _
    %v82 = vld [vmem:[%s0] sm:$0xff]
    %v83 = vld [vmem:[%s0 + $0x8] sm:$0xff]
    %v84 = vld [vmem:[%s0 + $0x10] sm:$0xff]
    %v85 = vld [vmem:[%s0 + $0x18] sm:$0xff]
    %v86 = vld [vmem:[%s0 + $0x20] sm:$0xff]
    %v87 = vld [vmem:[%s0 + $0x28] sm:$0xff]
    %v88 = vld [vmem:[%s0 + $0x30] sm:$0xff]
    %v89 = vld [vmem:[%s0 + $0x38] sm:$0xff]
    %vm90 = vcmp.ge.s32.totalorder %v82, 64
    %vm91 = vcmp.ge.s32.totalorder %v83, 64
    %vm92 = vcmp.ge.s32.totalorder %v84, 64
    %vm93 = vcmp.ge.s32.totalorder %v85, 64
    %vm94 = vcmp.ge.s32.totalorder %v86, 64
    %vm95 = vcmp.ge.s32.totalorder %v87, 64
    %vm96 = vcmp.ge.s32.totalorder %v88, 64
    %vm97 = vcmp.ge.s32.totalorder %v89, 64
    %v98 = vsel %vm90, 1, %v82
    %v99 = vsel %vm91, 1, %v83
    %v100 = vsel %vm92, 1, %v84
    %v101 = vsel %vm93, 1, %v85
    %v102 = vsel %vm94, 1, %v86
    %v103 = vsel %vm95, 1, %v87
    %v104 = vsel %vm96, 1, %v88
    %v105 = vsel %vm97, 1, %v89
    %v106 = vlaneseq
    %v107 = vand.u32 %v106, 127
    %108 = vset.pattern.permute.xlu0 0
    %109 = vperm.xlu0 %108, %v98
    %v110 = vpop.permute.xlu0 %109
    %111 = vset.pattern.permute.xlu0 0
    %112 = vperm.xlu0 %111, %v99
    %v113 = vpop.permute.xlu0 %112
    %114 = vset.pattern.permute.xlu0 0
    %115 = vperm.xlu0 %114, %v100
    %v116 = vpop.permute.xlu0 %115
    %117 = vset.pattern.permute.xlu0 0
    %118 = vperm.xlu0 %117, %v101
    %v119 = vpop.permute.xlu0 %118
    %120 = vset.pattern.permute.xlu0 0
    %121 = vperm.xlu0 %120, %v102
    %v122 = vpop.permute.xlu0 %121
    %123 = vset.pattern.permute.xlu0 0
    %124 = vperm.xlu0 %123, %v103
    %v125 = vpop.permute.xlu0 %124
    %126 = vset.pattern.permute.xlu0 0
    %127 = vperm.xlu0 %126, %v104
    %v128 = vpop.permute.xlu0 %127
    %129 = vset.pattern.permute.xlu0 0
    %130 = vperm.xlu0 %129, %v105
    %v131 = vpop.permute.xlu0 %130
    %vm132 = vcmp.eq.s32.totalorder %v110, %v107
    %vm133 = vcmp.eq.s32.totalorder %v113, %v107
    %vm134 = vcmp.eq.s32.totalorder %v116, %v107
    %vm135 = vcmp.eq.s32.totalorder %v119, %v107
    %vm136 = vcmp.eq.s32.totalorder %v122, %v107
    %vm137 = vcmp.eq.s32.totalorder %v125, %v107
    %vm138 = vcmp.eq.s32.totalorder %v128, %v107
    %vm139 = vcmp.eq.s32.totalorder %v131, %v107
    %v140 = vsel %vm132, 1, 0
    %v141 = vsel %vm133, 1, 0
    %v142 = vsel %vm134, 1, 0
    %v143 = vsel %vm135, 1, 0
    %v144 = vsel %vm136, 1, 0
    %v145 = vsel %vm137, 1, 0
    %v146 = vsel %vm138, 1, 0
    %v147 = vsel %vm139, 1, 0
    %v148 = vcvt.s32.f32 %v140
    %v149 = vcvt.s32.f32 %v141
    %v150 = vcvt.s32.f32 %v142
    %v151 = vcvt.s32.f32 %v143
    %v152 = vcvt.s32.f32 %v144
    %v153 = vcvt.s32.f32 %v145
    %v154 = vcvt.s32.f32 %v146
    %v155 = vcvt.s32.f32 %v147
    %v156 = vpack.c.bf16 %v149, %v148
    %v157 = vpack.c.bf16 %v151, %v150
    %v158 = vpack.c.bf16 %v153, %v152
    %v159 = vpack.c.bf16 %v155, %v154
    %v160 = vld [vmem:[#allocation2] sm:$0xff]
    %v161 = vld [vmem:[#allocation2 + $0x8] sm:$0xff]
    %v162 = vld [vmem:[#allocation2 + $0x10] sm:$0xff]
    %v163 = vld [vmem:[#allocation2 + $0x18] sm:$0xff]
    %v164 = vld [vmem:[#allocation2 + $0x20] sm:$0xf]
    %v165 = vld [vmem:[#allocation2 + $0x24] sm:$0xff]
    %v166 = vld [vmem:[#allocation2 + $0x2c] sm:$0xff]
    %v167 = vld [vmem:[#allocation2 + $0x34] sm:$0xff]
    %v168 = vld [vmem:[#allocation2 + $0x3c] sm:$0xff]
    %v169 = vld [vmem:[#allocation2 + $0x44] sm:$0xf]
    %v170 = vld [vmem:[#allocation2 + $0x48] sm:$0xff]
    %v171 = vld [vmem:[#allocation2 + $0x50] sm:$0xff]
    %v172 = vld [vmem:[#allocation2 + $0x58] sm:$0xff]
    %v173 = vld [vmem:[#allocation2 + $0x60] sm:$0xff]
    %v174 = vld [vmem:[#allocation2 + $0x68] sm:$0xf]
    %v175 = vld [vmem:[#allocation2 + $0x6c] sm:$0xff]
    %v176 = vld [vmem:[#allocation2 + $0x74] sm:$0xff]
    %v177 = vld [vmem:[#allocation2 + $0x7c] sm:$0xff]
    %v178 = vld [vmem:[#allocation2 + $0x84] sm:$0xff]
    %v179 = vld [vmem:[#allocation2 + $0x8c] sm:$0xf]
    %v180 = vld [vmem:[#allocation2 + $0x90] sm:$0xff]
    %v181 = vld [vmem:[#allocation2 + $0x98] sm:$0xff]
    %v182 = vld [vmem:[#allocation2 + $0xa0] sm:$0xff]
    %v183 = vld [vmem:[#allocation2 + $0xa8] sm:$0xff]
    %v184 = vld [vmem:[#allocation2 + $0xb0] sm:$0xf]
    %v185 = vld [vmem:[#allocation2 + $0xb4] sm:$0xff]
    %v186 = vld [vmem:[#allocation2 + $0xbc] sm:$0xff]
    %v187 = vld [vmem:[#allocation2 + $0xc4] sm:$0xff]
    %v188 = vld [vmem:[#allocation2 + $0xcc] sm:$0xff]
    %v189 = vld [vmem:[#allocation2 + $0xd4] sm:$0xf]
    %v190 = vld [vmem:[#allocation2 + $0xd8] sm:$0xff]
    %v191 = vld [vmem:[#allocation2 + $0xe0] sm:$0xff]
    %v192 = vld [vmem:[#allocation2 + $0xe8] sm:$0xff]
    %v193 = vld [vmem:[#allocation2 + $0xf0] sm:$0xff]
    %v194 = vld [vmem:[#allocation2 + $0xf8] sm:$0xf]
    %v195 = vld [vmem:[#allocation2 + $0xfc] sm:$0xff]
    %v196 = vld [vmem:[#allocation2 + $0x104] sm:$0xff]
    %v197 = vld [vmem:[#allocation2 + $0x10c] sm:$0xff]
    %v198 = vld [vmem:[#allocation2 + $0x114] sm:$0xff]
    %v199 = vld [vmem:[#allocation2 + $0x11c] sm:$0xf]
    %v200 = vld [vmem:[%s4] ss:$2 sm:$0xff]
    %s201 = scalar_lea.vmem %s4, 16
    %v202 = vld [vmem:[%s201] ss:$2 sm:$0x1]
    %v205 = vlaneseq
    %v206 = vshrl.u32 %v205, 7
    %v207 = vsub.s32 0, %v206
    %v208 = vrot.slane %v200, %v207
    %v209 = vlaneseq
    %v210 = vshrl.u32 %v209, 7
    %v211 = vsub.s32 1, %v210
    %v212 = vrot.slane %v200, %v211
    %v213 = vlaneseq
    %v214 = vshrl.u32 %v213, 7
    %v215 = vsub.s32 2, %v214
    %v216 = vrot.slane %v200, %v215
    %v217 = vlaneseq
    %v218 = vshrl.u32 %v217, 7
    %v219 = vsub.s32 3, %v218
    %v220 = vrot.slane %v200, %v219
    %v221 = vlaneseq
    %v222 = vshrl.u32 %v221, 7
    %v223 = vsub.s32 4, %v222
    %v224 = vrot.slane %v200, %v223
    %v225 = vlaneseq
    %v226 = vshrl.u32 %v225, 7
    %v227 = vsub.s32 5, %v226
    %v228 = vrot.slane %v200, %v227
    %v229 = vlaneseq
    %v230 = vshrl.u32 %v229, 7
    %v231 = vsub.s32 6, %v230
    %v232 = vrot.slane %v200, %v231
    %v233 = vlaneseq
    %v234 = vshrl.u32 %v233, 7
    %v235 = vsub.s32 7, %v234
    %v236 = vrot.slane %v200, %v235
    %v237 = vlaneseq
    %v238 = vshrl.u32 %v237, 7
    %v239 = vsub.s32 0, %v238
    %v240 = vrot.slane %v202, %v239
    %v290 = vunpack.c.l.b16 %v160
    %v291 = vunpack.c.h.b16 %v160
    %v292 = vunpack.c.l.b16 %v161
    %v293 = vunpack.c.h.b16 %v161
    %v294 = vunpack.c.l.b16 %v162
    %v295 = vunpack.c.h.b16 %v162
    %v296 = vunpack.c.l.b16 %v163
    %v297 = vunpack.c.h.b16 %v163
    %v298 = vunpack.c.l.b16 %v164
    %v299 = vunpack.c.l.b16 %v165
    %v300 = vunpack.c.h.b16 %v165
    %v301 = vunpack.c.l.b16 %v166
    %v302 = vunpack.c.h.b16 %v166
    %v303 = vunpack.c.l.b16 %v167
    %v304 = vunpack.c.h.b16 %v167
    %v305 = vunpack.c.l.b16 %v168
    %v306 = vunpack.c.h.b16 %v168
    %v307 = vunpack.c.l.b16 %v169
    %v308 = vunpack.c.l.b16 %v170
    %v309 = vunpack.c.h.b16 %v170
    %v310 = vunpack.c.l.b16 %v171
    %v311 = vunpack.c.h.b16 %v171
    %v312 = vunpack.c.l.b16 %v172
    %v313 = vunpack.c.h.b16 %v172
    %v314 = vunpack.c.l.b16 %v173
    %v315 = vunpack.c.h.b16 %v173
    %v316 = vunpack.c.l.b16 %v174
    %v317 = vunpack.c.l.b16 %v175
    %v318 = vunpack.c.h.b16 %v175
    %v319 = vunpack.c.l.b16 %v176
    %v320 = vunpack.c.h.b16 %v176
    %v321 = vunpack.c.l.b16 %v177
    %v322 = vunpack.c.h.b16 %v177
    %v323 = vunpack.c.l.b16 %v178
    %v324 = vunpack.c.h.b16 %v178
    %v325 = vunpack.c.l.b16 %v179
    %v326 = vunpack.c.l.b16 %v180
    %v327 = vunpack.c.h.b16 %v180
    %v328 = vunpack.c.l.b16 %v181
    %v329 = vunpack.c.h.b16 %v181
    %v330 = vunpack.c.l.b16 %v182
    %v331 = vunpack.c.h.b16 %v182
    %v332 = vunpack.c.l.b16 %v183
    %v333 = vunpack.c.h.b16 %v183
    %v334 = vunpack.c.l.b16 %v184
    %v335 = vunpack.c.l.b16 %v185
    %v336 = vunpack.c.h.b16 %v185
    %v337 = vunpack.c.l.b16 %v186
    %v338 = vunpack.c.h.b16 %v186
    %v339 = vunpack.c.l.b16 %v187
    %v340 = vunpack.c.h.b16 %v187
    %v341 = vunpack.c.l.b16 %v188
    %v342 = vunpack.c.h.b16 %v188
    %v343 = vunpack.c.l.b16 %v189
    %v344 = vunpack.c.l.b16 %v190
    %v345 = vunpack.c.h.b16 %v190
    %v346 = vunpack.c.l.b16 %v191
    %v347 = vunpack.c.h.b16 %v191
    %v348 = vunpack.c.l.b16 %v192
    %v349 = vunpack.c.h.b16 %v192
    %v350 = vunpack.c.l.b16 %v193
    %v351 = vunpack.c.h.b16 %v193
    %v352 = vunpack.c.l.b16 %v194
    %v353 = vunpack.c.l.b16 %v195
    %v354 = vunpack.c.h.b16 %v195
    %v355 = vunpack.c.l.b16 %v196
    %v356 = vunpack.c.h.b16 %v196
    %v357 = vunpack.c.l.b16 %v197
    %v358 = vunpack.c.h.b16 %v197
    %v359 = vunpack.c.l.b16 %v198
    %v360 = vunpack.c.h.b16 %v198
    %v361 = vunpack.c.l.b16 %v199
    %v362 = vpack.c.b16 %v299, %v290
    %v363 = vpack.c.b16 %v300, %v291
    %v364 = vpack.c.b16 %v301, %v292
    %v365 = vpack.c.b16 %v302, %v293
    %v366 = vpack.c.b16 %v303, %v294
    %v367 = vpack.c.b16 %v304, %v295
    %v368 = vpack.c.b16 %v305, %v296
    %v369 = vpack.c.b16 %v306, %v297
    %v370 = vpack.c.b16 %v307, %v298
    %v371 = vpack.c.b16 %v317, %v308
    %v372 = vpack.c.b16 %v318, %v309
    %v373 = vpack.c.b16 %v319, %v310
    %v374 = vpack.c.b16 %v320, %v311
    %v375 = vpack.c.b16 %v321, %v312
    %v376 = vpack.c.b16 %v322, %v313
    %v377 = vpack.c.b16 %v323, %v314
    %v378 = vpack.c.b16 %v324, %v315
    %v379 = vpack.c.b16 %v325, %v316
    %v380 = vpack.c.b16 %v335, %v326
    %v381 = vpack.c.b16 %v336, %v327
    %v382 = vpack.c.b16 %v337, %v328
    %v383 = vpack.c.b16 %v338, %v329
    %v384 = vpack.c.b16 %v339, %v330
    %v385 = vpack.c.b16 %v340, %v331
    %v386 = vpack.c.b16 %v341, %v332
    %v387 = vpack.c.b16 %v342, %v333
    %v388 = vpack.c.b16 %v343, %v334
    %v389 = vpack.c.b16 %v353, %v344
    %v390 = vpack.c.b16 %v354, %v345
    %v391 = vpack.c.b16 %v355, %v346
    %v392 = vpack.c.b16 %v356, %v347
    %v393 = vpack.c.b16 %v357, %v348
    %v394 = vpack.c.b16 %v358, %v349
    %v395 = vpack.c.b16 %v359, %v350
    %v396 = vpack.c.b16 %v360, %v351
    %v397 = vpack.c.b16 %v361, %v352
    %vm434 = vcmask 523264
    %v436 = vsel %vm434, %v156, 0
    %v439 = vsel %vm434, %v157, 0
    %v442 = vsel %vm434, %v158, 0
    %v445 = vsel %vm434, %v159, 0
    %447 = vmatprep.subr.bf16.mxu0 %v363
    %448 = vmatpush1.bf16.msra.mxu0 %v362
    %449 = vmatprep.subr.bf16.mxu0 %v372
    %450 = vmatpush1.bf16.msra.mxu0 %v371
    %451 = vmatprep.subr.bf16.mxu0 %v381
    %452 = vmatpush1.bf16.msra.mxu0 %v380
    %453 = vmatprep.subr.bf16.mxu0 %v390
    %454 = vmatpush1.bf16.msra.mxu0 %v389
    %455 = vmatprep.subr.bf16.mxu0 0
    %456 = vmatpush1.bf16.msra.mxu0 0
    %457 = vmatprep.subr.bf16.mxu0 0
    %458 = vmatpush1.bf16.msra.mxu0 0
    %459 = vmatprep.subr.bf16.mxu0 0
    %460 = vmatpush1.bf16.msra.mxu0 0
    %461 = vmatprep.subr.bf16.mxu0 0
    %462 = vmatpush1.bf16.msra.mxu0 0
    %463 = vmatprep.subr.bf16.mxu0 0
    %464 = vmatpush1.bf16.msra.mxu0 0
    %465 = vmatprep.subr.bf16.mxu0 0
    %466 = vmatpush1.bf16.msra.mxu0 0
    %467 = vmatprep.subr.bf16.mxu0 0
    %468 = vmatpush1.bf16.msra.mxu0 0
    %469 = vmatprep.subr.bf16.mxu0 0
    %470 = vmatpush1.bf16.msra.mxu0 0
    %471 = vmatprep.subr.bf16.mxu0 0
    %472 = vmatpush1.bf16.msra.mxu0 0
    %473 = vmatprep.subr.bf16.mxu0 0
    %474 = vmatpush1.bf16.msra.mxu0 0
    %475 = vmatprep.subr.bf16.mxu0 0
    %476 = vmatpush1.bf16.msra.mxu0 0
    %477 = vmatprep.subr.bf16.mxu0 0
    %478 = vmatpush1.bf16.msra.mxu0 0
    %479 = vmatprep.mubr.bf16.mxu0 0
    %480 = vmatmul.mubr.bf16.gmra.mrb[0].mxu0 %v436
    %v481 = vpop.f32.mrb[0].mxu0
    %v482 = vadd.f32 %v208, %v481
    %v483 = vpop.f32.mrb[0].mxu0
    %v484 = vadd.f32 %v212, %v483
    %v485 = vpop.f32.mrb[0].mxu0
    %v486 = vadd.f32 %v208, %v485
    %v487 = vpop.f32.mrb[0].mxu0
    %v488 = vadd.f32 %v212, %v487
    %489 = vmatprep.mubr.bf16.mxu0 0
    %490 = vmatmul.mubr.bf16.gmra.mrb[0].mxu0 %v439
    %v491 = vpop.f32.mrb[0].mxu0
    %v492 = vadd.f32 %v208, %v491
    %v493 = vpop.f32.mrb[0].mxu0
    %v494 = vadd.f32 %v212, %v493
    %v495 = vpop.f32.mrb[0].mxu0
    %v496 = vadd.f32 %v208, %v495
    %v497 = vpop.f32.mrb[0].mxu0
    %v498 = vadd.f32 %v212, %v497
    %499 = vmatprep.mubr.bf16.mxu0 0
    %500 = vmatmul.mubr.bf16.gmra.mrb[0].mxu0 %v442
    %v501 = vpop.f32.mrb[0].mxu0
    %v502 = vadd.f32 %v208, %v501
    %v503 = vpop.f32.mrb[0].mxu0
    %v504 = vadd.f32 %v212, %v503
    %v505 = vpop.f32.mrb[0].mxu0
    %v506 = vadd.f32 %v208, %v505
    %v507 = vpop.f32.mrb[0].mxu0
    %v508 = vadd.f32 %v212, %v507
    %509 = vmatprep.mubr.bf16.mxu0 0
    %510 = vmatmul.mubr.bf16.gmra.mrb[0].mxu0 %v445
    %v511 = vpop.f32.mrb[0].mxu0
    %v512 = vadd.f32 %v208, %v511
    %v513 = vpop.f32.mrb[0].mxu0
    %v514 = vadd.f32 %v212, %v513
    %v515 = vpop.f32.mrb[0].mxu0
    %v516 = vadd.f32 %v208, %v515
    %v517 = vpop.f32.mrb[0].mxu0
    %v518 = vadd.f32 %v212, %v517
    %519 = vdwg.mxu0
    %520 = vmatprep.subr.bf16.mxu0 %v365
    %521 = vmatpush1.bf16.msra.mxu0 %v364
    %522 = vmatprep.subr.bf16.mxu0 %v374
    %523 = vmatpush1.bf16.msra.mxu0 %v373
    %524 = vmatprep.subr.bf16.mxu0 %v383
    %525 = vmatpush1.bf16.msra.mxu0 %v382
    %526 = vmatprep.subr.bf16.mxu0 %v392
    %527 = vmatpush1.bf16.msra.mxu0 %v391
    %528 = vmatprep.subr.bf16.mxu0 0
    %529 = vmatpush1.bf16.msra.mxu0 0
    %530 = vmatprep.subr.bf16.mxu0 0
    %531 = vmatpush1.bf16.msra.mxu0 0
    %532 = vmatprep.subr.bf16.mxu0 0
    %533 = vmatpush1.bf16.msra.mxu0 0
    %534 = vmatprep.subr.bf16.mxu0 0
    %535 = vmatpush1.bf16.msra.mxu0 0
    %536 = vmatprep.subr.bf16.mxu0 0
    %537 = vmatpush1.bf16.msra.mxu0 0
    %538 = vmatprep.subr.bf16.mxu0 0
    %539 = vmatpush1.bf16.msra.mxu0 0
    %540 = vmatprep.subr.bf16.mxu0 0
    %541 = vmatpush1.bf16.msra.mxu0 0
    %542 = vmatprep.subr.bf16.mxu0 0
    %543 = vmatpush1.bf16.msra.mxu0 0
    %544 = vmatprep.subr.bf16.mxu0 0
    %545 = vmatpush1.bf16.msra.mxu0 0
    %546 = vmatprep.subr.bf16.mxu0 0
    %547 = vmatpush1.bf16.msra.mxu0 0
    %548 = vmatprep.subr.bf16.mxu0 0
    %549 = vmatpush1.bf16.msra.mxu0 0
    %550 = vmatprep.subr.bf16.mxu0 0
    %551 = vmatpush1.bf16.msra.mxu0 0
    %552 = vmatprep.mubr.bf16.mxu0 0
    %553 = vmatmul.mubr.bf16.gmra.mrb[0].mxu0 %v436
    %v554 = vpop.f32.mrb[0].mxu0
    %v555 = vadd.f32 %v216, %v554
    %v556 = vpop.f32.mrb[0].mxu0
    %v557 = vadd.f32 %v220, %v556
    %v558 = vpop.f32.mrb[0].mxu0
    %v559 = vadd.f32 %v216, %v558
    %v560 = vpop.f32.mrb[0].mxu0
    %v561 = vadd.f32 %v220, %v560
    %562 = vmatprep.mubr.bf16.mxu0 0
    %563 = vmatmul.mubr.bf16.gmra.mrb[0].mxu0 %v439
    %v564 = vpop.f32.mrb[0].mxu0
    %v565 = vadd.f32 %v216, %v564
    %v566 = vpop.f32.mrb[0].mxu0
    %v567 = vadd.f32 %v220, %v566
    %v568 = vpop.f32.mrb[0].mxu0
    %v569 = vadd.f32 %v216, %v568
    %v570 = vpop.f32.mrb[0].mxu0
    %v571 = vadd.f32 %v220, %v570
    %572 = vmatprep.mubr.bf16.mxu0 0
    %573 = vmatmul.mubr.bf16.gmra.mrb[0].mxu0 %v442
    %v574 = vpop.f32.mrb[0].mxu0
    %v575 = vadd.f32 %v216, %v574
    %v576 = vpop.f32.mrb[0].mxu0
    %v577 = vadd.f32 %v220, %v576
    %v578 = vpop.f32.mrb[0].mxu0
    %v579 = vadd.f32 %v216, %v578
    %v580 = vpop.f32.mrb[0].mxu0
    %v581 = vadd.f32 %v220, %v580
    %582 = vmatprep.mubr.bf16.mxu0 0
    %583 = vmatmul.mubr.bf16.gmra.mrb[0].mxu0 %v445
    %v584 = vpop.f32.mrb[0].mxu0
    %v585 = vadd.f32 %v216, %v584
    %v586 = vpop.f32.mrb[0].mxu0
    %v587 = vadd.f32 %v220, %v586
    %v588 = vpop.f32.mrb[0].mxu0
    %v589 = vadd.f32 %v216, %v588
    %v590 = vpop.f32.mrb[0].mxu0
    %v591 = vadd.f32 %v220, %v590
    %592 = vdwg.mxu0
    %593 = vmatprep.subr.bf16.mxu0 %v367
    %594 = vmatpush1.bf16.msra.mxu0 %v366
    %595 = vmatprep.subr.bf16.mxu0 %v376
    %596 = vmatpush1.bf16.msra.mxu0 %v375
    %597 = vmatprep.subr.bf16.mxu0 %v385
    %598 = vmatpush1.bf16.msra.mxu0 %v384
    %599 = vmatprep.subr.bf16.mxu0 %v394
    %600 = vmatpush1.bf16.msra.mxu0 %v393
    %601 = vmatprep.subr.bf16.mxu0 0
    %602 = vmatpush1.bf16.msra.mxu0 0
    %603 = vmatprep.subr.bf16.mxu0 0
    %604 = vmatpush1.bf16.msra.mxu0 0
    %605 = vmatprep.subr.bf16.mxu0 0
    %606 = vmatpush1.bf16.msra.mxu0 0
    %607 = vmatprep.subr.bf16.mxu0 0
    %608 = vmatpush1.bf16.msra.mxu0 0
    %609 = vmatprep.subr.bf16.mxu0 0
    %610 = vmatpush1.bf16.msra.mxu0 0
    %611 = vmatprep.subr.bf16.mxu0 0
    %612 = vmatpush1.bf16.msra.mxu0 0
    %613 = vmatprep.subr.bf16.mxu0 0
    %614 = vmatpush1.bf16.msra.mxu0 0
    %615 = vmatprep.subr.bf16.mxu0 0
    %616 = vmatpush1.bf16.msra.mxu0 0
    %617 = vmatprep.subr.bf16.mxu0 0
    %618 = vmatpush1.bf16.msra.mxu0 0
    %619 = vmatprep.subr.bf16.mxu0 0
    %620 = vmatpush1.bf16.msra.mxu0 0
    %621 = vmatprep.subr.bf16.mxu0 0
    %622 = vmatpush1.bf16.msra.mxu0 0
    %623 = vmatprep.subr.bf16.mxu0 0
    %624 = vmatpush1.bf16.msra.mxu0 0
    %625 = vmatprep.mubr.bf16.mxu0 0
    %626 = vmatmul.mubr.bf16.gmra.mrb[0].mxu0 %v436
    %v627 = vpop.f32.mrb[0].mxu0
    %v628 = vadd.f32 %v224, %v627
    %v629 = vpop.f32.mrb[0].mxu0
    %v630 = vadd.f32 %v228, %v629
    %v631 = vpop.f32.mrb[0].mxu0
    %v632 = vadd.f32 %v224, %v631
    %v633 = vpop.f32.mrb[0].mxu0
    %v634 = vadd.f32 %v228, %v633
    %635 = vmatprep.mubr.bf16.mxu0 0
    %636 = vmatmul.mubr.bf16.gmra.mrb[0].mxu0 %v439
    %v637 = vpop.f32.mrb[0].mxu0
    %v638 = vadd.f32 %v224, %v637
    %v639 = vpop.f32.mrb[0].mxu0
    %v640 = vadd.f32 %v228, %v639
    %v641 = vpop.f32.mrb[0].mxu0
    %v642 = vadd.f32 %v224, %v641
    %v643 = vpop.f32.mrb[0].mxu0
    %v644 = vadd.f32 %v228, %v643
    %645 = vmatprep.mubr.bf16.mxu0 0
    %646 = vmatmul.mubr.bf16.gmra.mrb[0].mxu0 %v442
    %v647 = vpop.f32.mrb[0].mxu0
    %v648 = vadd.f32 %v224, %v647
    %v649 = vpop.f32.mrb[0].mxu0
    %v650 = vadd.f32 %v228, %v649
    %v651 = vpop.f32.mrb[0].mxu0
    %v652 = vadd.f32 %v224, %v651
    %v653 = vpop.f32.mrb[0].mxu0
    %v654 = vadd.f32 %v228, %v653
    %655 = vmatprep.mubr.bf16.mxu0 0
    %656 = vmatmul.mubr.bf16.gmra.mrb[0].mxu0 %v445
    %v657 = vpop.f32.mrb[0].mxu0
    %v658 = vadd.f32 %v224, %v657
    %v659 = vpop.f32.mrb[0].mxu0
    %v660 = vadd.f32 %v228, %v659
    %v661 = vpop.f32.mrb[0].mxu0
    %v662 = vadd.f32 %v224, %v661
    %v663 = vpop.f32.mrb[0].mxu0
    %v664 = vadd.f32 %v228, %v663
    %665 = vdwg.mxu0
    %666 = vmatprep.subr.bf16.mxu0 %v369
    %667 = vmatpush1.bf16.msra.mxu0 %v368
    %668 = vmatprep.subr.bf16.mxu0 %v378
    %669 = vmatpush1.bf16.msra.mxu0 %v377
    %670 = vmatprep.subr.bf16.mxu0 %v387
    %671 = vmatpush1.bf16.msra.mxu0 %v386
    %672 = vmatprep.subr.bf16.mxu0 %v396
    %673 = vmatpush1.bf16.msra.mxu0 %v395
    %674 = vmatprep.subr.bf16.mxu0 0
    %675 = vmatpush1.bf16.msra.mxu0 0
    %676 = vmatprep.subr.bf16.mxu0 0
    %677 = vmatpush1.bf16.msra.mxu0 0
    %678 = vmatprep.subr.bf16.mxu0 0
    %679 = vmatpush1.bf16.msra.mxu0 0
    %680 = vmatprep.subr.bf16.mxu0 0
    %681 = vmatpush1.bf16.msra.mxu0 0
    %682 = vmatprep.subr.bf16.mxu0 0
    %683 = vmatpush1.bf16.msra.mxu0 0
    %684 = vmatprep.subr.bf16.mxu0 0
    %685 = vmatpush1.bf16.msra.mxu0 0
    %686 = vmatprep.subr.bf16.mxu0 0
    %687 = vmatpush1.bf16.msra.mxu0 0
    %688 = vmatprep.subr.bf16.mxu0 0
    %689 = vmatpush1.bf16.msra.mxu0 0
    %690 = vmatprep.subr.bf16.mxu0 0
    %691 = vmatpush1.bf16.msra.mxu0 0
    %692 = vmatprep.subr.bf16.mxu0 0
    %693 = vmatpush1.bf16.msra.mxu0 0
    %694 = vmatprep.subr.bf16.mxu0 0
    %695 = vmatpush1.bf16.msra.mxu0 0
    %696 = vmatprep.subr.bf16.mxu0 0
    %697 = vmatpush1.bf16.msra.mxu0 0
    %698 = vmatprep.mubr.bf16.mxu0 0
    %699 = vmatmul.mubr.bf16.gmra.mrb[0].mxu0 %v436
    %v700 = vpop.f32.mrb[0].mxu0
    %v701 = vadd.f32 %v232, %v700
    %v702 = vpop.f32.mrb[0].mxu0
    %v703 = vadd.f32 %v236, %v702
    %v704 = vpop.f32.mrb[0].mxu0
    %v705 = vadd.f32 %v232, %v704
    %v706 = vpop.f32.mrb[0].mxu0
    %v707 = vadd.f32 %v236, %v706
    %708 = vmatprep.mubr.bf16.mxu0 0
    %709 = vmatmul.mubr.bf16.gmra.mrb[0].mxu0 %v439
    %v710 = vpop.f32.mrb[0].mxu0
    %v711 = vadd.f32 %v232, %v710
    %v712 = vpop.f32.mrb[0].mxu0
    %v713 = vadd.f32 %v236, %v712
    %v714 = vpop.f32.mrb[0].mxu0
    %v715 = vadd.f32 %v232, %v714
    %v716 = vpop.f32.mrb[0].mxu0
    %v717 = vadd.f32 %v236, %v716
    %718 = vmatprep.mubr.bf16.mxu0 0
    %719 = vmatmul.mubr.bf16.gmra.mrb[0].mxu0 %v442
    %v720 = vpop.f32.mrb[0].mxu0
    %v721 = vadd.f32 %v232, %v720
    %v722 = vpop.f32.mrb[0].mxu0
    %v723 = vadd.f32 %v236, %v722
    %v724 = vpop.f32.mrb[0].mxu0
    %v725 = vadd.f32 %v232, %v724
    %v726 = vpop.f32.mrb[0].mxu0
    %v727 = vadd.f32 %v236, %v726
    %728 = vmatprep.mubr.bf16.mxu0 0
    %729 = vmatmul.mubr.bf16.gmra.mrb[0].mxu0 %v445
    %v730 = vpop.f32.mrb[0].mxu0
    %v731 = vadd.f32 %v232, %v730
    %v732 = vpop.f32.mrb[0].mxu0
    %v733 = vadd.f32 %v236, %v732
    %v734 = vpop.f32.mrb[0].mxu0
    %v735 = vpop.f32.mrb[0].mxu0
    %736 = vdwg.mxu0
    %737 = vmatprep.subr.bf16.mxu0 0
    %738 = vmatpush1.bf16.msra.mxu0 %v370
    %739 = vmatprep.subr.bf16.mxu0 0
    %740 = vmatpush1.bf16.msra.mxu0 %v379
    %741 = vmatprep.subr.bf16.mxu0 0
    %742 = vmatpush1.bf16.msra.mxu0 %v388
    %743 = vmatprep.subr.bf16.mxu0 0
    %744 = vmatpush1.bf16.msra.mxu0 %v397
    %745 = vmatprep.subr.bf16.mxu0 0
    %746 = vmatpush1.bf16.msra.mxu0 0
    %747 = vmatprep.subr.bf16.mxu0 0
    %748 = vmatpush1.bf16.msra.mxu0 0
    %749 = vmatprep.subr.bf16.mxu0 0
    %750 = vmatpush1.bf16.msra.mxu0 0
    %751 = vmatprep.subr.bf16.mxu0 0
    %752 = vmatpush1.bf16.msra.mxu0 0
    %753 = vmatprep.subr.bf16.mxu0 0
    %754 = vmatpush1.bf16.msra.mxu0 0
    %755 = vmatprep.subr.bf16.mxu0 0
    %756 = vmatpush1.bf16.msra.mxu0 0
    %757 = vmatprep.subr.bf16.mxu0 0
    %758 = vmatpush1.bf16.msra.mxu0 0
    %759 = vmatprep.subr.bf16.mxu0 0
    %760 = vmatpush1.bf16.msra.mxu0 0
    %761 = vmatprep.subr.bf16.mxu0 0
    %762 = vmatpush1.bf16.msra.mxu0 0
    %763 = vmatprep.subr.bf16.mxu0 0
    %764 = vmatpush1.bf16.msra.mxu0 0
    %765 = vmatprep.subr.bf16.mxu0 0
    %766 = vmatpush1.bf16.msra.mxu0 0
    %767 = vmatprep.subr.bf16.mxu0 0
    %768 = vmatpush1.bf16.msra.mxu0 0
    %769 = vmatprep.mubr.bf16.mxu0 0
    %770 = vmatmul.mubr.bf16.gmra.mrb[0].mxu0 %v436
    %v771 = vpop.f32.mrb[0].mxu0
    %v772 = vadd.f32 %v240, %v771
    %v773 = vpop.f32.mrb[0].mxu0
    %v774 = vpop.f32.mrb[0].mxu0
    %v775 = vadd.f32 %v240, %v774
    %v776 = vpop.f32.mrb[0].mxu0
    %777 = vmatprep.mubr.bf16.mxu0 0
    %778 = vmatmul.mubr.bf16.gmra.mrb[0].mxu0 %v439
    %v779 = vpop.f32.mrb[0].mxu0
    %v780 = vadd.f32 %v240, %v779
    %v781 = vpop.f32.mrb[0].mxu0
    %v782 = vpop.f32.mrb[0].mxu0
    %v783 = vadd.f32 %v240, %v782
    %v784 = vpop.f32.mrb[0].mxu0
    %785 = vmatprep.mubr.bf16.mxu0 0
    %786 = vmatmul.mubr.bf16.gmra.mrb[0].mxu0 %v442
    %v787 = vpop.f32.mrb[0].mxu0
    %v788 = vadd.f32 %v240, %v787
    %v789 = vpop.f32.mrb[0].mxu0
    %v790 = vpop.f32.mrb[0].mxu0
    %v791 = vadd.f32 %v240, %v790
    %v792 = vpop.f32.mrb[0].mxu0
    %793 = vmatprep.mubr.bf16.mxu0 0
    %794 = vmatmul.mubr.bf16.gmra.mrb[0].mxu0 %v445
    %v795 = vpop.f32.mrb[0].mxu0
    %v796 = vadd.f32 %v240, %v795
    %v797 = vpop.f32.mrb[0].mxu0
    %v798 = vpop.f32.mrb[0].mxu0
    %v799 = vpop.f32.mrb[0].mxu0
    %800 = vdwg.mxu0
    %v801 = vld [vmem:[#allocation4] sm:$0xff]
    %v802 = vld [vmem:[#allocation4 + $0x8] sm:$0xff]
    %v803 = vld [vmem:[#allocation4 + $0x10] sm:$0xff]
    %v804 = vld [vmem:[#allocation4 + $0x18] sm:$0xff]
    %v805 = vld [vmem:[#allocation4 + $0x20] sm:$0xff]
    %v806 = vld [vmem:[#allocation4 + $0x28] sm:$0xff]
    %v807 = vld [vmem:[#allocation4 + $0x30] sm:$0xff]
    %v808 = vld [vmem:[#allocation4 + $0x38] sm:$0xff]
    %v809 = vld [vmem:[#allocation4 + $0x40] sm:$0xff]
    %v810 = vld [vmem:[#allocation4 + $0x48] sm:$0xff]
    %v811 = vld [vmem:[#allocation4 + $0x50] sm:$0xff]
    %v812 = vld [vmem:[#allocation4 + $0x58] sm:$0xff]
    %v813 = vld [vmem:[#allocation4 + $0x60] sm:$0xff]
    %v814 = vld [vmem:[#allocation4 + $0x68] sm:$0xff]
    %v815 = vld [vmem:[#allocation4 + $0x70] sm:$0xff]
    %v816 = vld [vmem:[#allocation4 + $0x78] sm:$0xff]
    %v817 = vld [vmem:[#allocation4 + $0x80] sm:$0xff]
    %v818 = vld [vmem:[#allocation4 + $0x88] sm:$0xff]
    %v819 = vld [vmem:[#allocation4 + $0x90] sm:$0xff]
    %v820 = vld [vmem:[#allocation4 + $0x98] sm:$0xff]
    %v821 = vld [vmem:[#allocation4 + $0xa0] sm:$0xff]
    %v822 = vld [vmem:[#allocation4 + $0xa8] sm:$0xff]
    %v823 = vld [vmem:[#allocation4 + $0xb0] sm:$0xff]
    %v824 = vld [vmem:[#allocation4 + $0xb8] sm:$0xff]
    %v825 = vld [vmem:[#allocation4 + $0xc0] sm:$0xff]
    %v826 = vld [vmem:[#allocation4 + $0xc8] sm:$0xff]
    %v827 = vld [vmem:[#allocation4 + $0xd0] sm:$0xff]
    %v828 = vld [vmem:[#allocation4 + $0xd8] sm:$0xff]
    %v829 = vld [vmem:[#allocation4 + $0xe0] sm:$0xff]
    %v830 = vld [vmem:[#allocation4 + $0xe8] sm:$0xff]
    %v831 = vld [vmem:[#allocation4 + $0xf0] sm:$0xff]
    %v832 = vld [vmem:[#allocation4 + $0xf8] sm:$0xff]
    %v833 = vld [vmem:[#allocation4 + $0x100] sm:$0xff]
    %v834 = vld [vmem:[#allocation4 + $0x108] sm:$0xff]
    %v835 = vld [vmem:[#allocation4 + $0x110] sm:$0xff]
    %v836 = vld [vmem:[#allocation4 + $0x118] sm:$0xff]
    %v837 = vld [vmem:[#allocation4 + $0x120] sm:$0xff]
    %v838 = vld [vmem:[#allocation4 + $0x128] sm:$0xff]
    %v839 = vld [vmem:[#allocation4 + $0x130] sm:$0xff]
    %v840 = vld [vmem:[#allocation4 + $0x138] sm:$0xff]
    %v841 = vld [vmem:[#allocation4 + $0x140] sm:$0xff]
    %v842 = vld [vmem:[#allocation4 + $0x148] sm:$0xff]
    %v843 = vld [vmem:[#allocation4 + $0x150] sm:$0xff]
    %v844 = vld [vmem:[#allocation4 + $0x158] sm:$0xff]
    %v845 = vld [vmem:[#allocation4 + $0x160] sm:$0xff]
    %v846 = vld [vmem:[#allocation4 + $0x168] sm:$0xff]
    %v847 = vld [vmem:[#allocation4 + $0x170] sm:$0xff]
    %v848 = vld [vmem:[#allocation4 + $0x178] sm:$0xff]
    %v849 = vld [vmem:[#allocation4 + $0x180] sm:$0xff]
    %v850 = vld [vmem:[#allocation4 + $0x188] sm:$0xff]
    %v851 = vld [vmem:[#allocation4 + $0x190] sm:$0xff]
    %v852 = vld [vmem:[#allocation4 + $0x198] sm:$0xff]
    %v853 = vld [vmem:[#allocation4 + $0x1a0] sm:$0xff]
    %v854 = vld [vmem:[#allocation4 + $0x1a8] sm:$0xff]
    %v855 = vld [vmem:[#allocation4 + $0x1b0] sm:$0xff]
    %v856 = vld [vmem:[#allocation4 + $0x1b8] sm:$0xff]
    %v857 = vld [vmem:[#allocation4 + $0x1c0] sm:$0xff]
    %v858 = vld [vmem:[#allocation4 + $0x1c8] sm:$0xff]
    %v859 = vld [vmem:[#allocation4 + $0x1d0] sm:$0xff]
    %v860 = vld [vmem:[#allocation4 + $0x1d8] sm:$0xff]
    %v861 = vld [vmem:[#allocation4 + $0x1e0] sm:$0xff]
    %v862 = vld [vmem:[#allocation4 + $0x1e8] sm:$0xff]
    %v863 = vld [vmem:[#allocation4 + $0x1f0] sm:$0xff]
    %v864 = vld [vmem:[#allocation4 + $0x1f8] sm:$0xff]
    %v865 = vld [vmem:[#allocation4 + $0x200] sm:$0xff]
    %v866 = vld [vmem:[#allocation4 + $0x208] sm:$0xff]
    %v867 = vld [vmem:[#allocation4 + $0x210] sm:$0xff]
    %v868 = vld [vmem:[#allocation4 + $0x218] sm:$0xff]
    %v869 = vld [vmem:[#allocation4 + $0x220] sm:$0xff]
    %v870 = vld [vmem:[#allocation4 + $0x228] sm:$0xff]
    %v871 = vld [vmem:[#allocation4 + $0x230] sm:$0xff]
    %v872 = vld [vmem:[#allocation4 + $0x238] sm:$0xff]
    %v873 = vld [vmem:[#allocation4 + $0x240] sm:$0xff]
    %v874 = vld [vmem:[#allocation4 + $0x248] sm:$0xff]
    %v875 = vld [vmem:[#allocation4 + $0x250] sm:$0xff]
    %v876 = vld [vmem:[#allocation4 + $0x258] sm:$0xff]
    %v877 = vld [vmem:[#allocation4 + $0x260] sm:$0xff]
    %v878 = vld [vmem:[#allocation4 + $0x268] sm:$0xff]
    %v879 = vld [vmem:[#allocation4 + $0x270] sm:$0xff]
    %v880 = vld [vmem:[#allocation4 + $0x278] sm:$0xff]
    %v881 = vld [vmem:[#allocation4 + $0x280] sm:$0xff]
    %v882 = vld [vmem:[#allocation4 + $0x288] sm:$0xff]
    %v883 = vld [vmem:[#allocation4 + $0x290] sm:$0xff]
    %v884 = vld [vmem:[#allocation4 + $0x298] sm:$0xff]
    %v885 = vld [vmem:[#allocation4 + $0x2a0] sm:$0xff]
    %v886 = vld [vmem:[#allocation4 + $0x2a8] sm:$0xff]
    %v887 = vld [vmem:[#allocation4 + $0x2b0] sm:$0xff]
    %v888 = vld [vmem:[#allocation4 + $0x2b8] sm:$0xff]
    %v889 = vld [vmem:[#allocation4 + $0x2c0] sm:$0xff]
    %v890 = vld [vmem:[#allocation4 + $0x2c8] sm:$0xff]
    %v891 = vld [vmem:[#allocation4 + $0x2d0] sm:$0xff]
    %v892 = vld [vmem:[#allocation4 + $0x2d8] sm:$0xff]
    %v893 = vld [vmem:[#allocation4 + $0x2e0] sm:$0xff]
    %v894 = vld [vmem:[#allocation4 + $0x2e8] sm:$0xff]
    %v895 = vld [vmem:[#allocation4 + $0x2f0] sm:$0xff]
    %v896 = vld [vmem:[#allocation4 + $0x2f8] sm:$0xff]
    %v897 = vld [vmem:[#allocation6] sm:$0xff]
    %v898 = vld [vmem:[#allocation6 + $0x8] sm:$0xf]
    %v899 = vld [vmem:[#allocation6 + $0xc] sm:$0xff]
    %v900 = vld [vmem:[#allocation6 + $0x14] sm:$0xf]
    %v901 = vld [vmem:[#allocation6 + $0x18] sm:$0xff]
    %v902 = vld [vmem:[#allocation6 + $0x20] sm:$0xf]
    %v903 = vld [vmem:[#allocation6 + $0x24] sm:$0xff]
    %v904 = vld [vmem:[#allocation6 + $0x2c] sm:$0xf]
    %v905 = vld [vmem:[#allocation6 + $0x30] sm:$0xff]
    %v906 = vld [vmem:[#allocation6 + $0x38] sm:$0xf]
    %v907 = vld [vmem:[#allocation6 + $0x3c] sm:$0xff]
    %v908 = vld [vmem:[#allocation6 + $0x44] sm:$0xf]
    %v909 = vld [vmem:[#allocation6 + $0x48] sm:$0xff]
    %v910 = vld [vmem:[#allocation6 + $0x50] sm:$0xf]
    %v911 = vld [vmem:[#allocation6 + $0x54] sm:$0xff]
    %v912 = vld [vmem:[#allocation6 + $0x5c] sm:$0xf]
    %v913 = vld [vmem:[#allocation6 + $0x60] sm:$0xff]
    %v914 = vld [vmem:[#allocation6 + $0x68] sm:$0xf]
    %v915 = vld [vmem:[#allocation6 + $0x6c] sm:$0xff]
    %v916 = vld [vmem:[#allocation6 + $0x74] sm:$0xf]
    %v917 = vld [vmem:[#allocation6 + $0x78] sm:$0xff]
    %v918 = vld [vmem:[#allocation6 + $0x80] sm:$0xf]
    %v919 = vld [vmem:[#allocation6 + $0x84] sm:$0xff]
    %v920 = vld [vmem:[#allocation6 + $0x8c] sm:$0xf]
    %v921 = vld [vmem:[#allocation6 + $0x90] sm:$0xff]
    %v922 = vld [vmem:[#allocation6 + $0x98] sm:$0xf]
    %v923 = vld [vmem:[#allocation6 + $0x9c] sm:$0xff]
    %v924 = vld [vmem:[#allocation6 + $0xa4] sm:$0xf]
    %v925 = vld [vmem:[#allocation6 + $0xa8] sm:$0xff]
    %v926 = vld [vmem:[#allocation6 + $0xb0] sm:$0xf]
    %v927 = vld [vmem:[#allocation6 + $0xb4] sm:$0xff]
    %v928 = vld [vmem:[#allocation6 + $0xbc] sm:$0xf]
    %s929 = scalar_lea.vmem %s4, 1
    %v930 = vld [vmem:[%s929] ss:$2 sm:$0x3]
    %v932 = vlaneseq
    %v933 = vshrl.u32 %v932, 7
    %v934 = vsub.s32 0, %v933
    %v935 = vrot.slane %v930, %v934
    %v936 = vlaneseq
    %v937 = vshrl.u32 %v936, 7
    %v938 = vsub.s32 1, %v937
    %v939 = vrot.slane %v930, %v938
    %v942 = vld [vmem:[%s4 + $0x5] sm:$0x1]
    %v943 = vlaneseq
    %v944 = vshrl.u32 %v943, 7
    %v945 = vsub.s32 0, %v944
    %v946 = vrot.slane %v942, %v945
    %v1043 = vunpack.c.l.b16 %v801
    %v1044 = vunpack.c.h.b16 %v801
    %v1045 = vunpack.c.l.b16 %v802
    %v1046 = vunpack.c.h.b16 %v802
    %v1047 = vunpack.c.l.b16 %v803
    %v1048 = vunpack.c.h.b16 %v803
    %v1049 = vunpack.c.l.b16 %v804
    %v1050 = vunpack.c.h.b16 %v804
    %v1051 = vunpack.c.l.b16 %v805
    %v1052 = vunpack.c.h.b16 %v805
    %v1053 = vunpack.c.l.b16 %v806
    %v1054 = vunpack.c.h.b16 %v806
    %v1055 = vunpack.c.l.b16 %v807
    %v1056 = vunpack.c.h.b16 %v807
    %v1057 = vunpack.c.l.b16 %v808
    %v1058 = vunpack.c.h.b16 %v808
    %v1059 = vunpack.c.l.b16 %v809
    %v1060 = vunpack.c.h.b16 %v809
    %v1061 = vunpack.c.l.b16 %v810
    %v1062 = vunpack.c.h.b16 %v810
    %v1063 = vunpack.c.l.b16 %v811
    %v1064 = vunpack.c.h.b16 %v811
    %v1065 = vunpack.c.l.b16 %v812
    %v1066 = vunpack.c.h.b16 %v812
    %v1067 = vunpack.c.l.b16 %v813
    %v1068 = vunpack.c.h.b16 %v813
    %v1069 = vunpack.c.l.b16 %v814
    %v1070 = vunpack.c.h.b16 %v814
    %v1071 = vunpack.c.l.b16 %v815
    %v1072 = vunpack.c.h.b16 %v815
    %v1073 = vunpack.c.l.b16 %v816
    %v1074 = vunpack.c.h.b16 %v816
    %v1075 = vunpack.c.l.b16 %v817
    %v1076 = vunpack.c.h.b16 %v817
    %v1077 = vunpack.c.l.b16 %v818
    %v1078 = vunpack.c.h.b16 %v818
    %v1079 = vunpack.c.l.b16 %v819
    %v1080 = vunpack.c.h.b16 %v819
    %v1081 = vunpack.c.l.b16 %v820
    %v1082 = vunpack.c.h.b16 %v820
    %v1083 = vunpack.c.l.b16 %v821
    %v1084 = vunpack.c.h.b16 %v821
    %v1085 = vunpack.c.l.b16 %v822
    %v1086 = vunpack.c.h.b16 %v822
    %v1087 = vunpack.c.l.b16 %v823
    %v1088 = vunpack.c.h.b16 %v823
    %v1089 = vunpack.c.l.b16 %v824
    %v1090 = vunpack.c.h.b16 %v824
    %v1091 = vunpack.c.l.b16 %v825
    %v1092 = vunpack.c.h.b16 %v825
    %v1093 = vunpack.c.l.b16 %v826
    %v1094 = vunpack.c.h.b16 %v826
    %v1095 = vunpack.c.l.b16 %v827
    %v1096 = vunpack.c.h.b16 %v827
    %v1097 = vunpack.c.l.b16 %v828
    %v1098 = vunpack.c.h.b16 %v828
    %v1099 = vunpack.c.l.b16 %v829
    %v1100 = vunpack.c.h.b16 %v829
    %v1101 = vunpack.c.l.b16 %v830
    %v1102 = vunpack.c.h.b16 %v830
    %v1103 = vunpack.c.l.b16 %v831
    %v1104 = vunpack.c.h.b16 %v831
    %v1105 = vunpack.c.l.b16 %v832
    %v1106 = vunpack.c.h.b16 %v832
    %v1107 = vunpack.c.l.b16 %v833
    %v1108 = vunpack.c.h.b16 %v833
    %v1109 = vunpack.c.l.b16 %v834
    %v1110 = vunpack.c.h.b16 %v834
    %v1111 = vunpack.c.l.b16 %v835
    %v1112 = vunpack.c.h.b16 %v835
    %v1113 = vunpack.c.l.b16 %v836
    %v1114 = vunpack.c.h.b16 %v836
    %v1115 = vunpack.c.l.b16 %v837
    %v1116 = vunpack.c.h.b16 %v837
    %v1117 = vunpack.c.l.b16 %v838
    %v1118 = vunpack.c.h.b16 %v838
    %v1119 = vunpack.c.l.b16 %v839
    %v1120 = vunpack.c.h.b16 %v839
    %v1121 = vunpack.c.l.b16 %v840
    %v1122 = vunpack.c.h.b16 %v840
    %v1123 = vunpack.c.l.b16 %v841
    %v1124 = vunpack.c.h.b16 %v841
    %v1125 = vunpack.c.l.b16 %v842
    %v1126 = vunpack.c.h.b16 %v842
    %v1127 = vunpack.c.l.b16 %v843
    %v1128 = vunpack.c.h.b16 %v843
    %v1129 = vunpack.c.l.b16 %v844
    %v1130 = vunpack.c.h.b16 %v844
    %v1131 = vunpack.c.l.b16 %v845
    %v1132 = vunpack.c.h.b16 %v845
    %v1133 = vunpack.c.l.b16 %v846
    %v1134 = vunpack.c.h.b16 %v846
    %v1135 = vunpack.c.l.b16 %v847
    %v1136 = vunpack.c.h.b16 %v847
    %v1137 = vunpack.c.l.b16 %v848
    %v1138 = vunpack.c.h.b16 %v848
    %v1139 = vunpack.c.l.b16 %v849
    %v1140 = vunpack.c.h.b16 %v849
    %v1141 = vunpack.c.l.b16 %v850
    %v1142 = vunpack.c.h.b16 %v850
    %v1143 = vunpack.c.l.b16 %v851
    %v1144 = vunpack.c.h.b16 %v851
    %v1145 = vunpack.c.l.b16 %v852
    %v1146 = vunpack.c.h.b16 %v852
    %v1147 = vunpack.c.l.b16 %v853
    %v1148 = vunpack.c.h.b16 %v853
    %v1149 = vunpack.c.l.b16 %v854
    %v1150 = vunpack.c.h.b16 %v854
    %v1151 = vunpack.c.l.b16 %v855
    %v1152 = vunpack.c.h.b16 %v855
    %v1153 = vunpack.c.l.b16 %v856
    %v1154 = vunpack.c.h.b16 %v856
    %v1155 = vunpack.c.l.b16 %v857
    %v1156 = vunpack.c.h.b16 %v857
    %v1157 = vunpack.c.l.b16 %v858
    %v1158 = vunpack.c.h.b16 %v858
    %v1159 = vunpack.c.l.b16 %v859
    %v1160 = vunpack.c.h.b16 %v859
    %v1161 = vunpack.c.l.b16 %v860
    %v1162 = vunpack.c.h.b16 %v860
    %v1163 = vunpack.c.l.b16 %v861
    %v1164 = vunpack.c.h.b16 %v861
    %v1165 = vunpack.c.l.b16 %v862
    %v1166 = vunpack.c.h.b16 %v862
    %v1167 = vunpack.c.l.b16 %v863
    %v1168 = vunpack.c.h.b16 %v863
    %v1169 = vunpack.c.l.b16 %v864
    %v1170 = vunpack.c.h.b16 %v864
    %v1171 = vunpack.c.l.b16 %v865
    %v1172 = vunpack.c.h.b16 %v865
    %v1173 = vunpack.c.l.b16 %v866
    %v1174 = vunpack.c.h.b16 %v866
    %v1175 = vunpack.c.l.b16 %v867
    %v1176 = vunpack.c.h.b16 %v867
    %v1177 = vunpack.c.l.b16 %v868
    %v1178 = vunpack.c.h.b16 %v868
    %v1179 = vunpack.c.l.b16 %v869
    %v1180 = vunpack.c.h.b16 %v869
    %v1181 = vunpack.c.l.b16 %v870
    %v1182 = vunpack.c.h.b16 %v870
    %v1183 = vunpack.c.l.b16 %v871
    %v1184 = vunpack.c.h.b16 %v871
    %v1185 = vunpack.c.l.b16 %v872
    %v1186 = vunpack.c.h.b16 %v872
    %v1187 = vunpack.c.l.b16 %v873
    %v1188 = vunpack.c.h.b16 %v873
    %v1189 = vunpack.c.l.b16 %v874
    %v1190 = vunpack.c.h.b16 %v874
    %v1191 = vunpack.c.l.b16 %v875
    %v1192 = vunpack.c.h.b16 %v875
    %v1193 = vunpack.c.l.b16 %v876
    %v1194 = vunpack.c.h.b16 %v876
    %v1195 = vunpack.c.l.b16 %v877
    %v1196 = vunpack.c.h.b16 %v877
    %v1197 = vunpack.c.l.b16 %v878
    %v1198 = vunpack.c.h.b16 %v878
    %v1199 = vunpack.c.l.b16 %v879
    %v1200 = vunpack.c.h.b16 %v879
    %v1201 = vunpack.c.l.b16 %v880
    %v1202 = vunpack.c.h.b16 %v880
    %v1203 = vunpack.c.l.b16 %v881
    %v1204 = vunpack.c.h.b16 %v881
    %v1205 = vunpack.c.l.b16 %v882
    %v1206 = vunpack.c.h.b16 %v882
    %v1207 = vunpack.c.l.b16 %v883
    %v1208 = vunpack.c.h.b16 %v883
    %v1209 = vunpack.c.l.b16 %v884
    %v1210 = vunpack.c.h.b16 %v884
    %v1211 = vunpack.c.l.b16 %v885
    %v1212 = vunpack.c.h.b16 %v885
    %v1213 = vunpack.c.l.b16 %v886
    %v1214 = vunpack.c.h.b16 %v886
    %v1215 = vunpack.c.l.b16 %v887
    %v1216 = vunpack.c.h.b16 %v887
    %v1217 = vunpack.c.l.b16 %v888
    %v1218 = vunpack.c.h.b16 %v888
    %v1219 = vunpack.c.l.b16 %v889
    %v1220 = vunpack.c.h.b16 %v889
    %v1221 = vunpack.c.l.b16 %v890
    %v1222 = vunpack.c.h.b16 %v890
    %v1223 = vunpack.c.l.b16 %v891
    %v1224 = vunpack.c.h.b16 %v891
    %v1225 = vunpack.c.l.b16 %v892
    %v1226 = vunpack.c.h.b16 %v892
    %v1227 = vunpack.c.l.b16 %v893
    %v1228 = vunpack.c.h.b16 %v893
    %v1229 = vunpack.c.l.b16 %v894
    %v1230 = vunpack.c.h.b16 %v894
    %v1231 = vunpack.c.l.b16 %v895
    %v1232 = vunpack.c.h.b16 %v895
    %v1233 = vunpack.c.l.b16 %v896
    %v1234 = vunpack.c.h.b16 %v896
    %v1235 = vpack.c.b16 %v1049, %v1043
    %v1236 = vpack.c.b16 %v1050, %v1044
    %v1237 = vpack.c.b16 %v1051, %v1045
    %v1238 = vpack.c.b16 %v1052, %v1046
    %v1239 = vpack.c.b16 %v1053, %v1047
    %v1240 = vpack.c.b16 %v1054, %v1048
    %v1241 = vpack.c.b16 %v1061, %v1055
    %v1242 = vpack.c.b16 %v1062, %v1056
    %v1243 = vpack.c.b16 %v1063, %v1057
    %v1244 = vpack.c.b16 %v1064, %v1058
    %v1245 = vpack.c.b16 %v1065, %v1059
    %v1246 = vpack.c.b16 %v1066, %v1060
    %v1247 = vpack.c.b16 %v1073, %v1067
    %v1248 = vpack.c.b16 %v1074, %v1068
    %v1249 = vpack.c.b16 %v1075, %v1069
    %v1250 = vpack.c.b16 %v1076, %v1070
    %v1251 = vpack.c.b16 %v1077, %v1071
    %v1252 = vpack.c.b16 %v1078, %v1072
    %v1253 = vpack.c.b16 %v1085, %v1079
    %v1254 = vpack.c.b16 %v1086, %v1080
    %v1255 = vpack.c.b16 %v1087, %v1081
    %v1256 = vpack.c.b16 %v1088, %v1082
    %v1257 = vpack.c.b16 %v1089, %v1083
    %v1258 = vpack.c.b16 %v1090, %v1084
    %v1259 = vpack.c.b16 %v1097, %v1091
    %v1260 = vpack.c.b16 %v1098, %v1092
    %v1261 = vpack.c.b16 %v1099, %v1093
    %v1262 = vpack.c.b16 %v1100, %v1094
    %v1263 = vpack.c.b16 %v1101, %v1095
    %v1264 = vpack.c.b16 %v1102, %v1096
    %v1265 = vpack.c.b16 %v1109, %v1103
    %v1266 = vpack.c.b16 %v1110, %v1104
    %v1267 = vpack.c.b16 %v1111, %v1105
    %v1268 = vpack.c.b16 %v1112, %v1106
    %v1269 = vpack.c.b16 %v1113, %v1107
    %v1270 = vpack.c.b16 %v1114, %v1108
    %v1271 = vpack.c.b16 %v1121, %v1115
    %v1272 = vpack.c.b16 %v1122, %v1116
    %v1273 = vpack.c.b16 %v1123, %v1117
    %v1274 = vpack.c.b16 %v1124, %v1118
    %v1275 = vpack.c.b16 %v1125, %v1119
    %v1276 = vpack.c.b16 %v1126, %v1120
    %v1277 = vpack.c.b16 %v1133, %v1127
    %v1278 = vpack.c.b16 %v1134, %v1128
    %v1279 = vpack.c.b16 %v1135, %v1129
    %v1280 = vpack.c.b16 %v1136, %v1130
    %v1281 = vpack.c.b16 %v1137, %v1131
    %v1282 = vpack.c.b16 %v1138, %v1132
    %v1283 = vpack.c.b16 %v1145, %v1139
    %v1284 = vpack.c.b16 %v1146, %v1140
    %v1285 = vpack.c.b16 %v1147, %v1141
    %v1286 = vpack.c.b16 %v1148, %v1142
    %v1287 = vpack.c.b16 %v1149, %v1143
    %v1288 = vpack.c.b16 %v1150, %v1144
    %v1289 = vpack.c.b16 %v1157, %v1151
    %v1290 = vpack.c.b16 %v1158, %v1152
    %v1291 = vpack.c.b16 %v1159, %v1153
    %v1292 = vpack.c.b16 %v1160, %v1154
    %v1293 = vpack.c.b16 %v1161, %v1155
    %v1294 = vpack.c.b16 %v1162, %v1156
    %v1295 = vpack.c.b16 %v1169, %v1163
    %v1296 = vpack.c.b16 %v1170, %v1164
    %v1297 = vpack.c.b16 %v1171, %v1165
    %v1298 = vpack.c.b16 %v1172, %v1166
    %v1299 = vpack.c.b16 %v1173, %v1167
    %v1300 = vpack.c.b16 %v1174, %v1168
    %v1301 = vpack.c.b16 %v1181, %v1175
    %v1302 = vpack.c.b16 %v1182, %v1176
    %v1303 = vpack.c.b16 %v1183, %v1177
    %v1304 = vpack.c.b16 %v1184, %v1178
    %v1305 = vpack.c.b16 %v1185, %v1179
    %v1306 = vpack.c.b16 %v1186, %v1180
    %v1307 = vpack.c.b16 %v1193, %v1187
    %v1308 = vpack.c.b16 %v1194, %v1188
    %v1309 = vpack.c.b16 %v1195, %v1189
    %v1310 = vpack.c.b16 %v1196, %v1190
    %v1311 = vpack.c.b16 %v1197, %v1191
    %v1312 = vpack.c.b16 %v1198, %v1192
    %v1313 = vpack.c.b16 %v1205, %v1199
    %v1314 = vpack.c.b16 %v1206, %v1200
    %v1315 = vpack.c.b16 %v1207, %v1201
    %v1316 = vpack.c.b16 %v1208, %v1202
    %v1317 = vpack.c.b16 %v1209, %v1203
    %v1318 = vpack.c.b16 %v1210, %v1204
    %v1319 = vpack.c.b16 %v1217, %v1211
    %v1320 = vpack.c.b16 %v1218, %v1212
    %v1321 = vpack.c.b16 %v1219, %v1213
    %v1322 = vpack.c.b16 %v1220, %v1214
    %v1323 = vpack.c.b16 %v1221, %v1215
    %v1324 = vpack.c.b16 %v1222, %v1216
    %v1325 = vpack.c.b16 %v1229, %v1223
    %v1326 = vpack.c.b16 %v1230, %v1224
    %v1327 = vpack.c.b16 %v1231, %v1225
    %v1328 = vpack.c.b16 %v1232, %v1226
    %v1329 = vpack.c.b16 %v1233, %v1227
    %v1330 = vpack.c.b16 %v1234, %v1228
    %1427 = vmatprep.subr.bf16.mxu0 %v1236
    %1428 = vmatpush1.bf16.msra.mxu0 %v1235
    %1429 = vmatprep.subr.bf16.mxu0 %v1242
    %1430 = vmatpush1.bf16.msra.mxu0 %v1241
    %1431 = vmatprep.subr.bf16.mxu0 %v1248
    %1432 = vmatpush1.bf16.msra.mxu0 %v1247
    %1433 = vmatprep.subr.bf16.mxu0 %v1254
    %1434 = vmatpush1.bf16.msra.mxu0 %v1253
    %1435 = vmatprep.subr.bf16.mxu0 %v1260
    %1436 = vmatpush1.bf16.msra.mxu0 %v1259
    %1437 = vmatprep.subr.bf16.mxu0 %v1266
    %1438 = vmatpush1.bf16.msra.mxu0 %v1265
    %1439 = vmatprep.subr.bf16.mxu0 %v1272
    %1440 = vmatpush1.bf16.msra.mxu0 %v1271
    %1441 = vmatprep.subr.bf16.mxu0 %v1278
    %1442 = vmatpush1.bf16.msra.mxu0 %v1277
    %1443 = vmatprep.subr.bf16.mxu0 %v1284
    %1444 = vmatpush1.bf16.msra.mxu0 %v1283
    %1445 = vmatprep.subr.bf16.mxu0 %v1290
    %1446 = vmatpush1.bf16.msra.mxu0 %v1289
    %1447 = vmatprep.subr.bf16.mxu0 %v1296
    %1448 = vmatpush1.bf16.msra.mxu0 %v1295
    %1449 = vmatprep.subr.bf16.mxu0 %v1302
    %1450 = vmatpush1.bf16.msra.mxu0 %v1301
    %1451 = vmatprep.subr.bf16.mxu0 %v1308
    %1452 = vmatpush1.bf16.msra.mxu0 %v1307
    %1453 = vmatprep.subr.bf16.mxu0 %v1314
    %1454 = vmatpush1.bf16.msra.mxu0 %v1313
    %1455 = vmatprep.subr.bf16.mxu0 %v1320
    %1456 = vmatpush1.bf16.msra.mxu0 %v1319
    %1457 = vmatprep.subr.bf16.mxu0 %v1326
    %1458 = vmatpush1.bf16.msra.mxu0 %v1325
    %1459 = vmatprep.mubr.bf16.mxu0 0
    %1460 = vmatmul.mubr.bf16.gmra.mrb[0].mxu0 0
    %v1461 = vpop.f32.mrb[0].mxu0
    %v1462 = vadd.f32 0.0, %v1461
    %v1463 = vpop.f32.mrb[0].mxu0
    %v1464 = vadd.f32 0.0, %v1463
    %v1465 = vpop.f32.mrb[0].mxu0
    %v1466 = vpop.f32.mrb[0].mxu0
    %1467 = vdwg.mxu0
    %1468 = vmatprep.subr.bf16.mxu0 %v1238
    %1469 = vmatpush1.bf16.msra.mxu0 %v1237
    %1470 = vmatprep.subr.bf16.mxu0 %v1244
    %1471 = vmatpush1.bf16.msra.mxu0 %v1243
    %1472 = vmatprep.subr.bf16.mxu0 %v1250
    %1473 = vmatpush1.bf16.msra.mxu0 %v1249
    %1474 = vmatprep.subr.bf16.mxu0 %v1256
    %1475 = vmatpush1.bf16.msra.mxu0 %v1255
    %1476 = vmatprep.subr.bf16.mxu0 %v1262
    %1477 = vmatpush1.bf16.msra.mxu0 %v1261
    %1478 = vmatprep.subr.bf16.mxu0 %v1268
    %1479 = vmatpush1.bf16.msra.mxu0 %v1267
    %1480 = vmatprep.subr.bf16.mxu0 %v1274
    %1481 = vmatpush1.bf16.msra.mxu0 %v1273
    %1482 = vmatprep.subr.bf16.mxu0 %v1280
    %1483 = vmatpush1.bf16.msra.mxu0 %v1279
    %1484 = vmatprep.subr.bf16.mxu0 %v1286
    %1485 = vmatpush1.bf16.msra.mxu0 %v1285
    %1486 = vmatprep.subr.bf16.mxu0 %v1292
    %1487 = vmatpush1.bf16.msra.mxu0 %v1291
    %1488 = vmatprep.subr.bf16.mxu0 %v1298
    %1489 = vmatpush1.bf16.msra.mxu0 %v1297
    %1490 = vmatprep.subr.bf16.mxu0 %v1304
    %1491 = vmatpush1.bf16.msra.mxu0 %v1303
    %1492 = vmatprep.subr.bf16.mxu0 %v1310
    %1493 = vmatpush1.bf16.msra.mxu0 %v1309
    %1494 = vmatprep.subr.bf16.mxu0 %v1316
    %1495 = vmatpush1.bf16.msra.mxu0 %v1315
    %1496 = vmatprep.subr.bf16.mxu0 %v1322
    %1497 = vmatpush1.bf16.msra.mxu0 %v1321
    %1498 = vmatprep.subr.bf16.mxu0 %v1328
    %1499 = vmatpush1.bf16.msra.mxu0 %v1327
    %1500 = vmatprep.mubr.bf16.mxu0 0
    %1501 = vmatmul.mubr.bf16.gmra.mrb[0].mxu0 0
    %v1502 = vpop.f32.mrb[0].mxu0
    %v1503 = vadd.f32 0.0, %v1502
    %v1504 = vpop.f32.mrb[0].mxu0
    %v1505 = vadd.f32 0.0, %v1504
    %v1506 = vpop.f32.mrb[0].mxu0
    %v1507 = vpop.f32.mrb[0].mxu0
    %1508 = vdwg.mxu0
    %1509 = vmatprep.subr.bf16.mxu0 %v1240
    %1510 = vmatpush1.bf16.msra.mxu0 %v1239
    %1511 = vmatprep.subr.bf16.mxu0 %v1246
    %1512 = vmatpush1.bf16.msra.mxu0 %v1245
    %1513 = vmatprep.subr.bf16.mxu0 %v1252
    %1514 = vmatpush1.bf16.msra.mxu0 %v1251
    %1515 = vmatprep.subr.bf16.mxu0 %v1258
    %1516 = vmatpush1.bf16.msra.mxu0 %v1257
    %1517 = vmatprep.subr.bf16.mxu0 %v1264
    %1518 = vmatpush1.bf16.msra.mxu0 %v1263
    %1519 = vmatprep.subr.bf16.mxu0 %v1270
    %1520 = vmatpush1.bf16.msra.mxu0 %v1269
    %1521 = vmatprep.subr.bf16.mxu0 %v1276
    %1522 = vmatpush1.bf16.msra.mxu0 %v1275
    %1523 = vmatprep.subr.bf16.mxu0 %v1282
    %1524 = vmatpush1.bf16.msra.mxu0 %v1281
    %1525 = vmatprep.subr.bf16.mxu0 %v1288
    %1526 = vmatpush1.bf16.msra.mxu0 %v1287
    %1527 = vmatprep.subr.bf16.mxu0 %v1294
    %1528 = vmatpush1.bf16.msra.mxu0 %v1293
    %1529 = vmatprep.subr.bf16.mxu0 %v1300
    %1530 = vmatpush1.bf16.msra.mxu0 %v1299
    %1531 = vmatprep.subr.bf16.mxu0 %v1306
    %1532 = vmatpush1.bf16.msra.mxu0 %v1305
    %1533 = vmatprep.subr.bf16.mxu0 %v1312
    %1534 = vmatpush1.bf16.msra.mxu0 %v1311
    %1535 = vmatprep.subr.bf16.mxu0 %v1318
    %1536 = vmatpush1.bf16.msra.mxu0 %v1317
    %1537 = vmatprep.subr.bf16.mxu0 %v1324
    %1538 = vmatpush1.bf16.msra.mxu0 %v1323
    %1539 = vmatprep.subr.bf16.mxu0 %v1330
    %1540 = vmatpush1.bf16.msra.mxu0 %v1329
    %1541 = vmatprep.mubr.bf16.mxu0 0
    %1542 = vmatmul.mubr.bf16.gmra.mrb[0].mxu0 0
    %v1543 = vpop.f32.mrb[0].mxu0
    %v1544 = vadd.f32 0.0, %v1543
    %v1545 = vpop.f32.mrb[0].mxu0
    %v1546 = vadd.f32 0.0, %v1545
    %v1547 = vpop.f32.mrb[0].mxu0
    %v1548 = vpop.f32.mrb[0].mxu0
    %1549 = vdwg.mxu0
    %v1550 = vadd.f32 %v482, %v1462
    %v1551 = vadd.f32 %v484, %v1464
    %v1552 = vxor.u32 %v1550, 2147483648
    %v1553 = vxor.u32 %v1551, 2147483648
    %v1554 = vmul.f32 %v1552, 1.442695
    %v1555 = vpow.pop %v1554
    %v1556 = vmul.f32 %v1553, 1.442695
    %v1557 = vpow.pop %v1556
    %v1558 = vadd.f32 %v1555, 1.0
    %v1559 = vadd.f32 %v1557, 1.0
    %v1560 = vrcp.pop %v1558
    %v1561 = vmul.f32 1.0, %v1560
    %v1562 = vrcp.pop %v1559
    %v1563 = vmul.f32 1.0, %v1562
    %v1564 = vadd.f32 %v555, %v1503
    %v1565 = vadd.f32 %v557, %v1505
    %v1566 = vxor.u32 %v1564, 2147483648
    %v1567 = vxor.u32 %v1565, 2147483648
    %v1568 = vmul.f32 %v1566, 1.442695
    %v1569 = vpow.pop %v1568
    %v1570 = vmul.f32 %v1567, 1.442695
    %v1571 = vpow.pop %v1570
    %v1572 = vadd.f32 %v1569, 1.0
    %v1573 = vadd.f32 %v1571, 1.0
    %v1574 = vrcp.pop %v1572
    %v1575 = vmul.f32 1.0, %v1574
    %v1576 = vrcp.pop %v1573
    %v1577 = vmul.f32 1.0, %v1576
    %v1578 = vadd.f32 %v1544, %v935
    %v1579 = vadd.f32 %v1546, %v939
    %v1580 = vmul.f32 %v1561, %v1578
    %v1581 = vmul.f32 %v1563, %v1579
    %v1582 = vadd.f32 %v628, %v1580
    %v1583 = vadd.f32 %v630, %v1581
    %v1584 = vtanh.pop %v1582
    %v1585 = vtanh.pop %v1583
    %v1586 = vsub.f32 1.0, %v1575
    %v1587 = vsub.f32 1.0, %v1577
    %v1588 = vmul.f32 %v1586, %v1584
    %v1589 = vmul.f32 %v1587, %v1585
    %v1590 = vmul.f32 %v1575, 0.0
    %v1591 = vmul.f32 %v1577, 0.0
    %v1592 = vadd.f32 %v1588, %v1590
    %v1593 = vadd.f32 %v1589, %v1591
    %v1594 = vpack.c.bf16 %v1592, %v1592
    %v1595 = vpack.c.bf16 %v1593, %v1593
    %1596 = vmatprep.subr.bf16.mxu0 %v1236
    %1597 = vmatpush1.bf16.msra.mxu0 %v1235
    %1598 = vmatprep.subr.bf16.mxu0 %v1242
    %1599 = vmatpush1.bf16.msra.mxu0 %v1241
    %1600 = vmatprep.subr.bf16.mxu0 %v1248
    %1601 = vmatpush1.bf16.msra.mxu0 %v1247
    %1602 = vmatprep.subr.bf16.mxu0 %v1254
    %1603 = vmatpush1.bf16.msra.mxu0 %v1253
    %1604 = vmatprep.subr.bf16.mxu0 %v1260
    %1605 = vmatpush1.bf16.msra.mxu0 %v1259
    %1606 = vmatprep.subr.bf16.mxu0 %v1266
    %1607 = vmatpush1.bf16.msra.mxu0 %v1265
    %1608 = vmatprep.subr.bf16.mxu0 %v1272
    %1609 = vmatpush1.bf16.msra.mxu0 %v1271
    %1610 = vmatprep.subr.bf16.mxu0 %v1278
    %1611 = vmatpush1.bf16.msra.mxu0 %v1277
    %1612 = vmatprep.subr.bf16.mxu0 %v1284
    %1613 = vmatpush1.bf16.msra.mxu0 %v1283
    %1614 = vmatprep.subr.bf16.mxu0 %v1290
    %1615 = vmatpush1.bf16.msra.mxu0 %v1289
    %1616 = vmatprep.subr.bf16.mxu0 %v1296
    %1617 = vmatpush1.bf16.msra.mxu0 %v1295
    %1618 = vmatprep.subr.bf16.mxu0 %v1302
    %1619 = vmatpush1.bf16.msra.mxu0 %v1301
    %1620 = vmatprep.subr.bf16.mxu0 %v1308
    %1621 = vmatpush1.bf16.msra.mxu0 %v1307
    %1622 = vmatprep.subr.bf16.mxu0 %v1314
    %1623 = vmatpush1.bf16.msra.mxu0 %v1313
    %1624 = vmatprep.subr.bf16.mxu0 %v1320
    %1625 = vmatpush1.bf16.msra.mxu0 %v1319
    %1626 = vmatprep.subr.bf16.mxu0 %v1326
    %1627 = vmatpush1.bf16.msra.mxu0 %v1325
    %1628 = vmatprep.mubr.bf16.mxu0 %v1595
    %1629 = vmatmul.mubr.bf16.gmra.mrb[0].mxu0 %v1594
    %v1630 = vpop.f32.mrb[0].mxu0
    %v1631 = vadd.f32 0.0, %v1630
    %v1632 = vpop.f32.mrb[0].mxu0
    %v1633 = vadd.f32 0.0, %v1632
    %v1634 = vpop.f32.mrb[0].mxu0
    %v1635 = vpop.f32.mrb[0].mxu0
    %1636 = vdwg.mxu0
    %1637 = vmatprep.subr.bf16.mxu0 %v1238
    %1638 = vmatpush1.bf16.msra.mxu0 %v1237
    %1639 = vmatprep.subr.bf16.mxu0 %v1244
    %1640 = vmatpush1.bf16.msra.mxu0 %v1243
    %1641 = vmatprep.subr.bf16.mxu0 %v1250
    %1642 = vmatpush1.bf16.msra.mxu0 %v1249
    %1643 = vmatprep.subr.bf16.mxu0 %v1256
    %1644 = vmatpush1.bf16.msra.mxu0 %v1255
    %1645 = vmatprep.subr.bf16.mxu0 %v1262
    %1646 = vmatpush1.bf16.msra.mxu0 %v1261
    %1647 = vmatprep.subr.bf16.mxu0 %v1268
    %1648 = vmatpush1.bf16.msra.mxu0 %v1267
    %1649 = vmatprep.subr.bf16.mxu0 %v1274
    %1650 = vmatpush1.bf16.msra.mxu0 %v1273
    %1651 = vmatprep.subr.bf16.mxu0 %v1280
    %1652 = vmatpush1.bf16.msra.mxu0 %v1279
    %1653 = vmatprep.subr.bf16.mxu0 %v1286
    %1654 = vmatpush1.bf16.msra.mxu0 %v1285
    %1655 = vmatprep.subr.bf16.mxu0 %v1292
    %1656 = vmatpush1.bf16.msra.mxu0 %v1291
    %1657 = vmatprep.subr.bf16.mxu0 %v1298
    %1658 = vmatpush1.bf16.msra.mxu0 %v1297
    %1659 = vmatprep.subr.bf16.mxu0 %v1304
    %1660 = vmatpush1.bf16.msra.mxu0 %v1303
    %1661 = vmatprep.subr.bf16.mxu0 %v1310
    %1662 = vmatpush1.bf16.msra.mxu0 %v1309
    %1663 = vmatprep.subr.bf16.mxu0 %v1316
    %1664 = vmatpush1.bf16.msra.mxu0 %v1315
    %1665 = vmatprep.subr.bf16.mxu0 %v1322
    %1666 = vmatpush1.bf16.msra.mxu0 %v1321
    %1667 = vmatprep.subr.bf16.mxu0 %v1328
    %1668 = vmatpush1.bf16.msra.mxu0 %v1327
    %1669 = vmatprep.mubr.bf16.mxu0 %v1595
    %1670 = vmatmul.mubr.bf16.gmra.mrb[0].mxu0 %v1594
    %v1671 = vpop.f32.mrb[0].mxu0
    %v1672 = vadd.f32 0.0, %v1671
    %v1673 = vpop.f32.mrb[0].mxu0
    %v1674 = vadd.f32 0.0, %v1673
    %v1675 = vpop.f32.mrb[0].mxu0
    %v1676 = vpop.f32.mrb[0].mxu0
    %1677 = vdwg.mxu0
    %1678 = vmatprep.subr.bf16.mxu0 %v1240
    %1679 = vmatpush1.bf16.msra.mxu0 %v1239
    %1680 = vmatprep.subr.bf16.mxu0 %v1246
    %1681 = vmatpush1.bf16.msra.mxu0 %v1245
    %1682 = vmatprep.subr.bf16.mxu0 %v1252
    %1683 = vmatpush1.bf16.msra.mxu0 %v1251
    %1684 = vmatprep.subr.bf16.mxu0 %v1258
    %1685 = vmatpush1.bf16.msra.mxu0 %v1257
    %1686 = vmatprep.subr.bf16.mxu0 %v1264
    %1687 = vmatpush1.bf16.msra.mxu0 %v1263
    %1688 = vmatprep.subr.bf16.mxu0 %v1270
    %1689 = vmatpush1.bf16.msra.mxu0 %v1269
    %1690 = vmatprep.subr.bf16.mxu0 %v1276
    %1691 = vmatpush1.bf16.msra.mxu0 %v1275
    %1692 = vmatprep.subr.bf16.mxu0 %v1282
    %1693 = vmatpush1.bf16.msra.mxu0 %v1281
    %1694 = vmatprep.subr.bf16.mxu0 %v1288
    %1695 = vmatpush1.bf16.msra.mxu0 %v1287
    %1696 = vmatprep.subr.bf16.mxu0 %v1294
    %1697 = vmatpush1.bf16.msra.mxu0 %v1293
    %1698 = vmatprep.subr.bf16.mxu0 %v1300
    %1699 = vmatpush1.bf16.msra.mxu0 %v1299
    %1700 = vmatprep.subr.bf16.mxu0 %v1306
    %1701 = vmatpush1.bf16.msra.mxu0 %v1305
    %1702 = vmatprep.subr.bf16.mxu0 %v1312
    %1703 = vmatpush1.bf16.msra.mxu0 %v1311
    %1704 = vmatprep.subr.bf16.mxu0 %v1318
    %1705 = vmatpush1.bf16.msra.mxu0 %v1317
    %1706 = vmatprep.subr.bf16.mxu0 %v1324
    %1707 = vmatpush1.bf16.msra.mxu0 %v1323
    %1708 = vmatprep.subr.bf16.mxu0 %v1330
    %1709 = vmatpush1.bf16.msra.mxu0 %v1329
    %1710 = vmatprep.mubr.bf16.mxu0 %v1595
    %1711 = vmatmul.mubr.bf16.gmra.mrb[0].mxu0 %v1594
    %v1712 = vpop.f32.mrb[0].mxu0
    %v1713 = vadd.f32 0.0, %v1712
    %v1714 = vpop.f32.mrb[0].mxu0
    %v1715 = vadd.f32 0.0, %v1714
    %v1716 = vpop.f32.mrb[0].mxu0
    %v1717 = vpop.f32.mrb[0].mxu0
    %1718 = vdwg.mxu0
    %v1719 = vadd.f32 %v486, %v1631
    %v1720 = vadd.f32 %v488, %v1633
    %v1721 = vxor.u32 %v1719, 2147483648
    %v1722 = vxor.u32 %v1720, 2147483648
    %v1723 = vmul.f32 %v1721, 1.442695
    %v1724 = vpow.pop %v1723
    %v1725 = vmul.f32 %v1722, 1.442695
    %v1726 = vpow.pop %v1725
    %v1727 = vadd.f32 %v1724, 1.0
    %v1728 = vadd.f32 %v1726, 1.0
    %v1729 = vrcp.pop %v1727
    %v1730 = vmul.f32 1.0, %v1729
    %v1731 = vrcp.pop %v1728
    %v1732 = vmul.f32 1.0, %v1731
    %v1733 = vadd.f32 %v559, %v1672
    %v1734 = vadd.f32 %v561, %v1674
    %v1735 = vxor.u32 %v1733, 2147483648
    %v1736 = vxor.u32 %v1734, 2147483648
    %v1737 = vmul.f32 %v1735, 1.442695
    %v1738 = vpow.pop %v1737
    %v1739 = vmul.f32 %v1736, 1.442695
    %v1740 = vpow.pop %v1739
    %v1741 = vadd.f32 %v1738, 1.0
    %v1742 = vadd.f32 %v1740, 1.0
    %v1743 = vrcp.pop %v1741
    %v1744 = vmul.f32 1.0, %v1743
    %v1745 = vrcp.pop %v1742
    %v1746 = vmul.f32 1.0, %v1745
    %v1747 = vadd.f32 %v1713, %v935
    %v1748 = vadd.f32 %v1715, %v939
    %v1749 = vmul.f32 %v1730, %v1747
    %v1750 = vmul.f32 %v1732, %v1748
    %v1751 = vadd.f32 %v632, %v1749
    %v1752 = vadd.f32 %v634, %v1750
    %v1753 = vtanh.pop %v1751
    %v1754 = vtanh.pop %v1752
    %v1755 = vsub.f32 1.0, %v1744
    %v1756 = vsub.f32 1.0, %v1746
    %v1757 = vmul.f32 %v1755, %v1753
    %v1758 = vmul.f32 %v1756, %v1754
    %v1759 = vmul.f32 %v1744, %v1592
    %v1760 = vmul.f32 %v1746, %v1593
    %v1761 = vadd.f32 %v1757, %v1759
    %v1762 = vadd.f32 %v1758, %v1760
    %v1763 = vpack.c.bf16 %v1761, %v1761
    %v1764 = vpack.c.bf16 %v1762, %v1762
    %1765 = vmatprep.subr.bf16.mxu0 %v1236
    %1766 = vmatpush1.bf16.msra.mxu0 %v1235
    %1767 = vmatprep.subr.bf16.mxu0 %v1242
    %1768 = vmatpush1.bf16.msra.mxu0 %v1241
    %1769 = vmatprep.subr.bf16.mxu0 %v1248
    %1770 = vmatpush1.bf16.msra.mxu0 %v1247
    %1771 = vmatprep.subr.bf16.mxu0 %v1254
    %1772 = vmatpush1.bf16.msra.mxu0 %v1253
    %1773 = vmatprep.subr.bf16.mxu0 %v1260
    %1774 = vmatpush1.bf16.msra.mxu0 %v1259
    %1775 = vmatprep.subr.bf16.mxu0 %v1266
    %1776 = vmatpush1.bf16.msra.mxu0 %v1265
    %1777 = vmatprep.subr.bf16.mxu0 %v1272
    %1778 = vmatpush1.bf16.msra.mxu0 %v1271
    %1779 = vmatprep.subr.bf16.mxu0 %v1278
    %1780 = vmatpush1.bf16.msra.mxu0 %v1277
    %1781 = vmatprep.subr.bf16.mxu0 %v1284
    %1782 = vmatpush1.bf16.msra.mxu0 %v1283
    %1783 = vmatprep.subr.bf16.mxu0 %v1290
    %1784 = vmatpush1.bf16.msra.mxu0 %v1289
    %1785 = vmatprep.subr.bf16.mxu0 %v1296
    %1786 = vmatpush1.bf16.msra.mxu0 %v1295
    %1787 = vmatprep.subr.bf16.mxu0 %v1302
    %1788 = vmatpush1.bf16.msra.mxu0 %v1301
    %1789 = vmatprep.subr.bf16.mxu0 %v1308
    %1790 = vmatpush1.bf16.msra.mxu0 %v1307
    %1791 = vmatprep.subr.bf16.mxu0 %v1314
    %1792 = vmatpush1.bf16.msra.mxu0 %v1313
    %1793 = vmatprep.subr.bf16.mxu0 %v1320
    %1794 = vmatpush1.bf16.msra.mxu0 %v1319
    %1795 = vmatprep.subr.bf16.mxu0 %v1326
    %1796 = vmatpush1.bf16.msra.mxu0 %v1325
    %1797 = vmatprep.mubr.bf16.mxu0 %v1764
    %1798 = vmatmul.mubr.bf16.gmra.mrb[0].mxu0 %v1763
    %v1799 = vpop.f32.mrb[0].mxu0
    %v1800 = vadd.f32 0.0, %v1799
    %v1801 = vpop.f32.mrb[0].mxu0
    %v1802 = vadd.f32 0.0, %v1801
    %v1803 = vpop.f32.mrb[0].mxu0
    %v1804 = vpop.f32.mrb[0].mxu0
    %1805 = vdwg.mxu0
    %1806 = vmatprep.subr.bf16.mxu0 %v1238
    %1807 = vmatpush1.bf16.msra.mxu0 %v1237
    %1808 = vmatprep.subr.bf16.mxu0 %v1244
    %1809 = vmatpush1.bf16.msra.mxu0 %v1243
    %1810 = vmatprep.subr.bf16.mxu0 %v1250
    %1811 = vmatpush1.bf16.msra.mxu0 %v1249
    %1812 = vmatprep.subr.bf16.mxu0 %v1256
    %1813 = vmatpush1.bf16.msra.mxu0 %v1255
    %1814 = vmatprep.subr.bf16.mxu0 %v1262
    %1815 = vmatpush1.bf16.msra.mxu0 %v1261
    %1816 = vmatprep.subr.bf16.mxu0 %v1268
    %1817 = vmatpush1.bf16.msra.mxu0 %v1267
    %1818 = vmatprep.subr.bf16.mxu0 %v1274
    %1819 = vmatpush1.bf16.msra.mxu0 %v1273
    %1820 = vmatprep.subr.bf16.mxu0 %v1280
    %1821 = vmatpush1.bf16.msra.mxu0 %v1279
    %1822 = vmatprep.subr.bf16.mxu0 %v1286
    %1823 = vmatpush1.bf16.msra.mxu0 %v1285
    %1824 = vmatprep.subr.bf16.mxu0 %v1292
    %1825 = vmatpush1.bf16.msra.mxu0 %v1291
    %1826 = vmatprep.subr.bf16.mxu0 %v1298
    %1827 = vmatpush1.bf16.msra.mxu0 %v1297
    %1828 = vmatprep.subr.bf16.mxu0 %v1304
    %1829 = vmatpush1.bf16.msra.mxu0 %v1303
    %1830 = vmatprep.subr.bf16.mxu0 %v1310
    %1831 = vmatpush1.bf16.msra.mxu0 %v1309
    %1832 = vmatprep.subr.bf16.mxu0 %v1316
    %1833 = vmatpush1.bf16.msra.mxu0 %v1315
    %1834 = vmatprep.subr.bf16.mxu0 %v1322
    %1835 = vmatpush1.bf16.msra.mxu0 %v1321
    %1836 = vmatprep.subr.bf16.mxu0 %v1328
    %1837 = vmatpush1.bf16.msra.mxu0 %v1327
    %1838 = vmatprep.mubr.bf16.mxu0 %v1764
    %1839 = vmatmul.mubr.bf16.gmra.mrb[0].mxu0 %v1763
    %v1840 = vpop.f32.mrb[0].mxu0
    %v1841 = vadd.f32 0.0, %v1840
    %v1842 = vpop.f32.mrb[0].mxu0
    %v1843 = vadd.f32 0.0, %v1842
    %v1844 = vpop.f32.mrb[0].mxu0
    %v1845 = vpop.f32.mrb[0].mxu0
    %1846 = vdwg.mxu0
    %1847 = vmatprep.subr.bf16.mxu0 %v1240
    %1848 = vmatpush1.bf16.msra.mxu0 %v1239
    %1849 = vmatprep.subr.bf16.mxu0 %v1246
    %1850 = vmatpush1.bf16.msra.mxu0 %v1245
    %1851 = vmatprep.subr.bf16.mxu0 %v1252
    %1852 = vmatpush1.bf16.msra.mxu0 %v1251
    %1853 = vmatprep.subr.bf16.mxu0 %v1258
    %1854 = vmatpush1.bf16.msra.mxu0 %v1257
    %1855 = vmatprep.subr.bf16.mxu0 %v1264
    %1856 = vmatpush1.bf16.msra.mxu0 %v1263
    %1857 = vmatprep.subr.bf16.mxu0 %v1270
    %1858 = vmatpush1.bf16.msra.mxu0 %v1269
    %1859 = vmatprep.subr.bf16.mxu0 %v1276
    %1860 = vmatpush1.bf16.msra.mxu0 %v1275
    %1861 = vmatprep.subr.bf16.mxu0 %v1282
    %1862 = vmatpush1.bf16.msra.mxu0 %v1281
    %1863 = vmatprep.subr.bf16.mxu0 %v1288
    %1864 = vmatpush1.bf16.msra.mxu0 %v1287
    %1865 = vmatprep.subr.bf16.mxu0 %v1294
    %1866 = vmatpush1.bf16.msra.mxu0 %v1293
    %1867 = vmatprep.subr.bf16.mxu0 %v1300
    %1868 = vmatpush1.bf16.msra.mxu0 %v1299
    %1869 = vmatprep.subr.bf16.mxu0 %v1306
    %1870 = vmatpush1.bf16.msra.mxu0 %v1305
    %1871 = vmatprep.subr.bf16.mxu0 %v1312
    %1872 = vmatpush1.bf16.msra.mxu0 %v1311
    %1873 = vmatprep.subr.bf16.mxu0 %v1318
    %1874 = vmatpush1.bf16.msra.mxu0 %v1317
    %1875 = vmatprep.subr.bf16.mxu0 %v1324
    %1876 = vmatpush1.bf16.msra.mxu0 %v1323
    %1877 = vmatprep.subr.bf16.mxu0 %v1330
    %1878 = vmatpush1.bf16.msra.mxu0 %v1329
    %1879 = vmatprep.mubr.bf16.mxu0 %v1764
    %1880 = vmatmul.mubr.bf16.gmra.mrb[0].mxu0 %v1763
    %v1881 = vpop.f32.mrb[0].mxu0
    %v1882 = vadd.f32 0.0, %v1881
    %v1883 = vpop.f32.mrb[0].mxu0
    %v1884 = vadd.f32 0.0, %v1883
    %v1885 = vpop.f32.mrb[0].mxu0
    %v1886 = vpop.f32.mrb[0].mxu0
    %1887 = vdwg.mxu0
    %v1888 = vadd.f32 %v492, %v1800
    %v1889 = vadd.f32 %v494, %v1802
    %v1890 = vxor.u32 %v1888, 2147483648
    %v1891 = vxor.u32 %v1889, 2147483648
    %v1892 = vmul.f32 %v1890, 1.442695
    %v1893 = vpow.pop %v1892
    %v1894 = vmul.f32 %v1891, 1.442695
    %v1895 = vpow.pop %v1894
    %v1896 = vadd.f32 %v1893, 1.0
    %v1897 = vadd.f32 %v1895, 1.0
    %v1898 = vrcp.pop %v1896
    %v1899 = vmul.f32 1.0, %v1898
    %v1900 = vrcp.pop %v1897
    %v1901 = vmul.f32 1.0, %v1900
    %v1902 = vadd.f32 %v565, %v1841
    %v1903 = vadd.f32 %v567, %v1843
    %v1904 = vxor.u32 %v1902, 2147483648
    %v1905 = vxor.u32 %v1903, 2147483648
    %v1906 = vmul.f32 %v1904, 1.442695
    %v1907 = vpow.pop %v1906
    %v1908 = vmul.f32 %v1905, 1.442695
    %v1909 = vpow.pop %v1908
    %v1910 = vadd.f32 %v1907, 1.0
    %v1911 = vadd.f32 %v1909, 1.0
    %v1912 = vrcp.pop %v1910
    %v1913 = vmul.f32 1.0, %v1912
    %v1914 = vrcp.pop %v1911
    %v1915 = vmul.f32 1.0, %v1914
    %v1916 = vadd.f32 %v1882, %v935
    %v1917 = vadd.f32 %v1884, %v939
    %v1918 = vmul.f32 %v1899, %v1916
    %v1919 = vmul.f32 %v1901, %v1917
    %v1920 = vadd.f32 %v638, %v1918
    %v1921 = vadd.f32 %v640, %v1919
    %v1922 = vtanh.pop %v1920
    %v1923 = vtanh.pop %v1921
    %v1924 = vsub.f32 1.0, %v1913
    %v1925 = vsub.f32 1.0, %v1915
    %v1926 = vmul.f32 %v1924, %v1922
    %v1927 = vmul.f32 %v1925, %v1923
    %v1928 = vmul.f32 %v1913, %v1761
    %v1929 = vmul.f32 %v1915, %v1762
    %v1930 = vadd.f32 %v1926, %v1928
    %v1931 = vadd.f32 %v1927, %v1929
    %v1932 = vpack.c.bf16 %v1930, %v1930
    %v1933 = vpack.c.bf16 %v1931, %v1931
    %1934 = vmatprep.subr.bf16.mxu0 %v1236
    %1935 = vmatpush1.bf16.msra.mxu0 %v1235
    %1936 = vmatprep.subr.bf16.mxu0 %v1242
    %1937 = vmatpush1.bf16.msra.mxu0 %v1241
    %1938 = vmatprep.subr.bf16.mxu0 %v1248
    %1939 = vmatpush1.bf16.msra.mxu0 %v1247
    %1940 = vmatprep.subr.bf16.mxu0 %v1254
    %1941 = vmatpush1.bf16.msra.mxu0 %v1253
    %1942 = vmatprep.subr.bf16.mxu0 %v1260
    %1943 = vmatpush1.bf16.msra.mxu0 %v1259
    %1944 = vmatprep.subr.bf16.mxu0 %v1266
    %1945 = vmatpush1.bf16.msra.mxu0 %v1265
    %1946 = vmatprep.subr.bf16.mxu0 %v1272
    %1947 = vmatpush1.bf16.msra.mxu0 %v1271
    %1948 = vmatprep.subr.bf16.mxu0 %v1278
    %1949 = vmatpush1.bf16.msra.mxu0 %v1277
    %1950 = vmatprep.subr.bf16.mxu0 %v1284
    %1951 = vmatpush1.bf16.msra.mxu0 %v1283
    %1952 = vmatprep.subr.bf16.mxu0 %v1290
    %1953 = vmatpush1.bf16.msra.mxu0 %v1289
    %1954 = vmatprep.subr.bf16.mxu0 %v1296
    %1955 = vmatpush1.bf16.msra.mxu0 %v1295
    %1956 = vmatprep.subr.bf16.mxu0 %v1302
    %1957 = vmatpush1.bf16.msra.mxu0 %v1301
    %1958 = vmatprep.subr.bf16.mxu0 %v1308
    %1959 = vmatpush1.bf16.msra.mxu0 %v1307
    %1960 = vmatprep.subr.bf16.mxu0 %v1314
    %1961 = vmatpush1.bf16.msra.mxu0 %v1313
    %1962 = vmatprep.subr.bf16.mxu0 %v1320
    %1963 = vmatpush1.bf16.msra.mxu0 %v1319
    %1964 = vmatprep.subr.bf16.mxu0 %v1326
    %1965 = vmatpush1.bf16.msra.mxu0 %v1325
    %1966 = vmatprep.mubr.bf16.mxu0 %v1933
    %1967 = vmatmul.mubr.bf16.gmra.mrb[0].mxu0 %v1932
    %v1968 = vpop.f32.mrb[0].mxu0
    %v1969 = vadd.f32 0.0, %v1968
    %v1970 = vpop.f32.mrb[0].mxu0
    %v1971 = vadd.f32 0.0, %v1970
    %v1972 = vpop.f32.mrb[0].mxu0
    %v1973 = vpop.f32.mrb[0].mxu0
    %1974 = vdwg.mxu0
    %1975 = vmatprep.subr.bf16.mxu0 %v1238
    %1976 = vmatpush1.bf16.msra.mxu0 %v1237
    %1977 = vmatprep.subr.bf16.mxu0 %v1244
    %1978 = vmatpush1.bf16.msra.mxu0 %v1243
    %1979 = vmatprep.subr.bf16.mxu0 %v1250
    %1980 = vmatpush1.bf16.msra.mxu0 %v1249
    %1981 = vmatprep.subr.bf16.mxu0 %v1256
    %1982 = vmatpush1.bf16.msra.mxu0 %v1255
    %1983 = vmatprep.subr.bf16.mxu0 %v1262
    %1984 = vmatpush1.bf16.msra.mxu0 %v1261
    %1985 = vmatprep.subr.bf16.mxu0 %v1268
    %1986 = vmatpush1.bf16.msra.mxu0 %v1267
    %1987 = vmatprep.subr.bf16.mxu0 %v1274
    %1988 = vmatpush1.bf16.msra.mxu0 %v1273
    %1989 = vmatprep.subr.bf16.mxu0 %v1280
    %1990 = vmatpush1.bf16.msra.mxu0 %v1279
    %1991 = vmatprep.subr.bf16.mxu0 %v1286
    %1992 = vmatpush1.bf16.msra.mxu0 %v1285
    %1993 = vmatprep.subr.bf16.mxu0 %v1292
    %1994 = vmatpush1.bf16.msra.mxu0 %v1291
    %1995 = vmatprep.subr.bf16.mxu0 %v1298
    %1996 = vmatpush1.bf16.msra.mxu0 %v1297
    %1997 = vmatprep.subr.bf16.mxu0 %v1304
    %1998 = vmatpush1.bf16.msra.mxu0 %v1303
    %1999 = vmatprep.subr.bf16.mxu0 %v1310
    %2000 = vmatpush1.bf16.msra.mxu0 %v1309
    %2001 = vmatprep.subr.bf16.mxu0 %v1316
    %2002 = vmatpush1.bf16.msra.mxu0 %v1315
    %2003 = vmatprep.subr.bf16.mxu0 %v1322
    %2004 = vmatpush1.bf16.msra.mxu0 %v1321
    %2005 = vmatprep.subr.bf16.mxu0 %v1328
    %2006 = vmatpush1.bf16.msra.mxu0 %v1327
    %2007 = vmatprep.mubr.bf16.mxu0 %v1933
    %2008 = vmatmul.mubr.bf16.gmra.mrb[0].mxu0 %v1932
    %v2009 = vpop.f32.mrb[0].mxu0
    %v2010 = vadd.f32 0.0, %v2009
    %v2011 = vpop.f32.mrb[0].mxu0
    %v2012 = vadd.f32 0.0, %v2011
    %v2013 = vpop.f32.mrb[0].mxu0
    %v2014 = vpop.f32.mrb[0].mxu0
    %2015 = vdwg.mxu0
    %2016 = vmatprep.subr.bf16.mxu0 %v1240
    %2017 = vmatpush1.bf16.msra.mxu0 %v1239
    %2018 = vmatprep.subr.bf16.mxu0 %v1246
    %2019 = vmatpush1.bf16.msra.mxu0 %v1245
    %2020 = vmatprep.subr.bf16.mxu0 %v1252
    %2021 = vmatpush1.bf16.msra.mxu0 %v1251
    %2022 = vmatprep.subr.bf16.mxu0 %v1258
    %2023 = vmatpush1.bf16.msra.mxu0 %v1257
    %2024 = vmatprep.subr.bf16.mxu0 %v1264
    %2025 = vmatpush1.bf16.msra.mxu0 %v1263
    %2026 = vmatprep.subr.bf16.mxu0 %v1270
    %2027 = vmatpush1.bf16.msra.mxu0 %v1269
    %2028 = vmatprep.subr.bf16.mxu0 %v1276
    %2029 = vmatpush1.bf16.msra.mxu0 %v1275
    %2030 = vmatprep.subr.bf16.mxu0 %v1282
    %2031 = vmatpush1.bf16.msra.mxu0 %v1281
    %2032 = vmatprep.subr.bf16.mxu0 %v1288
    %2033 = vmatpush1.bf16.msra.mxu0 %v1287
    %2034 = vmatprep.subr.bf16.mxu0 %v1294
    %2035 = vmatpush1.bf16.msra.mxu0 %v1293
    %2036 = vmatprep.subr.bf16.mxu0 %v1300
    %2037 = vmatpush1.bf16.msra.mxu0 %v1299
    %2038 = vmatprep.subr.bf16.mxu0 %v1306
    %2039 = vmatpush1.bf16.msra.mxu0 %v1305
    %2040 = vmatprep.subr.bf16.mxu0 %v1312
    %2041 = vmatpush1.bf16.msra.mxu0 %v1311
    %2042 = vmatprep.subr.bf16.mxu0 %v1318
    %2043 = vmatpush1.bf16.msra.mxu0 %v1317
    %2044 = vmatprep.subr.bf16.mxu0 %v1324
    %2045 = vmatpush1.bf16.msra.mxu0 %v1323
    %2046 = vmatprep.subr.bf16.mxu0 %v1330
    %2047 = vmatpush1.bf16.msra.mxu0 %v1329
    %2048 = vmatprep.mubr.bf16.mxu0 %v1933
    %2049 = vmatmul.mubr.bf16.gmra.mrb[0].mxu0 %v1932
    %v2050 = vpop.f32.mrb[0].mxu0
    %v2051 = vadd.f32 0.0, %v2050
    %v2052 = vpop.f32.mrb[0].mxu0
    %v2053 = vadd.f32 0.0, %v2052
    %v2054 = vpop.f32.mrb[0].mxu0
    %v2055 = vpop.f32.mrb[0].mxu0
    %2056 = vdwg.mxu0
    %v2057 = vadd.f32 %v496, %v1969
    %v2058 = vadd.f32 %v498, %v1971
    %v2059 = vxor.u32 %v2057, 2147483648
    %v2060 = vxor.u32 %v2058, 2147483648
    %v2061 = vmul.f32 %v2059, 1.442695
    %v2062 = vpow.pop %v2061
    %v2063 = vmul.f32 %v2060, 1.442695
    %v2064 = vpow.pop %v2063
    %v2065 = vadd.f32 %v2062, 1.0
    %v2066 = vadd.f32 %v2064, 1.0
    %v2067 = vrcp.pop %v2065
    %v2068 = vmul.f32 1.0, %v2067
    %v2069 = vrcp.pop %v2066
    %v2070 = vmul.f32 1.0, %v2069
    %v2071 = vadd.f32 %v569, %v2010
    %v2072 = vadd.f32 %v571, %v2012
    %v2073 = vxor.u32 %v2071, 2147483648
    %v2074 = vxor.u32 %v2072, 2147483648
    %v2075 = vmul.f32 %v2073, 1.442695
    %v2076 = vpow.pop %v2075
    %v2077 = vmul.f32 %v2074, 1.442695
    %v2078 = vpow.pop %v2077
    %v2079 = vadd.f32 %v2076, 1.0
    %v2080 = vadd.f32 %v2078, 1.0
    %v2081 = vrcp.pop %v2079
    %v2082 = vmul.f32 1.0, %v2081
    %v2083 = vrcp.pop %v2080
    %v2084 = vmul.f32 1.0, %v2083
    %v2085 = vadd.f32 %v2051, %v935
    %v2086 = vadd.f32 %v2053, %v939
    %v2087 = vmul.f32 %v2068, %v2085
    %v2088 = vmul.f32 %v2070, %v2086
    %v2089 = vadd.f32 %v642, %v2087
    %v2090 = vadd.f32 %v644, %v2088
    %v2091 = vtanh.pop %v2089
    %v2092 = vtanh.pop %v2090
    %v2093 = vsub.f32 1.0, %v2082
    %v2094 = vsub.f32 1.0, %v2084
    %v2095 = vmul.f32 %v2093, %v2091
    %v2096 = vmul.f32 %v2094, %v2092
    %v2097 = vmul.f32 %v2082, %v1930
    %v2098 = vmul.f32 %v2084, %v1931
    %v2099 = vadd.f32 %v2095, %v2097
    %v2100 = vadd.f32 %v2096, %v2098
    %v2101 = vpack.c.bf16 %v2099, %v2099
    %v2102 = vpack.c.bf16 %v2100, %v2100
    %2103 = vmatprep.subr.bf16.mxu0 %v1236
    %2104 = vmatpush1.bf16.msra.mxu0 %v1235
    %2105 = vmatprep.subr.bf16.mxu0 %v1242
    %2106 = vmatpush1.bf16.msra.mxu0 %v1241
    %2107 = vmatprep.subr.bf16.mxu0 %v1248
    %2108 = vmatpush1.bf16.msra.mxu0 %v1247
    %2109 = vmatprep.subr.bf16.mxu0 %v1254
    %2110 = vmatpush1.bf16.msra.mxu0 %v1253
    %2111 = vmatprep.subr.bf16.mxu0 %v1260
    %2112 = vmatpush1.bf16.msra.mxu0 %v1259
    %2113 = vmatprep.subr.bf16.mxu0 %v1266
    %2114 = vmatpush1.bf16.msra.mxu0 %v1265
    %2115 = vmatprep.subr.bf16.mxu0 %v1272
    %2116 = vmatpush1.bf16.msra.mxu0 %v1271
    %2117 = vmatprep.subr.bf16.mxu0 %v1278
    %2118 = vmatpush1.bf16.msra.mxu0 %v1277
    %2119 = vmatprep.subr.bf16.mxu0 %v1284
    %2120 = vmatpush1.bf16.msra.mxu0 %v1283
    %2121 = vmatprep.subr.bf16.mxu0 %v1290
    %2122 = vmatpush1.bf16.msra.mxu0 %v1289
    %2123 = vmatprep.subr.bf16.mxu0 %v1296
    %2124 = vmatpush1.bf16.msra.mxu0 %v1295
    %2125 = vmatprep.subr.bf16.mxu0 %v1302
    %2126 = vmatpush1.bf16.msra.mxu0 %v1301
    %2127 = vmatprep.subr.bf16.mxu0 %v1308
    %2128 = vmatpush1.bf16.msra.mxu0 %v1307
    %2129 = vmatprep.subr.bf16.mxu0 %v1314
    %2130 = vmatpush1.bf16.msra.mxu0 %v1313
    %2131 = vmatprep.subr.bf16.mxu0 %v1320
    %2132 = vmatpush1.bf16.msra.mxu0 %v1319
    %2133 = vmatprep.subr.bf16.mxu0 %v1326
    %2134 = vmatpush1.bf16.msra.mxu0 %v1325
    %2135 = vmatprep.mubr.bf16.mxu0 %v2102
    %2136 = vmatmul.mubr.bf16.gmra.mrb[0].mxu0 %v2101
    %v2137 = vpop.f32.mrb[0].mxu0
    %v2138 = vadd.f32 0.0, %v2137
    %v2139 = vpop.f32.mrb[0].mxu0
    %v2140 = vadd.f32 0.0, %v2139
    %v2141 = vpop.f32.mrb[0].mxu0
    %v2142 = vpop.f32.mrb[0].mxu0
    %2143 = vdwg.mxu0
    %2144 = vmatprep.subr.bf16.mxu0 %v1238
    %2145 = vmatpush1.bf16.msra.mxu0 %v1237
    %2146 = vmatprep.subr.bf16.mxu0 %v1244
    %2147 = vmatpush1.bf16.msra.mxu0 %v1243
    %2148 = vmatprep.subr.bf16.mxu0 %v1250
    %2149 = vmatpush1.bf16.msra.mxu0 %v1249
    %2150 = vmatprep.subr.bf16.mxu0 %v1256
    %2151 = vmatpush1.bf16.msra.mxu0 %v1255
    %2152 = vmatprep.subr.bf16.mxu0 %v1262
    %2153 = vmatpush1.bf16.msra.mxu0 %v1261
    %2154 = vmatprep.subr.bf16.mxu0 %v1268
    %2155 = vmatpush1.bf16.msra.mxu0 %v1267
    %2156 = vmatprep.subr.bf16.mxu0 %v1274
    %2157 = vmatpush1.bf16.msra.mxu0 %v1273
    %2158 = vmatprep.subr.bf16.mxu0 %v1280
    %2159 = vmatpush1.bf16.msra.mxu0 %v1279
    %2160 = vmatprep.subr.bf16.mxu0 %v1286
    %2161 = vmatpush1.bf16.msra.mxu0 %v1285
    %2162 = vmatprep.subr.bf16.mxu0 %v1292
    %2163 = vmatpush1.bf16.msra.mxu0 %v1291
    %2164 = vmatprep.subr.bf16.mxu0 %v1298
    %2165 = vmatpush1.bf16.msra.mxu0 %v1297
    %2166 = vmatprep.subr.bf16.mxu0 %v1304
    %2167 = vmatpush1.bf16.msra.mxu0 %v1303
    %2168 = vmatprep.subr.bf16.mxu0 %v1310
    %2169 = vmatpush1.bf16.msra.mxu0 %v1309
    %2170 = vmatprep.subr.bf16.mxu0 %v1316
    %2171 = vmatpush1.bf16.msra.mxu0 %v1315
    %2172 = vmatprep.subr.bf16.mxu0 %v1322
    %2173 = vmatpush1.bf16.msra.mxu0 %v1321
    %2174 = vmatprep.subr.bf16.mxu0 %v1328
    %2175 = vmatpush1.bf16.msra.mxu0 %v1327
    %2176 = vmatprep.mubr.bf16.mxu0 %v2102
    %2177 = vmatmul.mubr.bf16.gmra.mrb[0].mxu0 %v2101
    %v2178 = vpop.f32.mrb[0].mxu0
    %v2179 = vadd.f32 0.0, %v2178
    %v2180 = vpop.f32.mrb[0].mxu0
    %v2181 = vadd.f32 0.0, %v2180
    %v2182 = vpop.f32.mrb[0].mxu0
    %v2183 = vpop.f32.mrb[0].mxu0
    %2184 = vdwg.mxu0
    %2185 = vmatprep.subr.bf16.mxu0 %v1240
    %2186 = vmatpush1.bf16.msra.mxu0 %v1239
    %2187 = vmatprep.subr.bf16.mxu0 %v1246
    %2188 = vmatpush1.bf16.msra.mxu0 %v1245
    %2189 = vmatprep.subr.bf16.mxu0 %v1252
    %2190 = vmatpush1.bf16.msra.mxu0 %v1251
    %2191 = vmatprep.subr.bf16.mxu0 %v1258
    %2192 = vmatpush1.bf16.msra.mxu0 %v1257
    %2193 = vmatprep.subr.bf16.mxu0 %v1264
    %2194 = vmatpush1.bf16.msra.mxu0 %v1263
    %2195 = vmatprep.subr.bf16.mxu0 %v1270
    %2196 = vmatpush1.bf16.msra.mxu0 %v1269
    %2197 = vmatprep.subr.bf16.mxu0 %v1276
    %2198 = vmatpush1.bf16.msra.mxu0 %v1275
    %2199 = vmatprep.subr.bf16.mxu0 %v1282
    %2200 = vmatpush1.bf16.msra.mxu0 %v1281
    %2201 = vmatprep.subr.bf16.mxu0 %v1288
    %2202 = vmatpush1.bf16.msra.mxu0 %v1287
    %2203 = vmatprep.subr.bf16.mxu0 %v1294
    %2204 = vmatpush1.bf16.msra.mxu0 %v1293
    %2205 = vmatprep.subr.bf16.mxu0 %v1300
    %2206 = vmatpush1.bf16.msra.mxu0 %v1299
    %2207 = vmatprep.subr.bf16.mxu0 %v1306
    %2208 = vmatpush1.bf16.msra.mxu0 %v1305
    %2209 = vmatprep.subr.bf16.mxu0 %v1312
    %2210 = vmatpush1.bf16.msra.mxu0 %v1311
    %2211 = vmatprep.subr.bf16.mxu0 %v1318
    %2212 = vmatpush1.bf16.msra.mxu0 %v1317
    %2213 = vmatprep.subr.bf16.mxu0 %v1324
    %2214 = vmatpush1.bf16.msra.mxu0 %v1323
    %2215 = vmatprep.subr.bf16.mxu0 %v1330
    %2216 = vmatpush1.bf16.msra.mxu0 %v1329
    %2217 = vmatprep.mubr.bf16.mxu0 %v2102
    %2218 = vmatmul.mubr.bf16.gmra.mrb[0].mxu0 %v2101
    %v2219 = vpop.f32.mrb[0].mxu0
    %v2220 = vadd.f32 0.0, %v2219
    %v2221 = vpop.f32.mrb[0].mxu0
    %v2222 = vadd.f32 0.0, %v2221
    %v2223 = vpop.f32.mrb[0].mxu0
    %v2224 = vpop.f32.mrb[0].mxu0
    %2225 = vdwg.mxu0
    %v2226 = vadd.f32 %v502, %v2138
    %v2227 = vadd.f32 %v504, %v2140
    %v2228 = vxor.u32 %v2226, 2147483648
    %v2229 = vxor.u32 %v2227, 2147483648
    %v2230 = vmul.f32 %v2228, 1.442695
    %v2231 = vpow.pop %v2230
    %v2232 = vmul.f32 %v2229, 1.442695
    %v2233 = vpow.pop %v2232
    %v2234 = vadd.f32 %v2231, 1.0
    %v2235 = vadd.f32 %v2233, 1.0
    %v2236 = vrcp.pop %v2234
    %v2237 = vmul.f32 1.0, %v2236
    %v2238 = vrcp.pop %v2235
    %v2239 = vmul.f32 1.0, %v2238
    %v2240 = vadd.f32 %v575, %v2179
    %v2241 = vadd.f32 %v577, %v2181
    %v2242 = vxor.u32 %v2240, 2147483648
    %v2243 = vxor.u32 %v2241, 2147483648
    %v2244 = vmul.f32 %v2242, 1.442695
    %v2245 = vpow.pop %v2244
    %v2246 = vmul.f32 %v2243, 1.442695
    %v2247 = vpow.pop %v2246
    %v2248 = vadd.f32 %v2245, 1.0
    %v2249 = vadd.f32 %v2247, 1.0
    %v2250 = vrcp.pop %v2248
    %v2251 = vmul.f32 1.0, %v2250
    %v2252 = vrcp.pop %v2249
    %v2253 = vmul.f32 1.0, %v2252
    %v2254 = vadd.f32 %v2220, %v935
    %v2255 = vadd.f32 %v2222, %v939
    %v2256 = vmul.f32 %v2237, %v2254
    %v2257 = vmul.f32 %v2239, %v2255
    %v2258 = vadd.f32 %v648, %v2256
    %v2259 = vadd.f32 %v650, %v2257
    %v2260 = vtanh.pop %v2258
    %v2261 = vtanh.pop %v2259
    %v2262 = vsub.f32 1.0, %v2251
    %v2263 = vsub.f32 1.0, %v2253
    %v2264 = vmul.f32 %v2262, %v2260
    %v2265 = vmul.f32 %v2263, %v2261
    %v2266 = vmul.f32 %v2251, %v2099
    %v2267 = vmul.f32 %v2253, %v2100
    %v2268 = vadd.f32 %v2264, %v2266
    %v2269 = vadd.f32 %v2265, %v2267
    %v2270 = vpack.c.bf16 %v2268, %v2268
    %v2271 = vpack.c.bf16 %v2269, %v2269
    %2272 = vmatprep.subr.bf16.mxu0 %v1236
    %2273 = vmatpush1.bf16.msra.mxu0 %v1235
    %2274 = vmatprep.subr.bf16.mxu0 %v1242
    %2275 = vmatpush1.bf16.msra.mxu0 %v1241
    %2276 = vmatprep.subr.bf16.mxu0 %v1248
    %2277 = vmatpush1.bf16.msra.mxu0 %v1247
    %2278 = vmatprep.subr.bf16.mxu0 %v1254
    %2279 = vmatpush1.bf16.msra.mxu0 %v1253
    %2280 = vmatprep.subr.bf16.mxu0 %v1260
    %2281 = vmatpush1.bf16.msra.mxu0 %v1259
    %2282 = vmatprep.subr.bf16.mxu0 %v1266
    %2283 = vmatpush1.bf16.msra.mxu0 %v1265
    %2284 = vmatprep.subr.bf16.mxu0 %v1272
    %2285 = vmatpush1.bf16.msra.mxu0 %v1271
    %2286 = vmatprep.subr.bf16.mxu0 %v1278
    %2287 = vmatpush1.bf16.msra.mxu0 %v1277
    %2288 = vmatprep.subr.bf16.mxu0 %v1284
    %2289 = vmatpush1.bf16.msra.mxu0 %v1283
    %2290 = vmatprep.subr.bf16.mxu0 %v1290
    %2291 = vmatpush1.bf16.msra.mxu0 %v1289
    %2292 = vmatprep.subr.bf16.mxu0 %v1296
    %2293 = vmatpush1.bf16.msra.mxu0 %v1295
    %2294 = vmatprep.subr.bf16.mxu0 %v1302
    %2295 = vmatpush1.bf16.msra.mxu0 %v1301
    %2296 = vmatprep.subr.bf16.mxu0 %v1308
    %2297 = vmatpush1.bf16.msra.mxu0 %v1307
    %2298 = vmatprep.subr.bf16.mxu0 %v1314
    %2299 = vmatpush1.bf16.msra.mxu0 %v1313
    %2300 = vmatprep.subr.bf16.mxu0 %v1320
    %2301 = vmatpush1.bf16.msra.mxu0 %v1319
    %2302 = vmatprep.subr.bf16.mxu0 %v1326
    %2303 = vmatpush1.bf16.msra.mxu0 %v1325
    %2304 = vmatprep.mubr.bf16.mxu0 %v2271
    %2305 = vmatmul.mubr.bf16.gmra.mrb[0].mxu0 %v2270
    %v2306 = vpop.f32.mrb[0].mxu0
    %v2307 = vadd.f32 0.0, %v2306
    %v2308 = vpop.f32.mrb[0].mxu0
    %v2309 = vadd.f32 0.0, %v2308
    %v2310 = vpop.f32.mrb[0].mxu0
    %v2311 = vpop.f32.mrb[0].mxu0
    %2312 = vdwg.mxu0
    %2313 = vmatprep.subr.bf16.mxu0 %v1238
    %2314 = vmatpush1.bf16.msra.mxu0 %v1237
    %2315 = vmatprep.subr.bf16.mxu0 %v1244
    %2316 = vmatpush1.bf16.msra.mxu0 %v1243
    %2317 = vmatprep.subr.bf16.mxu0 %v1250
    %2318 = vmatpush1.bf16.msra.mxu0 %v1249
    %2319 = vmatprep.subr.bf16.mxu0 %v1256
    %2320 = vmatpush1.bf16.msra.mxu0 %v1255
    %2321 = vmatprep.subr.bf16.mxu0 %v1262
    %2322 = vmatpush1.bf16.msra.mxu0 %v1261
    %2323 = vmatprep.subr.bf16.mxu0 %v1268
    %2324 = vmatpush1.bf16.msra.mxu0 %v1267
    %2325 = vmatprep.subr.bf16.mxu0 %v1274
    %2326 = vmatpush1.bf16.msra.mxu0 %v1273
    %2327 = vmatprep.subr.bf16.mxu0 %v1280
    %2328 = vmatpush1.bf16.msra.mxu0 %v1279
    %2329 = vmatprep.subr.bf16.mxu0 %v1286
    %2330 = vmatpush1.bf16.msra.mxu0 %v1285
    %2331 = vmatprep.subr.bf16.mxu0 %v1292
    %2332 = vmatpush1.bf16.msra.mxu0 %v1291
    %2333 = vmatprep.subr.bf16.mxu0 %v1298
    %2334 = vmatpush1.bf16.msra.mxu0 %v1297
    %2335 = vmatprep.subr.bf16.mxu0 %v1304
    %2336 = vmatpush1.bf16.msra.mxu0 %v1303
    %2337 = vmatprep.subr.bf16.mxu0 %v1310
    %2338 = vmatpush1.bf16.msra.mxu0 %v1309
    %2339 = vmatprep.subr.bf16.mxu0 %v1316
    %2340 = vmatpush1.bf16.msra.mxu0 %v1315
    %2341 = vmatprep.subr.bf16.mxu0 %v1322
    %2342 = vmatpush1.bf16.msra.mxu0 %v1321
    %2343 = vmatprep.subr.bf16.mxu0 %v1328
    %2344 = vmatpush1.bf16.msra.mxu0 %v1327
    %2345 = vmatprep.mubr.bf16.mxu0 %v2271
    %2346 = vmatmul.mubr.bf16.gmra.mrb[0].mxu0 %v2270
    %v2347 = vpop.f32.mrb[0].mxu0
    %v2348 = vadd.f32 0.0, %v2347
    %v2349 = vpop.f32.mrb[0].mxu0
    %v2350 = vadd.f32 0.0, %v2349
    %v2351 = vpop.f32.mrb[0].mxu0
    %v2352 = vpop.f32.mrb[0].mxu0
    %2353 = vdwg.mxu0
    %2354 = vmatprep.subr.bf16.mxu0 %v1240
    %2355 = vmatpush1.bf16.msra.mxu0 %v1239
    %2356 = vmatprep.subr.bf16.mxu0 %v1246
    %2357 = vmatpush1.bf16.msra.mxu0 %v1245
    %2358 = vmatprep.subr.bf16.mxu0 %v1252
    %2359 = vmatpush1.bf16.msra.mxu0 %v1251
    %2360 = vmatprep.subr.bf16.mxu0 %v1258
    %2361 = vmatpush1.bf16.msra.mxu0 %v1257
    %2362 = vmatprep.subr.bf16.mxu0 %v1264
    %2363 = vmatpush1.bf16.msra.mxu0 %v1263
    %2364 = vmatprep.subr.bf16.mxu0 %v1270
    %2365 = vmatpush1.bf16.msra.mxu0 %v1269
    %2366 = vmatprep.subr.bf16.mxu0 %v1276
    %2367 = vmatpush1.bf16.msra.mxu0 %v1275
    %2368 = vmatprep.subr.bf16.mxu0 %v1282
    %2369 = vmatpush1.bf16.msra.mxu0 %v1281
    %2370 = vmatprep.subr.bf16.mxu0 %v1288
    %2371 = vmatpush1.bf16.msra.mxu0 %v1287
    %2372 = vmatprep.subr.bf16.mxu0 %v1294
    %2373 = vmatpush1.bf16.msra.mxu0 %v1293
    %2374 = vmatprep.subr.bf16.mxu0 %v1300
    %2375 = vmatpush1.bf16.msra.mxu0 %v1299
    %2376 = vmatprep.subr.bf16.mxu0 %v1306
    %2377 = vmatpush1.bf16.msra.mxu0 %v1305
    %2378 = vmatprep.subr.bf16.mxu0 %v1312
    %2379 = vmatpush1.bf16.msra.mxu0 %v1311
    %2380 = vmatprep.subr.bf16.mxu0 %v1318
    %2381 = vmatpush1.bf16.msra.mxu0 %v1317
    %2382 = vmatprep.subr.bf16.mxu0 %v1324
    %2383 = vmatpush1.bf16.msra.mxu0 %v1323
    %2384 = vmatprep.subr.bf16.mxu0 %v1330
    %2385 = vmatpush1.bf16.msra.mxu0 %v1329
    %2386 = vmatprep.mubr.bf16.mxu0 %v2271
    %2387 = vmatmul.mubr.bf16.gmra.mrb[0].mxu0 %v2270
    %v2388 = vpop.f32.mrb[0].mxu0
    %v2389 = vadd.f32 0.0, %v2388
    %v2390 = vpop.f32.mrb[0].mxu0
    %v2391 = vadd.f32 0.0, %v2390
    %v2392 = vpop.f32.mrb[0].mxu0
    %v2393 = vpop.f32.mrb[0].mxu0
    %2394 = vdwg.mxu0
    %v2395 = vadd.f32 %v506, %v2307
    %v2396 = vadd.f32 %v508, %v2309
    %v2397 = vxor.u32 %v2395, 2147483648
    %v2398 = vxor.u32 %v2396, 2147483648
    %v2399 = vmul.f32 %v2397, 1.442695
    %v2400 = vpow.pop %v2399
    %v2401 = vmul.f32 %v2398, 1.442695
    %v2402 = vpow.pop %v2401
    %v2403 = vadd.f32 %v2400, 1.0
    %v2404 = vadd.f32 %v2402, 1.0
    %v2405 = vrcp.pop %v2403
    %v2406 = vmul.f32 1.0, %v2405
    %v2407 = vrcp.pop %v2404
    %v2408 = vmul.f32 1.0, %v2407
    %v2409 = vadd.f32 %v579, %v2348
    %v2410 = vadd.f32 %v581, %v2350
    %v2411 = vxor.u32 %v2409, 2147483648
    %v2412 = vxor.u32 %v2410, 2147483648
    %v2413 = vmul.f32 %v2411, 1.442695
    %v2414 = vpow.pop %v2413
    %v2415 = vmul.f32 %v2412, 1.442695
    %v2416 = vpow.pop %v2415
    %v2417 = vadd.f32 %v2414, 1.0
    %v2418 = vadd.f32 %v2416, 1.0
    %v2419 = vrcp.pop %v2417
    %v2420 = vmul.f32 1.0, %v2419
    %v2421 = vrcp.pop %v2418
    %v2422 = vmul.f32 1.0, %v2421
    %v2423 = vadd.f32 %v2389, %v935
    %v2424 = vadd.f32 %v2391, %v939
    %v2425 = vmul.f32 %v2406, %v2423
    %v2426 = vmul.f32 %v2408, %v2424
    %v2427 = vadd.f32 %v652, %v2425
    %v2428 = vadd.f32 %v654, %v2426
    %v2429 = vtanh.pop %v2427
    %v2430 = vtanh.pop %v2428
    %v2431 = vsub.f32 1.0, %v2420
    %v2432 = vsub.f32 1.0, %v2422
    %v2433 = vmul.f32 %v2431, %v2429
    %v2434 = vmul.f32 %v2432, %v2430
    %v2435 = vmul.f32 %v2420, %v2268
    %v2436 = vmul.f32 %v2422, %v2269
    %v2437 = vadd.f32 %v2433, %v2435
    %v2438 = vadd.f32 %v2434, %v2436
    %v2439 = vpack.c.bf16 %v2437, %v2437
    %v2440 = vpack.c.bf16 %v2438, %v2438
    %2441 = vmatprep.subr.bf16.mxu0 %v1236
    %2442 = vmatpush1.bf16.msra.mxu0 %v1235
    %2443 = vmatprep.subr.bf16.mxu0 %v1242
    %2444 = vmatpush1.bf16.msra.mxu0 %v1241
    %2445 = vmatprep.subr.bf16.mxu0 %v1248
    %2446 = vmatpush1.bf16.msra.mxu0 %v1247
    %2447 = vmatprep.subr.bf16.mxu0 %v1254
    %2448 = vmatpush1.bf16.msra.mxu0 %v1253
    %2449 = vmatprep.subr.bf16.mxu0 %v1260
    %2450 = vmatpush1.bf16.msra.mxu0 %v1259
    %2451 = vmatprep.subr.bf16.mxu0 %v1266
    %2452 = vmatpush1.bf16.msra.mxu0 %v1265
    %2453 = vmatprep.subr.bf16.mxu0 %v1272
    %2454 = vmatpush1.bf16.msra.mxu0 %v1271
    %2455 = vmatprep.subr.bf16.mxu0 %v1278
    %2456 = vmatpush1.bf16.msra.mxu0 %v1277
    %2457 = vmatprep.subr.bf16.mxu0 %v1284
    %2458 = vmatpush1.bf16.msra.mxu0 %v1283
    %2459 = vmatprep.subr.bf16.mxu0 %v1290
    %2460 = vmatpush1.bf16.msra.mxu0 %v1289
    %2461 = vmatprep.subr.bf16.mxu0 %v1296
    %2462 = vmatpush1.bf16.msra.mxu0 %v1295
    %2463 = vmatprep.subr.bf16.mxu0 %v1302
    %2464 = vmatpush1.bf16.msra.mxu0 %v1301
    %2465 = vmatprep.subr.bf16.mxu0 %v1308
    %2466 = vmatpush1.bf16.msra.mxu0 %v1307
    %2467 = vmatprep.subr.bf16.mxu0 %v1314
    %2468 = vmatpush1.bf16.msra.mxu0 %v1313
    %2469 = vmatprep.subr.bf16.mxu0 %v1320
    %2470 = vmatpush1.bf16.msra.mxu0 %v1319
    %2471 = vmatprep.subr.bf16.mxu0 %v1326
    %2472 = vmatpush1.bf16.msra.mxu0 %v1325
    %2473 = vmatprep.mubr.bf16.mxu0 %v2440
    %2474 = vmatmul.mubr.bf16.gmra.mrb[0].mxu0 %v2439
    %v2475 = vpop.f32.mrb[0].mxu0
    %v2476 = vadd.f32 0.0, %v2475
    %v2477 = vpop.f32.mrb[0].mxu0
    %v2478 = vadd.f32 0.0, %v2477
    %v2479 = vpop.f32.mrb[0].mxu0
    %v2480 = vpop.f32.mrb[0].mxu0
    %2481 = vdwg.mxu0
    %2482 = vmatprep.subr.bf16.mxu0 %v1238
    %2483 = vmatpush1.bf16.msra.mxu0 %v1237
    %2484 = vmatprep.subr.bf16.mxu0 %v1244
    %2485 = vmatpush1.bf16.msra.mxu0 %v1243
    %2486 = vmatprep.subr.bf16.mxu0 %v1250
    %2487 = vmatpush1.bf16.msra.mxu0 %v1249
    %2488 = vmatprep.subr.bf16.mxu0 %v1256
    %2489 = vmatpush1.bf16.msra.mxu0 %v1255
    %2490 = vmatprep.subr.bf16.mxu0 %v1262
    %2491 = vmatpush1.bf16.msra.mxu0 %v1261
    %2492 = vmatprep.subr.bf16.mxu0 %v1268
    %2493 = vmatpush1.bf16.msra.mxu0 %v1267
    %2494 = vmatprep.subr.bf16.mxu0 %v1274
    %2495 = vmatpush1.bf16.msra.mxu0 %v1273
    %2496 = vmatprep.subr.bf16.mxu0 %v1280
    %2497 = vmatpush1.bf16.msra.mxu0 %v1279
    %2498 = vmatprep.subr.bf16.mxu0 %v1286
    %2499 = vmatpush1.bf16.msra.mxu0 %v1285
    %2500 = vmatprep.subr.bf16.mxu0 %v1292
    %2501 = vmatpush1.bf16.msra.mxu0 %v1291
    %2502 = vmatprep.subr.bf16.mxu0 %v1298
    %2503 = vmatpush1.bf16.msra.mxu0 %v1297
    %2504 = vmatprep.subr.bf16.mxu0 %v1304
    %2505 = vmatpush1.bf16.msra.mxu0 %v1303
    %2506 = vmatprep.subr.bf16.mxu0 %v1310
    %2507 = vmatpush1.bf16.msra.mxu0 %v1309
    %2508 = vmatprep.subr.bf16.mxu0 %v1316
    %2509 = vmatpush1.bf16.msra.mxu0 %v1315
    %2510 = vmatprep.subr.bf16.mxu0 %v1322
    %2511 = vmatpush1.bf16.msra.mxu0 %v1321
    %2512 = vmatprep.subr.bf16.mxu0 %v1328
    %2513 = vmatpush1.bf16.msra.mxu0 %v1327
    %2514 = vmatprep.mubr.bf16.mxu0 %v2440
    %2515 = vmatmul.mubr.bf16.gmra.mrb[0].mxu0 %v2439
    %v2516 = vpop.f32.mrb[0].mxu0
    %v2517 = vadd.f32 0.0, %v2516
    %v2518 = vpop.f32.mrb[0].mxu0
    %v2519 = vadd.f32 0.0, %v2518
    %v2520 = vpop.f32.mrb[0].mxu0
    %v2521 = vpop.f32.mrb[0].mxu0
    %2522 = vdwg.mxu0
    %2523 = vmatprep.subr.bf16.mxu0 %v1240
    %2524 = vmatpush1.bf16.msra.mxu0 %v1239
    %2525 = vmatprep.subr.bf16.mxu0 %v1246
    %2526 = vmatpush1.bf16.msra.mxu0 %v1245
    %2527 = vmatprep.subr.bf16.mxu0 %v1252
    %2528 = vmatpush1.bf16.msra.mxu0 %v1251
    %2529 = vmatprep.subr.bf16.mxu0 %v1258
    %2530 = vmatpush1.bf16.msra.mxu0 %v1257
    %2531 = vmatprep.subr.bf16.mxu0 %v1264
    %2532 = vmatpush1.bf16.msra.mxu0 %v1263
    %2533 = vmatprep.subr.bf16.mxu0 %v1270
    %2534 = vmatpush1.bf16.msra.mxu0 %v1269
    %2535 = vmatprep.subr.bf16.mxu0 %v1276
    %2536 = vmatpush1.bf16.msra.mxu0 %v1275
    %2537 = vmatprep.subr.bf16.mxu0 %v1282
    %2538 = vmatpush1.bf16.msra.mxu0 %v1281
    %2539 = vmatprep.subr.bf16.mxu0 %v1288
    %2540 = vmatpush1.bf16.msra.mxu0 %v1287
    %2541 = vmatprep.subr.bf16.mxu0 %v1294
    %2542 = vmatpush1.bf16.msra.mxu0 %v1293
    %2543 = vmatprep.subr.bf16.mxu0 %v1300
    %2544 = vmatpush1.bf16.msra.mxu0 %v1299
    %2545 = vmatprep.subr.bf16.mxu0 %v1306
    %2546 = vmatpush1.bf16.msra.mxu0 %v1305
    %2547 = vmatprep.subr.bf16.mxu0 %v1312
    %2548 = vmatpush1.bf16.msra.mxu0 %v1311
    %2549 = vmatprep.subr.bf16.mxu0 %v1318
    %2550 = vmatpush1.bf16.msra.mxu0 %v1317
    %2551 = vmatprep.subr.bf16.mxu0 %v1324
    %2552 = vmatpush1.bf16.msra.mxu0 %v1323
    %2553 = vmatprep.subr.bf16.mxu0 %v1330
    %2554 = vmatpush1.bf16.msra.mxu0 %v1329
    %2555 = vmatprep.mubr.bf16.mxu0 %v2440
    %2556 = vmatmul.mubr.bf16.gmra.mrb[0].mxu0 %v2439
    %v2557 = vpop.f32.mrb[0].mxu0
    %v2558 = vadd.f32 0.0, %v2557
    %v2559 = vpop.f32.mrb[0].mxu0
    %v2560 = vadd.f32 0.0, %v2559
    %v2561 = vpop.f32.mrb[0].mxu0
    %v2562 = vpop.f32.mrb[0].mxu0
    %2563 = vdwg.mxu0
    %v2564 = vadd.f32 %v512, %v2476
    %v2565 = vadd.f32 %v514, %v2478
    %v2566 = vxor.u32 %v2564, 2147483648
    %v2567 = vxor.u32 %v2565, 2147483648
    %v2568 = vmul.f32 %v2566, 1.442695
    %v2569 = vpow.pop %v2568
    %v2570 = vmul.f32 %v2567, 1.442695
    %v2571 = vpow.pop %v2570
    %v2572 = vadd.f32 %v2569, 1.0
    %v2573 = vadd.f32 %v2571, 1.0
    %v2574 = vrcp.pop %v2572
    %v2575 = vmul.f32 1.0, %v2574
    %v2576 = vrcp.pop %v2573
    %v2577 = vmul.f32 1.0, %v2576
    %v2578 = vadd.f32 %v585, %v2517
    %v2579 = vadd.f32 %v587, %v2519
    %v2580 = vxor.u32 %v2578, 2147483648
    %v2581 = vxor.u32 %v2579, 2147483648
    %v2582 = vmul.f32 %v2580, 1.442695
    %v2583 = vpow.pop %v2582
    %v2584 = vmul.f32 %v2581, 1.442695
    %v2585 = vpow.pop %v2584
    %v2586 = vadd.f32 %v2583, 1.0
    %v2587 = vadd.f32 %v2585, 1.0
    %v2588 = vrcp.pop %v2586
    %v2589 = vmul.f32 1.0, %v2588
    %v2590 = vrcp.pop %v2587
    %v2591 = vmul.f32 1.0, %v2590
    %v2592 = vadd.f32 %v2558, %v935
    %v2593 = vadd.f32 %v2560, %v939
    %v2594 = vmul.f32 %v2575, %v2592
    %v2595 = vmul.f32 %v2577, %v2593
    %v2596 = vadd.f32 %v658, %v2594
    %v2597 = vadd.f32 %v660, %v2595
    %v2598 = vtanh.pop %v2596
    %v2599 = vtanh.pop %v2597
    %v2600 = vsub.f32 1.0, %v2589
    %v2601 = vsub.f32 1.0, %v2591
    %v2602 = vmul.f32 %v2600, %v2598
    %v2603 = vmul.f32 %v2601, %v2599
    %v2604 = vmul.f32 %v2589, %v2437
    %v2605 = vmul.f32 %v2591, %v2438
    %v2606 = vadd.f32 %v2602, %v2604
    %v2607 = vadd.f32 %v2603, %v2605
    %v2608 = vpack.c.bf16 %v2606, %v2606
    %v2609 = vpack.c.bf16 %v2607, %v2607
    %2610 = vmatprep.subr.bf16.mxu0 %v1236
    %2611 = vmatpush1.bf16.msra.mxu0 %v1235
    %2612 = vmatprep.subr.bf16.mxu0 %v1242
    %2613 = vmatpush1.bf16.msra.mxu0 %v1241
    %2614 = vmatprep.subr.bf16.mxu0 %v1248
    %2615 = vmatpush1.bf16.msra.mxu0 %v1247
    %2616 = vmatprep.subr.bf16.mxu0 %v1254
    %2617 = vmatpush1.bf16.msra.mxu0 %v1253
    %2618 = vmatprep.subr.bf16.mxu0 %v1260
    %2619 = vmatpush1.bf16.msra.mxu0 %v1259
    %2620 = vmatprep.subr.bf16.mxu0 %v1266
    %2621 = vmatpush1.bf16.msra.mxu0 %v1265
    %2622 = vmatprep.subr.bf16.mxu0 %v1272
    %2623 = vmatpush1.bf16.msra.mxu0 %v1271
    %2624 = vmatprep.subr.bf16.mxu0 %v1278
    %2625 = vmatpush1.bf16.msra.mxu0 %v1277
    %2626 = vmatprep.subr.bf16.mxu0 %v1284
    %2627 = vmatpush1.bf16.msra.mxu0 %v1283
    %2628 = vmatprep.subr.bf16.mxu0 %v1290
    %2629 = vmatpush1.bf16.msra.mxu0 %v1289
    %2630 = vmatprep.subr.bf16.mxu0 %v1296
    %2631 = vmatpush1.bf16.msra.mxu0 %v1295
    %2632 = vmatprep.subr.bf16.mxu0 %v1302
    %2633 = vmatpush1.bf16.msra.mxu0 %v1301
    %2634 = vmatprep.subr.bf16.mxu0 %v1308
    %2635 = vmatpush1.bf16.msra.mxu0 %v1307
    %2636 = vmatprep.subr.bf16.mxu0 %v1314
    %2637 = vmatpush1.bf16.msra.mxu0 %v1313
    %2638 = vmatprep.subr.bf16.mxu0 %v1320
    %2639 = vmatpush1.bf16.msra.mxu0 %v1319
    %2640 = vmatprep.subr.bf16.mxu0 %v1326
    %2641 = vmatpush1.bf16.msra.mxu0 %v1325
    %2642 = vmatprep.mubr.bf16.mxu0 %v2609
    %2643 = vmatmul.mubr.bf16.gmra.mrb[0].mxu0 %v2608
    %v2644 = vpop.f32.mrb[0].mxu0
    %v2645 = vadd.f32 0.0, %v2644
    %v2646 = vpop.f32.mrb[0].mxu0
    %v2647 = vadd.f32 0.0, %v2646
    %v2648 = vpop.f32.mrb[0].mxu0
    %v2649 = vpop.f32.mrb[0].mxu0
    %2650 = vdwg.mxu0
    %2651 = vmatprep.subr.bf16.mxu0 %v1238
    %2652 = vmatpush1.bf16.msra.mxu0 %v1237
    %2653 = vmatprep.subr.bf16.mxu0 %v1244
    %2654 = vmatpush1.bf16.msra.mxu0 %v1243
    %2655 = vmatprep.subr.bf16.mxu0 %v1250
    %2656 = vmatpush1.bf16.msra.mxu0 %v1249
    %2657 = vmatprep.subr.bf16.mxu0 %v1256
    %2658 = vmatpush1.bf16.msra.mxu0 %v1255
    %2659 = vmatprep.subr.bf16.mxu0 %v1262
    %2660 = vmatpush1.bf16.msra.mxu0 %v1261
    %2661 = vmatprep.subr.bf16.mxu0 %v1268
    %2662 = vmatpush1.bf16.msra.mxu0 %v1267
    %2663 = vmatprep.subr.bf16.mxu0 %v1274
    %2664 = vmatpush1.bf16.msra.mxu0 %v1273
    %2665 = vmatprep.subr.bf16.mxu0 %v1280
    %2666 = vmatpush1.bf16.msra.mxu0 %v1279
    %2667 = vmatprep.subr.bf16.mxu0 %v1286
    %2668 = vmatpush1.bf16.msra.mxu0 %v1285
    %2669 = vmatprep.subr.bf16.mxu0 %v1292
    %2670 = vmatpush1.bf16.msra.mxu0 %v1291
    %2671 = vmatprep.subr.bf16.mxu0 %v1298
    %2672 = vmatpush1.bf16.msra.mxu0 %v1297
    %2673 = vmatprep.subr.bf16.mxu0 %v1304
    %2674 = vmatpush1.bf16.msra.mxu0 %v1303
    %2675 = vmatprep.subr.bf16.mxu0 %v1310
    %2676 = vmatpush1.bf16.msra.mxu0 %v1309
    %2677 = vmatprep.subr.bf16.mxu0 %v1316
    %2678 = vmatpush1.bf16.msra.mxu0 %v1315
    %2679 = vmatprep.subr.bf16.mxu0 %v1322
    %2680 = vmatpush1.bf16.msra.mxu0 %v1321
    %2681 = vmatprep.subr.bf16.mxu0 %v1328
    %2682 = vmatpush1.bf16.msra.mxu0 %v1327
    %2683 = vmatprep.mubr.bf16.mxu0 %v2609
    %2684 = vmatmul.mubr.bf16.gmra.mrb[0].mxu0 %v2608
    %v2685 = vpop.f32.mrb[0].mxu0
    %v2686 = vadd.f32 0.0, %v2685
    %v2687 = vpop.f32.mrb[0].mxu0
    %v2688 = vadd.f32 0.0, %v2687
    %v2689 = vpop.f32.mrb[0].mxu0
    %v2690 = vpop.f32.mrb[0].mxu0
    %2691 = vdwg.mxu0
    %2692 = vmatprep.subr.bf16.mxu0 %v1240
    %2693 = vmatpush1.bf16.msra.mxu0 %v1239
    %2694 = vmatprep.subr.bf16.mxu0 %v1246
    %2695 = vmatpush1.bf16.msra.mxu0 %v1245
    %2696 = vmatprep.subr.bf16.mxu0 %v1252
    %2697 = vmatpush1.bf16.msra.mxu0 %v1251
    %2698 = vmatprep.subr.bf16.mxu0 %v1258
    %2699 = vmatpush1.bf16.msra.mxu0 %v1257
    %2700 = vmatprep.subr.bf16.mxu0 %v1264
    %2701 = vmatpush1.bf16.msra.mxu0 %v1263
    %2702 = vmatprep.subr.bf16.mxu0 %v1270
    %2703 = vmatpush1.bf16.msra.mxu0 %v1269
    %2704 = vmatprep.subr.bf16.mxu0 %v1276
    %2705 = vmatpush1.bf16.msra.mxu0 %v1275
    %2706 = vmatprep.subr.bf16.mxu0 %v1282
    %2707 = vmatpush1.bf16.msra.mxu0 %v1281
    %2708 = vmatprep.subr.bf16.mxu0 %v1288
    %2709 = vmatpush1.bf16.msra.mxu0 %v1287
    %2710 = vmatprep.subr.bf16.mxu0 %v1294
    %2711 = vmatpush1.bf16.msra.mxu0 %v1293
    %2712 = vmatprep.subr.bf16.mxu0 %v1300
    %2713 = vmatpush1.bf16.msra.mxu0 %v1299
    %2714 = vmatprep.subr.bf16.mxu0 %v1306
    %2715 = vmatpush1.bf16.msra.mxu0 %v1305
    %2716 = vmatprep.subr.bf16.mxu0 %v1312
    %2717 = vmatpush1.bf16.msra.mxu0 %v1311
    %2718 = vmatprep.subr.bf16.mxu0 %v1318
    %2719 = vmatpush1.bf16.msra.mxu0 %v1317
    %2720 = vmatprep.subr.bf16.mxu0 %v1324
    %2721 = vmatpush1.bf16.msra.mxu0 %v1323
    %2722 = vmatprep.subr.bf16.mxu0 %v1330
    %2723 = vmatpush1.bf16.msra.mxu0 %v1329
    %2724 = vmatprep.mubr.bf16.mxu0 %v2609
    %2725 = vmatmul.mubr.bf16.gmra.mrb[0].mxu0 %v2608
    %v2726 = vpop.f32.mrb[0].mxu0
    %v2727 = vadd.f32 0.0, %v2726
    %v2728 = vpop.f32.mrb[0].mxu0
    %v2729 = vadd.f32 0.0, %v2728
    %v2730 = vpop.f32.mrb[0].mxu0
    %v2731 = vpop.f32.mrb[0].mxu0
    %2732 = vdwg.mxu0
    %v2733 = vadd.f32 %v516, %v2645
    %v2734 = vadd.f32 %v518, %v2647
    %v2735 = vxor.u32 %v2733, 2147483648
    %v2736 = vxor.u32 %v2734, 2147483648
    %v2737 = vmul.f32 %v2735, 1.442695
    %v2738 = vpow.pop %v2737
    %v2739 = vmul.f32 %v2736, 1.442695
    %v2740 = vpow.pop %v2739
    %v2741 = vadd.f32 %v2738, 1.0
    %v2742 = vadd.f32 %v2740, 1.0
    %v2743 = vrcp.pop %v2741
    %v2744 = vmul.f32 1.0, %v2743
    %v2745 = vrcp.pop %v2742
    %v2746 = vmul.f32 1.0, %v2745
    %v2747 = vadd.f32 %v589, %v2686
    %v2748 = vadd.f32 %v591, %v2688
    %v2749 = vxor.u32 %v2747, 2147483648
    %v2750 = vxor.u32 %v2748, 2147483648
    %v2751 = vmul.f32 %v2749, 1.442695
    %v2752 = vpow.pop %v2751
    %v2753 = vmul.f32 %v2750, 1.442695
    %v2754 = vpow.pop %v2753
    %v2755 = vadd.f32 %v2752, 1.0
    %v2756 = vadd.f32 %v2754, 1.0
    %v2757 = vrcp.pop %v2755
    %v2758 = vmul.f32 1.0, %v2757
    %v2759 = vrcp.pop %v2756
    %v2760 = vmul.f32 1.0, %v2759
    %v2761 = vadd.f32 %v2727, %v935
    %v2762 = vadd.f32 %v2729, %v939
    %v2763 = vmul.f32 %v2744, %v2761
    %v2764 = vmul.f32 %v2746, %v2762
    %v2765 = vadd.f32 %v662, %v2763
    %v2766 = vadd.f32 %v664, %v2764
    %v2767 = vtanh.pop %v2765
    %v2768 = vtanh.pop %v2766
    %v2769 = vsub.f32 1.0, %v2758
    %v2770 = vsub.f32 1.0, %v2760
    %v2771 = vmul.f32 %v2769, %v2767
    %v2772 = vmul.f32 %v2770, %v2768
    %v2773 = vmul.f32 %v2758, %v2606
    %v2774 = vmul.f32 %v2760, %v2607
    %v2775 = vadd.f32 %v2771, %v2773
    %v2776 = vadd.f32 %v2772, %v2774
    %v2777 = vpack.c.bf16 %v2775, %v2775
    %v2778 = vld [vmem:[#allocation7] sm:$0xf]
    %v2779 = vld [vmem:[#allocation7 + $0x4] sm:$0xf]
    %v2780 = vld [vmem:[#allocation7 + $0x8] sm:$0xf]
    %v2781 = vld [vmem:[#allocation7 + $0xc] sm:$0xf]
    %v2782 = vld [vmem:[#allocation7 + $0x10] sm:$0xf]
    %v2783 = vld [vmem:[#allocation7 + $0x14] sm:$0xf]
    %v2784 = vld [vmem:[#allocation7 + $0x18] sm:$0xf]
    %v2785 = vld [vmem:[#allocation7 + $0x1c] sm:$0xf]
    %v2786 = vld [vmem:[#allocation7 + $0x20] sm:$0xf]
    %v2787 = vld [vmem:[#allocation7 + $0x24] sm:$0xf]
    %v2788 = vld [vmem:[#allocation7 + $0x28] sm:$0xf]
    %v2789 = vld [vmem:[#allocation7 + $0x2c] sm:$0xf]
    %v2790 = vld [vmem:[#allocation7 + $0x30] sm:$0xf]
    %v2791 = vld [vmem:[#allocation7 + $0x34] sm:$0xf]
    %v2792 = vld [vmem:[#allocation7 + $0x38] sm:$0xf]
    %v2793 = vld [vmem:[#allocation7 + $0x3c] sm:$0xf]
    %v2794 = vld [vmem:[%s6] sm:$0x1]
    %v2796 = vlaneseq
    %v2797 = vshrl.u32 %v2796, 7
    %v2798 = vsub.s32 0, %v2797
    %v2799 = vrot.slane %v2794, %v2798
    %v2817 = vunpack.c.l.b16 %v2778
    %v2818 = vunpack.c.l.b16 %v2779
    %v2819 = vunpack.c.l.b16 %v2780
    %v2820 = vunpack.c.l.b16 %v2781
    %v2821 = vunpack.c.l.b16 %v2782
    %v2822 = vunpack.c.l.b16 %v2783
    %v2823 = vunpack.c.l.b16 %v2784
    %v2824 = vunpack.c.l.b16 %v2785
    %v2825 = vunpack.c.l.b16 %v2786
    %v2826 = vunpack.c.l.b16 %v2787
    %v2827 = vunpack.c.l.b16 %v2788
    %v2828 = vunpack.c.l.b16 %v2789
    %v2829 = vunpack.c.l.b16 %v2790
    %v2830 = vunpack.c.l.b16 %v2791
    %v2831 = vunpack.c.l.b16 %v2792
    %v2832 = vunpack.c.l.b16 %v2793
    %v2833 = vpack.c.b16 %v2818, %v2817
    %v2834 = vpack.c.b16 %v2820, %v2819
    %v2835 = vpack.c.b16 %v2822, %v2821
    %v2836 = vpack.c.b16 %v2824, %v2823
    %v2837 = vpack.c.b16 %v2826, %v2825
    %v2838 = vpack.c.b16 %v2828, %v2827
    %v2839 = vpack.c.b16 %v2830, %v2829
    %v2840 = vpack.c.b16 %v2832, %v2831
    %2849 = vmatprep.subr.bf16.mxu0 0
    %2850 = vmatpush1.bf16.msra.mxu0 %v2833
    %2851 = vmatprep.subr.bf16.mxu0 0
    %2852 = vmatpush1.bf16.msra.mxu0 %v2834
    %2853 = vmatprep.subr.bf16.mxu0 0
    %2854 = vmatpush1.bf16.msra.mxu0 %v2835
    %2855 = vmatprep.subr.bf16.mxu0 0
    %2856 = vmatpush1.bf16.msra.mxu0 %v2836
    %2857 = vmatprep.subr.bf16.mxu0 0
    %2858 = vmatpush1.bf16.msra.mxu0 %v2837
    %2859 = vmatprep.subr.bf16.mxu0 0
    %2860 = vmatpush1.bf16.msra.mxu0 %v2838
    %2861 = vmatprep.subr.bf16.mxu0 0
    %2862 = vmatpush1.bf16.msra.mxu0 %v2839
    %2863 = vmatprep.subr.bf16.mxu0 0
    %2864 = vmatpush1.bf16.msra.mxu0 %v2840
    %2865 = vmatprep.subr.bf16.mxu0 0
    %2866 = vmatpush1.bf16.msra.mxu0 0
    %2867 = vmatprep.subr.bf16.mxu0 0
    %2868 = vmatpush1.bf16.msra.mxu0 0
    %2869 = vmatprep.subr.bf16.mxu0 0
    %2870 = vmatpush1.bf16.msra.mxu0 0
    %2871 = vmatprep.subr.bf16.mxu0 0
    %2872 = vmatpush1.bf16.msra.mxu0 0
    %2873 = vmatprep.subr.bf16.mxu0 0
    %2874 = vmatpush1.bf16.msra.mxu0 0
    %2875 = vmatprep.subr.bf16.mxu0 0
    %2876 = vmatpush1.bf16.msra.mxu0 0
    %2877 = vmatprep.subr.bf16.mxu0 0
    %2878 = vmatpush1.bf16.msra.mxu0 0
    %2879 = vmatprep.subr.bf16.mxu0 0
    %2880 = vmatpush1.bf16.msra.mxu0 0
    %2881 = vmatprep.mubr.bf16.mxu0 0
    %2882 = vmatmul.mubr.bf16.gmra.mrb[0].mxu0 %v2777
    %v2883 = vpop.f32.mrb[0].mxu0
    %v2884 = vadd.f32 %v2799, %v2883
    %v2885 = vpop.f32.mrb[0].mxu0
    %v2886 = vpop.f32.mrb[0].mxu0
    %v2887 = vpop.f32.mrb[0].mxu0
    %2888 = vdwg.mxu0
    %v2889 = vtanh.pop %v2884
    %v2890 = vpack.c.bf16 %v2776, %v2776
    %s2891 = scalar_lea.vmem [#allocation7], 64
    %v2892 = vld [vmem:[%s2891] sm:$0xf]
    %v2893 = vld [vmem:[%s2891 + $0x4] sm:$0xf]
    %v2894 = vld [vmem:[%s2891 + $0x8] sm:$0xf]
    %v2895 = vld [vmem:[%s2891 + $0xc] sm:$0xf]
    %v2896 = vld [vmem:[%s2891 + $0x10] sm:$0xf]
    %v2897 = vld [vmem:[%s2891 + $0x14] sm:$0xf]
    %v2898 = vld [vmem:[%s2891 + $0x18] sm:$0xf]
    %v2899 = vld [vmem:[%s2891 + $0x1c] sm:$0xf]
    %v2900 = vld [vmem:[%s2891 + $0x20] sm:$0xf]
    %v2901 = vld [vmem:[%s2891 + $0x24] sm:$0xf]
    %v2902 = vld [vmem:[%s2891 + $0x28] sm:$0xf]
    %v2903 = vld [vmem:[%s2891 + $0x2c] sm:$0xf]
    %v2904 = vld [vmem:[%s2891 + $0x30] sm:$0xf]
    %v2905 = vld [vmem:[%s2891 + $0x34] sm:$0xf]
    %v2906 = vld [vmem:[%s2891 + $0x38] sm:$0xf]
    %v2907 = vld [vmem:[%s2891 + $0x3c] sm:$0xf]
    %s2908 = scalar_lea.vmem %s6, 1
    %v2909 = vld [vmem:[%s2908] sm:$0x1]
    %v2911 = vlaneseq
    %v2912 = vshrl.u32 %v2911, 7
    %v2913 = vsub.s32 0, %v2912
    %v2914 = vrot.slane %v2909, %v2913
    %v2932 = vunpack.c.l.b16 %v2892
    %v2933 = vunpack.c.l.b16 %v2893
    %v2934 = vunpack.c.l.b16 %v2894
    %v2935 = vunpack.c.l.b16 %v2895
    %v2936 = vunpack.c.l.b16 %v2896
    %v2937 = vunpack.c.l.b16 %v2897
    %v2938 = vunpack.c.l.b16 %v2898
    %v2939 = vunpack.c.l.b16 %v2899
    %v2940 = vunpack.c.l.b16 %v2900
    %v2941 = vunpack.c.l.b16 %v2901
    %v2942 = vunpack.c.l.b16 %v2902
    %v2943 = vunpack.c.l.b16 %v2903
    %v2944 = vunpack.c.l.b16 %v2904
    %v2945 = vunpack.c.l.b16 %v2905
    %v2946 = vunpack.c.l.b16 %v2906
    %v2947 = vunpack.c.l.b16 %v2907
    %v2948 = vpack.c.b16 %v2933, %v2932
    %v2949 = vpack.c.b16 %v2935, %v2934
    %v2950 = vpack.c.b16 %v2937, %v2936
    %v2951 = vpack.c.b16 %v2939, %v2938
    %v2952 = vpack.c.b16 %v2941, %v2940
    %v2953 = vpack.c.b16 %v2943, %v2942
    %v2954 = vpack.c.b16 %v2945, %v2944
    %v2955 = vpack.c.b16 %v2947, %v2946
    %2964 = vmatprep.subr.bf16.mxu0 0
    %2965 = vmatpush1.bf16.msra.mxu0 %v2948
    %2966 = vmatprep.subr.bf16.mxu0 0
    %2967 = vmatpush1.bf16.msra.mxu0 %v2949
    %2968 = vmatprep.subr.bf16.mxu0 0
    %2969 = vmatpush1.bf16.msra.mxu0 %v2950
    %2970 = vmatprep.subr.bf16.mxu0 0
    %2971 = vmatpush1.bf16.msra.mxu0 %v2951
    %2972 = vmatprep.subr.bf16.mxu0 0
    %2973 = vmatpush1.bf16.msra.mxu0 %v2952
    %2974 = vmatprep.subr.bf16.mxu0 0
    %2975 = vmatpush1.bf16.msra.mxu0 %v2953
    %2976 = vmatprep.subr.bf16.mxu0 0
    %2977 = vmatpush1.bf16.msra.mxu0 %v2954
    %2978 = vmatprep.subr.bf16.mxu0 0
    %2979 = vmatpush1.bf16.msra.mxu0 %v2955
    %2980 = vmatprep.subr.bf16.mxu0 0
    %2981 = vmatpush1.bf16.msra.mxu0 0
    %2982 = vmatprep.subr.bf16.mxu0 0
    %2983 = vmatpush1.bf16.msra.mxu0 0
    %2984 = vmatprep.subr.bf16.mxu0 0
    %2985 = vmatpush1.bf16.msra.mxu0 0
    %2986 = vmatprep.subr.bf16.mxu0 0
    %2987 = vmatpush1.bf16.msra.mxu0 0
    %2988 = vmatprep.subr.bf16.mxu0 0
    %2989 = vmatpush1.bf16.msra.mxu0 0
    %2990 = vmatprep.subr.bf16.mxu0 0
    %2991 = vmatpush1.bf16.msra.mxu0 0
    %2992 = vmatprep.subr.bf16.mxu0 0
    %2993 = vmatpush1.bf16.msra.mxu0 0
    %2994 = vmatprep.subr.bf16.mxu0 0
    %2995 = vmatpush1.bf16.msra.mxu0 0
    %2996 = vmatprep.mubr.bf16.mxu0 0
    %2997 = vmatmul.mubr.bf16.gmra.mrb[0].mxu0 %v2890
    %v2998 = vpop.f32.mrb[0].mxu0
    %v2999 = vadd.f32 %v2914, %v2998
    %v3000 = vpop.f32.mrb[0].mxu0
    %v3001 = vpop.f32.mrb[0].mxu0
    %v3002 = vpop.f32.mrb[0].mxu0
    %3003 = vdwg.mxu0
    %v3004 = vtanh.pop %v2999
    %v3005 = vpack.c.bf16 %v3004, %v3004
    %s3006 = scalar_lea.vmem [#allocation7], 128
    %v3007 = vld [vmem:[%s3006] sm:$0xf]
    %v3008 = vld [vmem:[%s3006 + $0x4] sm:$0xf]
    %v3009 = vld [vmem:[%s3006 + $0x8] sm:$0xf]
    %v3010 = vld [vmem:[%s3006 + $0xc] sm:$0xf]
    %v3011 = vld [vmem:[%s3006 + $0x10] sm:$0xf]
    %v3012 = vld [vmem:[%s3006 + $0x14] sm:$0xf]
    %v3013 = vld [vmem:[%s3006 + $0x18] sm:$0xf]
    %v3014 = vld [vmem:[%s3006 + $0x1c] sm:$0xf]
    %v3015 = vld [vmem:[%s3006 + $0x20] sm:$0xf]
    %v3016 = vld [vmem:[%s3006 + $0x24] sm:$0xf]
    %v3017 = vld [vmem:[%s3006 + $0x28] sm:$0xf]
    %v3018 = vld [vmem:[%s3006 + $0x2c] sm:$0xf]
    %v3019 = vld [vmem:[%s3006 + $0x30] sm:$0xf]
    %v3020 = vld [vmem:[%s3006 + $0x34] sm:$0xf]
    %v3021 = vld [vmem:[%s3006 + $0x38] sm:$0xf]
    %v3022 = vld [vmem:[%s3006 + $0x3c] sm:$0xf]
    %s3023 = scalar_lea.vmem %s6, 2
    %v3024 = vld [vmem:[%s3023] sm:$0x1]
    %v3026 = vlaneseq
    %v3027 = vshrl.u32 %v3026, 7
    %v3028 = vsub.s32 0, %v3027
    %v3029 = vrot.slane %v3024, %v3028
    %v3047 = vunpack.c.l.b16 %v3007
    %v3048 = vunpack.c.l.b16 %v3008
    %v3049 = vunpack.c.l.b16 %v3009
    %v3050 = vunpack.c.l.b16 %v3010
    %v3051 = vunpack.c.l.b16 %v3011
    %v3052 = vunpack.c.l.b16 %v3012
    %v3053 = vunpack.c.l.b16 %v3013
    %v3054 = vunpack.c.l.b16 %v3014
    %v3055 = vunpack.c.l.b16 %v3015
    %v3056 = vunpack.c.l.b16 %v3016
    %v3057 = vunpack.c.l.b16 %v3017
    %v3058 = vunpack.c.l.b16 %v3018
    %v3059 = vunpack.c.l.b16 %v3019
    %v3060 = vunpack.c.l.b16 %v3020
    %v3061 = vunpack.c.l.b16 %v3021
    %v3062 = vunpack.c.l.b16 %v3022
    %v3063 = vpack.c.b16 %v3048, %v3047
    %v3064 = vpack.c.b16 %v3050, %v3049
    %v3065 = vpack.c.b16 %v3052, %v3051
    %v3066 = vpack.c.b16 %v3054, %v3053
    %v3067 = vpack.c.b16 %v3056, %v3055
    %v3068 = vpack.c.b16 %v3058, %v3057
    %v3069 = vpack.c.b16 %v3060, %v3059
    %v3070 = vpack.c.b16 %v3062, %v3061
    %3079 = vmatprep.subr.bf16.mxu0 0
    %3080 = vmatpush1.bf16.msra.mxu0 %v3063
    %3081 = vmatprep.subr.bf16.mxu0 0
    %3082 = vmatpush1.bf16.msra.mxu0 %v3064
    %3083 = vmatprep.subr.bf16.mxu0 0
    %3084 = vmatpush1.bf16.msra.mxu0 %v3065
    %3085 = vmatprep.subr.bf16.mxu0 0
    %3086 = vmatpush1.bf16.msra.mxu0 %v3066
    %3087 = vmatprep.subr.bf16.mxu0 0
    %3088 = vmatpush1.bf16.msra.mxu0 %v3067
    %3089 = vmatprep.subr.bf16.mxu0 0
    %3090 = vmatpush1.bf16.msra.mxu0 %v3068
    %3091 = vmatprep.subr.bf16.mxu0 0
    %3092 = vmatpush1.bf16.msra.mxu0 %v3069
    %3093 = vmatprep.subr.bf16.mxu0 0
    %3094 = vmatpush1.bf16.msra.mxu0 %v3070
    %3095 = vmatprep.subr.bf16.mxu0 0
    %3096 = vmatpush1.bf16.msra.mxu0 0
    %3097 = vmatprep.subr.bf16.mxu0 0
    %3098 = vmatpush1.bf16.msra.mxu0 0
    %3099 = vmatprep.subr.bf16.mxu0 0
    %3100 = vmatpush1.bf16.msra.mxu0 0
    %3101 = vmatprep.subr.bf16.mxu0 0
    %3102 = vmatpush1.bf16.msra.mxu0 0
    %3103 = vmatprep.subr.bf16.mxu0 0
    %3104 = vmatpush1.bf16.msra.mxu0 0
    %3105 = vmatprep.subr.bf16.mxu0 0
    %3106 = vmatpush1.bf16.msra.mxu0 0
    %3107 = vmatprep.subr.bf16.mxu0 0
    %3108 = vmatpush1.bf16.msra.mxu0 0
    %3109 = vmatprep.subr.bf16.mxu0 0
    %3110 = vmatpush1.bf16.msra.mxu0 0
    %3111 = vmatprep.mubr.bf16.mxu0 0
    %3112 = vmatmul.mubr.bf16.gmra.mrb[0].mxu0 %v3005
    %v3113 = vpop.f32.mrb[0].mxu0
    %v3114 = vadd.f32 %v3029, %v3113
    %v3115 = vpop.f32.mrb[0].mxu0
    %v3116 = vpop.f32.mrb[0].mxu0
    %v3117 = vpop.f32.mrb[0].mxu0
    %3118 = vdwg.mxu0
    %v3119 = vmax.f32 %v3114, 0.0
    %v3120 = vpack.c.bf16 %v3119, %v3119
    %s3121 = scalar_lea.vmem [#allocation7], 192
    %v3122 = vld [vmem:[%s3121] sm:$0xf]
    %v3123 = vld [vmem:[%s3121 + $0x4] sm:$0xf]
    %v3124 = vld [vmem:[%s3121 + $0x8] sm:$0xf]
    %v3125 = vld [vmem:[%s3121 + $0xc] sm:$0xf]
    %v3126 = vld [vmem:[%s3121 + $0x10] sm:$0xf]
    %v3127 = vld [vmem:[%s3121 + $0x14] sm:$0xf]
    %v3128 = vld [vmem:[%s3121 + $0x18] sm:$0xf]
    %v3129 = vld [vmem:[%s3121 + $0x1c] sm:$0xf]
    %v3130 = vld [vmem:[%s3121 + $0x20] sm:$0xf]
    %v3131 = vld [vmem:[%s3121 + $0x24] sm:$0xf]
    %v3132 = vld [vmem:[%s3121 + $0x28] sm:$0xf]
    %v3133 = vld [vmem:[%s3121 + $0x2c] sm:$0xf]
    %v3134 = vld [vmem:[%s3121 + $0x30] sm:$0xf]
    %v3135 = vld [vmem:[%s3121 + $0x34] sm:$0xf]
    %v3136 = vld [vmem:[%s3121 + $0x38] sm:$0xf]
    %v3137 = vld [vmem:[%s3121 + $0x3c] sm:$0xf]
    %s3138 = scalar_lea.vmem %s6, 3
    %v3139 = vld [vmem:[%s3138] sm:$0x1]
    %v3141 = vlaneseq
    %v3142 = vshrl.u32 %v3141, 7
    %v3143 = vsub.s32 0, %v3142
    %v3144 = vrot.slane %v3139, %v3143
    %v3162 = vunpack.c.l.b16 %v3122
    %v3163 = vunpack.c.l.b16 %v3123
    %v3164 = vunpack.c.l.b16 %v3124
    %v3165 = vunpack.c.l.b16 %v3125
    %v3166 = vunpack.c.l.b16 %v3126
    %v3167 = vunpack.c.l.b16 %v3127
    %v3168 = vunpack.c.l.b16 %v3128
    %v3169 = vunpack.c.l.b16 %v3129
    %v3170 = vunpack.c.l.b16 %v3130
    %v3171 = vunpack.c.l.b16 %v3131
    %v3172 = vunpack.c.l.b16 %v3132
    %v3173 = vunpack.c.l.b16 %v3133
    %v3174 = vunpack.c.l.b16 %v3134
    %v3175 = vunpack.c.l.b16 %v3135
    %v3176 = vunpack.c.l.b16 %v3136
    %v3177 = vunpack.c.l.b16 %v3137
    %v3178 = vpack.c.b16 %v3163, %v3162
    %v3179 = vpack.c.b16 %v3165, %v3164
    %v3180 = vpack.c.b16 %v3167, %v3166
    %v3181 = vpack.c.b16 %v3169, %v3168
    %v3182 = vpack.c.b16 %v3171, %v3170
    %v3183 = vpack.c.b16 %v3173, %v3172
    %v3184 = vpack.c.b16 %v3175, %v3174
    %v3185 = vpack.c.b16 %v3177, %v3176
    %3194 = vmatprep.subr.bf16.mxu0 0
    %3195 = vmatpush1.bf16.msra.mxu0 %v3178
    %3196 = vmatprep.subr.bf16.mxu0 0
    %3197 = vmatpush1.bf16.msra.mxu0 %v3179
    %3198 = vmatprep.subr.bf16.mxu0 0
    %3199 = vmatpush1.bf16.msra.mxu0 %v3180
    %3200 = vmatprep.subr.bf16.mxu0 0
    %3201 = vmatpush1.bf16.msra.mxu0 %v3181
    %3202 = vmatprep.subr.bf16.mxu0 0
    %3203 = vmatpush1.bf16.msra.mxu0 %v3182
    %3204 = vmatprep.subr.bf16.mxu0 0
    %3205 = vmatpush1.bf16.msra.mxu0 %v3183
    %3206 = vmatprep.subr.bf16.mxu0 0
    %3207 = vmatpush1.bf16.msra.mxu0 %v3184
    %3208 = vmatprep.subr.bf16.mxu0 0
    %3209 = vmatpush1.bf16.msra.mxu0 %v3185
    %3210 = vmatprep.subr.bf16.mxu0 0
    %3211 = vmatpush1.bf16.msra.mxu0 0
    %3212 = vmatprep.subr.bf16.mxu0 0
    %3213 = vmatpush1.bf16.msra.mxu0 0
    %3214 = vmatprep.subr.bf16.mxu0 0
    %3215 = vmatpush1.bf16.msra.mxu0 0
    %3216 = vmatprep.subr.bf16.mxu0 0
    %3217 = vmatpush1.bf16.msra.mxu0 0
    %3218 = vmatprep.subr.bf16.mxu0 0
    %3219 = vmatpush1.bf16.msra.mxu0 0
    %3220 = vmatprep.subr.bf16.mxu0 0
    %3221 = vmatpush1.bf16.msra.mxu0 0
    %3222 = vmatprep.subr.bf16.mxu0 0
    %3223 = vmatpush1.bf16.msra.mxu0 0
    %3224 = vmatprep.subr.bf16.mxu0 0
    %3225 = vmatpush1.bf16.msra.mxu0 0
    %3226 = vmatprep.mubr.bf16.mxu0 0
    %3227 = vmatmul.mubr.bf16.gmra.mrb[0].mxu0 %v3120
    %v3228 = vpop.f32.mrb[0].mxu0
    %v3229 = vadd.f32 %v3144, %v3228
    %v3230 = vpop.f32.mrb[0].mxu0
    %v3231 = vpop.f32.mrb[0].mxu0
    %v3232 = vpop.f32.mrb[0].mxu0
    %3233 = vdwg.mxu0
    %3234 = vst [vmem:[%s7] sm:$0xff] %v3229
    %v3235 = vpack.c.bf16 %v2889, %v2889
    %v3268 = vunpack.c.l.b16 %v897
    %v3269 = vunpack.c.h.b16 %v897
    %v3270 = vunpack.c.l.b16 %v898
    %v3271 = vunpack.c.l.b16 %v899
    %v3272 = vunpack.c.h.b16 %v899
    %v3273 = vunpack.c.l.b16 %v900
    %v3274 = vunpack.c.l.b16 %v901
    %v3275 = vunpack.c.h.b16 %v901
    %v3276 = vunpack.c.l.b16 %v902
    %v3277 = vunpack.c.l.b16 %v903
    %v3278 = vunpack.c.h.b16 %v903
    %v3279 = vunpack.c.l.b16 %v904
    %v3280 = vunpack.c.l.b16 %v905
    %v3281 = vunpack.c.h.b16 %v905
    %v3282 = vunpack.c.l.b16 %v906
    %v3283 = vunpack.c.l.b16 %v907
    %v3284 = vunpack.c.h.b16 %v907
    %v3285 = vunpack.c.l.b16 %v908
    %v3286 = vunpack.c.l.b16 %v909
    %v3287 = vunpack.c.h.b16 %v909
    %v3288 = vunpack.c.l.b16 %v910
    %v3289 = vunpack.c.l.b16 %v911
    %v3290 = vunpack.c.h.b16 %v911
    %v3291 = vunpack.c.l.b16 %v912
    %v3292 = vunpack.c.l.b16 %v913
    %v3293 = vunpack.c.h.b16 %v913
    %v3294 = vunpack.c.l.b16 %v914
    %v3295 = vunpack.c.l.b16 %v915
    %v3296 = vunpack.c.h.b16 %v915
    %v3297 = vunpack.c.l.b16 %v916
    %v3298 = vunpack.c.l.b16 %v917
    %v3299 = vunpack.c.h.b16 %v917
    %v3300 = vunpack.c.l.b16 %v918
    %v3301 = vunpack.c.l.b16 %v919
    %v3302 = vunpack.c.h.b16 %v919
    %v3303 = vunpack.c.l.b16 %v920
    %v3304 = vunpack.c.l.b16 %v921
    %v3305 = vunpack.c.h.b16 %v921
    %v3306 = vunpack.c.l.b16 %v922
    %v3307 = vunpack.c.l.b16 %v923
    %v3308 = vunpack.c.h.b16 %v923
    %v3309 = vunpack.c.l.b16 %v924
    %v3310 = vunpack.c.l.b16 %v925
    %v3311 = vunpack.c.h.b16 %v925
    %v3312 = vunpack.c.l.b16 %v926
    %v3313 = vunpack.c.l.b16 %v927
    %v3314 = vunpack.c.h.b16 %v927
    %v3315 = vunpack.c.l.b16 %v928
    %v3316 = vpack.c.b16 %v3271, %v3268
    %v3317 = vpack.c.b16 %v3272, %v3269
    %v3318 = vpack.c.b16 %v3273, %v3270
    %v3319 = vpack.c.b16 %v3277, %v3274
    %v3320 = vpack.c.b16 %v3278, %v3275
    %v3321 = vpack.c.b16 %v3279, %v3276
    %v3322 = vpack.c.b16 %v3283, %v3280
    %v3323 = vpack.c.b16 %v3284, %v3281
    %v3324 = vpack.c.b16 %v3285, %v3282
    %v3325 = vpack.c.b16 %v3289, %v3286
    %v3326 = vpack.c.b16 %v3290, %v3287
    %v3327 = vpack.c.b16 %v3291, %v3288
    %v3328 = vpack.c.b16 %v3295, %v3292
    %v3329 = vpack.c.b16 %v3296, %v3293
    %v3330 = vpack.c.b16 %v3297, %v3294
    %v3331 = vpack.c.b16 %v3301, %v3298
    %v3332 = vpack.c.b16 %v3302, %v3299
    %v3333 = vpack.c.b16 %v3303, %v3300
    %v3334 = vpack.c.b16 %v3307, %v3304
    %v3335 = vpack.c.b16 %v3308, %v3305
    %v3336 = vpack.c.b16 %v3309, %v3306
    %v3337 = vpack.c.b16 %v3313, %v3310
    %v3338 = vpack.c.b16 %v3314, %v3311
    %v3339 = vpack.c.b16 %v3315, %v3312
    %3364 = vmatprep.subr.bf16.mxu0 %v3317
    %3365 = vmatpush1.bf16.msra.mxu0 %v3316
    %3366 = vmatprep.subr.bf16.mxu0 %v3320
    %3367 = vmatpush1.bf16.msra.mxu0 %v3319
    %3368 = vmatprep.subr.bf16.mxu0 %v3323
    %3369 = vmatpush1.bf16.msra.mxu0 %v3322
    %3370 = vmatprep.subr.bf16.mxu0 %v3326
    %3371 = vmatpush1.bf16.msra.mxu0 %v3325
    %3372 = vmatprep.subr.bf16.mxu0 %v3329
    %3373 = vmatpush1.bf16.msra.mxu0 %v3328
    %3374 = vmatprep.subr.bf16.mxu0 %v3332
    %3375 = vmatpush1.bf16.msra.mxu0 %v3331
    %3376 = vmatprep.subr.bf16.mxu0 %v3335
    %3377 = vmatpush1.bf16.msra.mxu0 %v3334
    %3378 = vmatprep.subr.bf16.mxu0 %v3338
    %3379 = vmatpush1.bf16.msra.mxu0 %v3337
    %3380 = vmatprep.subr.bf16.mxu0 0
    %3381 = vmatpush1.bf16.msra.mxu0 0
    %3382 = vmatprep.subr.bf16.mxu0 0
    %3383 = vmatpush1.bf16.msra.mxu0 0
    %3384 = vmatprep.subr.bf16.mxu0 0
    %3385 = vmatpush1.bf16.msra.mxu0 0
    %3386 = vmatprep.subr.bf16.mxu0 0
    %3387 = vmatpush1.bf16.msra.mxu0 0
    %3388 = vmatprep.subr.bf16.mxu0 0
    %3389 = vmatpush1.bf16.msra.mxu0 0
    %3390 = vmatprep.subr.bf16.mxu0 0
    %3391 = vmatpush1.bf16.msra.mxu0 0
    %3392 = vmatprep.subr.bf16.mxu0 0
    %3393 = vmatpush1.bf16.msra.mxu0 0
    %3394 = vmatprep.subr.bf16.mxu0 0
    %3395 = vmatpush1.bf16.msra.mxu0 0
    %3396 = vmatprep.mubr.bf16.mxu0 0
    %3397 = vmatmul.mubr.bf16.gmra.mrb[0].mxu0 %v3235
    %v3398 = vpop.f32.mrb[0].mxu0
    %v3399 = vadd.f32 0.0, %v3398
    %v3400 = vpop.f32.mrb[0].mxu0
    %v3401 = vadd.f32 0.0, %v3400
    %v3402 = vpop.f32.mrb[0].mxu0
    %v3403 = vpop.f32.mrb[0].mxu0
    %3404 = vdwg.mxu0
    %3405 = vmatprep.subr.bf16.mxu0 0
    %3406 = vmatpush1.bf16.msra.mxu0 %v3318
    %3407 = vmatprep.subr.bf16.mxu0 0
    %3408 = vmatpush1.bf16.msra.mxu0 %v3321
    %3409 = vmatprep.subr.bf16.mxu0 0
    %3410 = vmatpush1.bf16.msra.mxu0 %v3324
    %3411 = vmatprep.subr.bf16.mxu0 0
    %3412 = vmatpush1.bf16.msra.mxu0 %v3327
    %3413 = vmatprep.subr.bf16.mxu0 0
    %3414 = vmatpush1.bf16.msra.mxu0 %v3330
    %3415 = vmatprep.subr.bf16.mxu0 0
    %3416 = vmatpush1.bf16.msra.mxu0 %v3333
    %3417 = vmatprep.subr.bf16.mxu0 0
    %3418 = vmatpush1.bf16.msra.mxu0 %v3336
    %3419 = vmatprep.subr.bf16.mxu0 0
    %3420 = vmatpush1.bf16.msra.mxu0 %v3339
    %3421 = vmatprep.subr.bf16.mxu0 0
    %3422 = vmatpush1.bf16.msra.mxu0 0
    %3423 = vmatprep.subr.bf16.mxu0 0
    %3424 = vmatpush1.bf16.msra.mxu0 0
    %3425 = vmatprep.subr.bf16.mxu0 0
    %3426 = vmatpush1.bf16.msra.mxu0 0
    %3427 = vmatprep.subr.bf16.mxu0 0
    %3428 = vmatpush1.bf16.msra.mxu0 0
    %3429 = vmatprep.subr.bf16.mxu0 0
    %3430 = vmatpush1.bf16.msra.mxu0 0
    %3431 = vmatprep.subr.bf16.mxu0 0
    %3432 = vmatpush1.bf16.msra.mxu0 0
    %3433 = vmatprep.subr.bf16.mxu0 0
    %3434 = vmatpush1.bf16.msra.mxu0 0
    %3435 = vmatprep.subr.bf16.mxu0 0
    %3436 = vmatpush1.bf16.msra.mxu0 0
    %3437 = vmatprep.mubr.bf16.mxu0 0
    %3438 = vmatmul.mubr.bf16.gmra.mrb[0].mxu0 %v3235
    %v3439 = vpop.f32.mrb[0].mxu0
    %v3440 = vadd.f32 0.0, %v3439
    %v3441 = vpop.f32.mrb[0].mxu0
    %v3442 = vpop.f32.mrb[0].mxu0
    %v3443 = vpop.f32.mrb[0].mxu0
    %3444 = vdwg.mxu0
    %v3445 = vadd.f32 %v701, %v3399
    %v3446 = vxor.u32 %v3445, 2147483648
    %v3447 = vmul.f32 %v3446, 1.442695
    %v3448 = vpow.pop %v3447
    %v3449 = vadd.f32 %v3448, 1.0
    %v3450 = vrcp.pop %v3449
    %v3451 = vmul.f32 1.0, %v3450
    %v3452 = vadd.f32 %v703, %v3401
    %v3453 = vxor.u32 %v3452, 2147483648
    %v3454 = vmul.f32 %v3453, 1.442695
    %v3455 = vpow.pop %v3454
    %v3456 = vadd.f32 %v3455, 1.0
    %v3457 = vrcp.pop %v3456
    %v3458 = vmul.f32 1.0, %v3457
    %v3459 = vadd.f32 %v3440, %v946
    %v3460 = vmul.f32 %v3451, %v3459
    %v3461 = vadd.f32 %v772, %v3460
    %v3462 = vtanh.pop %v3461
    %v3463 = vsub.f32 1.0, %v3458
    %v3464 = vmul.f32 %v3463, %v3462
    %v3465 = vmul.f32 %v3458, %v2889
    %v3466 = vadd.f32 %v3464, %v3465
    %v3467 = vpack.c.bf16 %v3466, %v3466
    %3468 = vmatprep.subr.bf16.mxu0 %v3317
    %3469 = vmatpush1.bf16.msra.mxu0 %v3316
    %3470 = vmatprep.subr.bf16.mxu0 %v3320
    %3471 = vmatpush1.bf16.msra.mxu0 %v3319
    %3472 = vmatprep.subr.bf16.mxu0 %v3323
    %3473 = vmatpush1.bf16.msra.mxu0 %v3322
    %3474 = vmatprep.subr.bf16.mxu0 %v3326
    %3475 = vmatpush1.bf16.msra.mxu0 %v3325
    %3476 = vmatprep.subr.bf16.mxu0 %v3329
    %3477 = vmatpush1.bf16.msra.mxu0 %v3328
    %3478 = vmatprep.subr.bf16.mxu0 %v3332
    %3479 = vmatpush1.bf16.msra.mxu0 %v3331
    %3480 = vmatprep.subr.bf16.mxu0 %v3335
    %3481 = vmatpush1.bf16.msra.mxu0 %v3334
    %3482 = vmatprep.subr.bf16.mxu0 %v3338
    %3483 = vmatpush1.bf16.msra.mxu0 %v3337
    %3484 = vmatprep.subr.bf16.mxu0 0
    %3485 = vmatpush1.bf16.msra.mxu0 0
    %3486 = vmatprep.subr.bf16.mxu0 0
    %3487 = vmatpush1.bf16.msra.mxu0 0
    %3488 = vmatprep.subr.bf16.mxu0 0
    %3489 = vmatpush1.bf16.msra.mxu0 0
    %3490 = vmatprep.subr.bf16.mxu0 0
    %3491 = vmatpush1.bf16.msra.mxu0 0
    %3492 = vmatprep.subr.bf16.mxu0 0
    %3493 = vmatpush1.bf16.msra.mxu0 0
    %3494 = vmatprep.subr.bf16.mxu0 0
    %3495 = vmatpush1.bf16.msra.mxu0 0
    %3496 = vmatprep.subr.bf16.mxu0 0
    %3497 = vmatpush1.bf16.msra.mxu0 0
    %3498 = vmatprep.subr.bf16.mxu0 0
    %3499 = vmatpush1.bf16.msra.mxu0 0
    %3500 = vmatprep.mubr.bf16.mxu0 0
    %3501 = vmatmul.mubr.bf16.gmra.mrb[0].mxu0 %v3467
    %v3502 = vpop.f32.mrb[0].mxu0
    %v3503 = vadd.f32 0.0, %v3502
    %v3504 = vpop.f32.mrb[0].mxu0
    %v3505 = vadd.f32 0.0, %v3504
    %v3506 = vpop.f32.mrb[0].mxu0
    %v3507 = vpop.f32.mrb[0].mxu0
    %3508 = vdwg.mxu0
    %3509 = vmatprep.subr.bf16.mxu0 0
    %3510 = vmatpush1.bf16.msra.mxu0 %v3318
    %3511 = vmatprep.subr.bf16.mxu0 0
    %3512 = vmatpush1.bf16.msra.mxu0 %v3321
    %3513 = vmatprep.subr.bf16.mxu0 0
    %3514 = vmatpush1.bf16.msra.mxu0 %v3324
    %3515 = vmatprep.subr.bf16.mxu0 0
    %3516 = vmatpush1.bf16.msra.mxu0 %v3327
    %3517 = vmatprep.subr.bf16.mxu0 0
    %3518 = vmatpush1.bf16.msra.mxu0 %v3330
    %3519 = vmatprep.subr.bf16.mxu0 0
    %3520 = vmatpush1.bf16.msra.mxu0 %v3333
    %3521 = vmatprep.subr.bf16.mxu0 0
    %3522 = vmatpush1.bf16.msra.mxu0 %v3336
    %3523 = vmatprep.subr.bf16.mxu0 0
    %3524 = vmatpush1.bf16.msra.mxu0 %v3339
    %3525 = vmatprep.subr.bf16.mxu0 0
    %3526 = vmatpush1.bf16.msra.mxu0 0
    %3527 = vmatprep.subr.bf16.mxu0 0
    %3528 = vmatpush1.bf16.msra.mxu0 0
    %3529 = vmatprep.subr.bf16.mxu0 0
    %3530 = vmatpush1.bf16.msra.mxu0 0
    %3531 = vmatprep.subr.bf16.mxu0 0
    %3532 = vmatpush1.bf16.msra.mxu0 0
    %3533 = vmatprep.subr.bf16.mxu0 0
    %3534 = vmatpush1.bf16.msra.mxu0 0
    %3535 = vmatprep.subr.bf16.mxu0 0
    %3536 = vmatpush1.bf16.msra.mxu0 0
    %3537 = vmatprep.subr.bf16.mxu0 0
    %3538 = vmatpush1.bf16.msra.mxu0 0
    %3539 = vmatprep.subr.bf16.mxu0 0
    %3540 = vmatpush1.bf16.msra.mxu0 0
    %3541 = vmatprep.mubr.bf16.mxu0 0
    %3542 = vmatmul.mubr.bf16.gmra.mrb[0].mxu0 %v3467
    %v3543 = vpop.f32.mrb[0].mxu0
    %v3544 = vadd.f32 0.0, %v3543
    %v3545 = vpop.f32.mrb[0].mxu0
    %v3546 = vpop.f32.mrb[0].mxu0
    %v3547 = vpop.f32.mrb[0].mxu0
    %3548 = vdwg.mxu0
    %v3549 = vadd.f32 %v705, %v3503
    %v3550 = vxor.u32 %v3549, 2147483648
    %v3551 = vmul.f32 %v3550, 1.442695
    %v3552 = vpow.pop %v3551
    %v3553 = vadd.f32 %v3552, 1.0
    %v3554 = vrcp.pop %v3553
    %v3555 = vmul.f32 1.0, %v3554
    %v3556 = vadd.f32 %v707, %v3505
    %v3557 = vxor.u32 %v3556, 2147483648
    %v3558 = vmul.f32 %v3557, 1.442695
    %v3559 = vpow.pop %v3558
    %v3560 = vadd.f32 %v3559, 1.0
    %v3561 = vrcp.pop %v3560
    %v3562 = vmul.f32 1.0, %v3561
    %v3563 = vadd.f32 %v3544, %v946
    %v3564 = vmul.f32 %v3555, %v3563
    %v3565 = vadd.f32 %v775, %v3564
    %v3566 = vtanh.pop %v3565
    %v3567 = vsub.f32 1.0, %v3562
    %v3568 = vmul.f32 %v3567, %v3566
    %v3569 = vmul.f32 %v3562, %v3466
    %v3570 = vadd.f32 %v3568, %v3569
    %v3571 = vpack.c.bf16 %v3570, %v3570
    %3572 = vmatprep.subr.bf16.mxu0 %v3317
    %3573 = vmatpush1.bf16.msra.mxu0 %v3316
    %3574 = vmatprep.subr.bf16.mxu0 %v3320
    %3575 = vmatpush1.bf16.msra.mxu0 %v3319
    %3576 = vmatprep.subr.bf16.mxu0 %v3323
    %3577 = vmatpush1.bf16.msra.mxu0 %v3322
    %3578 = vmatprep.subr.bf16.mxu0 %v3326
    %3579 = vmatpush1.bf16.msra.mxu0 %v3325
    %3580 = vmatprep.subr.bf16.mxu0 %v3329
    %3581 = vmatpush1.bf16.msra.mxu0 %v3328
    %3582 = vmatprep.subr.bf16.mxu0 %v3332
    %3583 = vmatpush1.bf16.msra.mxu0 %v3331
    %3584 = vmatprep.subr.bf16.mxu0 %v3335
    %3585 = vmatpush1.bf16.msra.mxu0 %v3334
    %3586 = vmatprep.subr.bf16.mxu0 %v3338
    %3587 = vmatpush1.bf16.msra.mxu0 %v3337
    %3588 = vmatprep.subr.bf16.mxu0 0
    %3589 = vmatpush1.bf16.msra.mxu0 0
    %3590 = vmatprep.subr.bf16.mxu0 0
    %3591 = vmatpush1.bf16.msra.mxu0 0
    %3592 = vmatprep.subr.bf16.mxu0 0
    %3593 = vmatpush1.bf16.msra.mxu0 0
    %3594 = vmatprep.subr.bf16.mxu0 0
    %3595 = vmatpush1.bf16.msra.mxu0 0
    %3596 = vmatprep.subr.bf16.mxu0 0
    %3597 = vmatpush1.bf16.msra.mxu0 0
    %3598 = vmatprep.subr.bf16.mxu0 0
    %3599 = vmatpush1.bf16.msra.mxu0 0
    %3600 = vmatprep.subr.bf16.mxu0 0
    %3601 = vmatpush1.bf16.msra.mxu0 0
    %3602 = vmatprep.subr.bf16.mxu0 0
    %3603 = vmatpush1.bf16.msra.mxu0 0
    %3604 = vmatprep.mubr.bf16.mxu0 0
    %3605 = vmatmul.mubr.bf16.gmra.mrb[0].mxu0 %v3571
    %v3606 = vpop.f32.mrb[0].mxu0
    %v3607 = vadd.f32 0.0, %v3606
    %v3608 = vpop.f32.mrb[0].mxu0
    %v3609 = vadd.f32 0.0, %v3608
    %v3610 = vpop.f32.mrb[0].mxu0
    %v3611 = vpop.f32.mrb[0].mxu0
    %3612 = vdwg.mxu0
    %3613 = vmatprep.subr.bf16.mxu0 0
    %3614 = vmatpush1.bf16.msra.mxu0 %v3318
    %3615 = vmatprep.subr.bf16.mxu0 0
    %3616 = vmatpush1.bf16.msra.mxu0 %v3321
    %3617 = vmatprep.subr.bf16.mxu0 0
    %3618 = vmatpush1.bf16.msra.mxu0 %v3324
    %3619 = vmatprep.subr.bf16.mxu0 0
    %3620 = vmatpush1.bf16.msra.mxu0 %v3327
    %3621 = vmatprep.subr.bf16.mxu0 0
    %3622 = vmatpush1.bf16.msra.mxu0 %v3330
    %3623 = vmatprep.subr.bf16.mxu0 0
    %3624 = vmatpush1.bf16.msra.mxu0 %v3333
    %3625 = vmatprep.subr.bf16.mxu0 0
    %3626 = vmatpush1.bf16.msra.mxu0 %v3336
    %3627 = vmatprep.subr.bf16.mxu0 0
    %3628 = vmatpush1.bf16.msra.mxu0 %v3339
    %3629 = vmatprep.subr.bf16.mxu0 0
    %3630 = vmatpush1.bf16.msra.mxu0 0
    %3631 = vmatprep.subr.bf16.mxu0 0
    %3632 = vmatpush1.bf16.msra.mxu0 0
    %3633 = vmatprep.subr.bf16.mxu0 0
    %3634 = vmatpush1.bf16.msra.mxu0 0
    %3635 = vmatprep.subr.bf16.mxu0 0
    %3636 = vmatpush1.bf16.msra.mxu0 0
    %3637 = vmatprep.subr.bf16.mxu0 0
    %3638 = vmatpush1.bf16.msra.mxu0 0
    %3639 = vmatprep.subr.bf16.mxu0 0
    %3640 = vmatpush1.bf16.msra.mxu0 0
    %3641 = vmatprep.subr.bf16.mxu0 0
    %3642 = vmatpush1.bf16.msra.mxu0 0
    %3643 = vmatprep.subr.bf16.mxu0 0
    %3644 = vmatpush1.bf16.msra.mxu0 0
    %3645 = vmatprep.mubr.bf16.mxu0 0
    %3646 = vmatmul.mubr.bf16.gmra.mrb[0].mxu0 %v3571
    %v3647 = vpop.f32.mrb[0].mxu0
    %v3648 = vadd.f32 0.0, %v3647
    %v3649 = vpop.f32.mrb[0].mxu0
    %v3650 = vpop.f32.mrb[0].mxu0
    %v3651 = vpop.f32.mrb[0].mxu0
    %3652 = vdwg.mxu0
    %v3653 = vadd.f32 %v711, %v3607
    %v3654 = vxor.u32 %v3653, 2147483648
    %v3655 = vmul.f32 %v3654, 1.442695
    %v3656 = vpow.pop %v3655
    %v3657 = vadd.f32 %v3656, 1.0
    %v3658 = vrcp.pop %v3657
    %v3659 = vmul.f32 1.0, %v3658
    %v3660 = vadd.f32 %v713, %v3609
    %v3661 = vxor.u32 %v3660, 2147483648
    %v3662 = vmul.f32 %v3661, 1.442695
    %v3663 = vpow.pop %v3662
    %v3664 = vadd.f32 %v3663, 1.0
    %v3665 = vrcp.pop %v3664
    %v3666 = vmul.f32 1.0, %v3665
    %v3667 = vadd.f32 %v3648, %v946
    %v3668 = vmul.f32 %v3659, %v3667
    %v3669 = vadd.f32 %v780, %v3668
    %v3670 = vtanh.pop %v3669
    %v3671 = vsub.f32 1.0, %v3666
    %v3672 = vmul.f32 %v3671, %v3670
    %v3673 = vmul.f32 %v3666, %v3570
    %v3674 = vadd.f32 %v3672, %v3673
    %v3675 = vpack.c.bf16 %v3674, %v3674
    %3676 = vmatprep.subr.bf16.mxu0 %v3317
    %3677 = vmatpush1.bf16.msra.mxu0 %v3316
    %3678 = vmatprep.subr.bf16.mxu0 %v3320
    %3679 = vmatpush1.bf16.msra.mxu0 %v3319
    %3680 = vmatprep.subr.bf16.mxu0 %v3323
    %3681 = vmatpush1.bf16.msra.mxu0 %v3322
    %3682 = vmatprep.subr.bf16.mxu0 %v3326
    %3683 = vmatpush1.bf16.msra.mxu0 %v3325
    %3684 = vmatprep.subr.bf16.mxu0 %v3329
    %3685 = vmatpush1.bf16.msra.mxu0 %v3328
    %3686 = vmatprep.subr.bf16.mxu0 %v3332
    %3687 = vmatpush1.bf16.msra.mxu0 %v3331
    %3688 = vmatprep.subr.bf16.mxu0 %v3335
    %3689 = vmatpush1.bf16.msra.mxu0 %v3334
    %3690 = vmatprep.subr.bf16.mxu0 %v3338
    %3691 = vmatpush1.bf16.msra.mxu0 %v3337
    %3692 = vmatprep.subr.bf16.mxu0 0
    %3693 = vmatpush1.bf16.msra.mxu0 0
    %3694 = vmatprep.subr.bf16.mxu0 0
    %3695 = vmatpush1.bf16.msra.mxu0 0
    %3696 = vmatprep.subr.bf16.mxu0 0
    %3697 = vmatpush1.bf16.msra.mxu0 0
    %3698 = vmatprep.subr.bf16.mxu0 0
    %3699 = vmatpush1.bf16.msra.mxu0 0
    %3700 = vmatprep.subr.bf16.mxu0 0
    %3701 = vmatpush1.bf16.msra.mxu0 0
    %3702 = vmatprep.subr.bf16.mxu0 0
    %3703 = vmatpush1.bf16.msra.mxu0 0
    %3704 = vmatprep.subr.bf16.mxu0 0
    %3705 = vmatpush1.bf16.msra.mxu0 0
    %3706 = vmatprep.subr.bf16.mxu0 0
    %3707 = vmatpush1.bf16.msra.mxu0 0
    %3708 = vmatprep.mubr.bf16.mxu0 0
    %3709 = vmatmul.mubr.bf16.gmra.mrb[0].mxu0 %v3675
    %v3710 = vpop.f32.mrb[0].mxu0
    %v3711 = vadd.f32 0.0, %v3710
    %v3712 = vpop.f32.mrb[0].mxu0
    %v3713 = vadd.f32 0.0, %v3712
    %v3714 = vpop.f32.mrb[0].mxu0
    %v3715 = vpop.f32.mrb[0].mxu0
    %3716 = vdwg.mxu0
    %3717 = vmatprep.subr.bf16.mxu0 0
    %3718 = vmatpush1.bf16.msra.mxu0 %v3318
    %3719 = vmatprep.subr.bf16.mxu0 0
    %3720 = vmatpush1.bf16.msra.mxu0 %v3321
    %3721 = vmatprep.subr.bf16.mxu0 0
    %3722 = vmatpush1.bf16.msra.mxu0 %v3324
    %3723 = vmatprep.subr.bf16.mxu0 0
    %3724 = vmatpush1.bf16.msra.mxu0 %v3327
    %3725 = vmatprep.subr.bf16.mxu0 0
    %3726 = vmatpush1.bf16.msra.mxu0 %v3330
    %3727 = vmatprep.subr.bf16.mxu0 0
    %3728 = vmatpush1.bf16.msra.mxu0 %v3333
    %3729 = vmatprep.subr.bf16.mxu0 0
    %3730 = vmatpush1.bf16.msra.mxu0 %v3336
    %3731 = vmatprep.subr.bf16.mxu0 0
    %3732 = vmatpush1.bf16.msra.mxu0 %v3339
    %3733 = vmatprep.subr.bf16.mxu0 0
    %3734 = vmatpush1.bf16.msra.mxu0 0
    %3735 = vmatprep.subr.bf16.mxu0 0
    %3736 = vmatpush1.bf16.msra.mxu0 0
    %3737 = vmatprep.subr.bf16.mxu0 0
    %3738 = vmatpush1.bf16.msra.mxu0 0
    %3739 = vmatprep.subr.bf16.mxu0 0
    %3740 = vmatpush1.bf16.msra.mxu0 0
    %3741 = vmatprep.subr.bf16.mxu0 0
    %3742 = vmatpush1.bf16.msra.mxu0 0
    %3743 = vmatprep.subr.bf16.mxu0 0
    %3744 = vmatpush1.bf16.msra.mxu0 0
    %3745 = vmatprep.subr.bf16.mxu0 0
    %3746 = vmatpush1.bf16.msra.mxu0 0
    %3747 = vmatprep.subr.bf16.mxu0 0
    %3748 = vmatpush1.bf16.msra.mxu0 0
    %3749 = vmatprep.mubr.bf16.mxu0 0
    %3750 = vmatmul.mubr.bf16.gmra.mrb[0].mxu0 %v3675
    %v3751 = vpop.f32.mrb[0].mxu0
    %v3752 = vadd.f32 0.0, %v3751
    %v3753 = vpop.f32.mrb[0].mxu0
    %v3754 = vpop.f32.mrb[0].mxu0
    %v3755 = vpop.f32.mrb[0].mxu0
    %3756 = vdwg.mxu0
    %v3757 = vadd.f32 %v715, %v3711
    %v3758 = vxor.u32 %v3757, 2147483648
    %v3759 = vmul.f32 %v3758, 1.442695
    %v3760 = vpow.pop %v3759
    %v3761 = vadd.f32 %v3760, 1.0
    %v3762 = vrcp.pop %v3761
    %v3763 = vmul.f32 1.0, %v3762
    %v3764 = vadd.f32 %v717, %v3713
    %v3765 = vxor.u32 %v3764, 2147483648
    %v3766 = vmul.f32 %v3765, 1.442695
    %v3767 = vpow.pop %v3766
    %v3768 = vadd.f32 %v3767, 1.0
    %v3769 = vrcp.pop %v3768
    %v3770 = vmul.f32 1.0, %v3769
    %v3771 = vadd.f32 %v3752, %v946
    %v3772 = vmul.f32 %v3763, %v3771
    %v3773 = vadd.f32 %v783, %v3772
    %v3774 = vtanh.pop %v3773
    %v3775 = vsub.f32 1.0, %v3770
    %v3776 = vmul.f32 %v3775, %v3774
    %v3777 = vmul.f32 %v3770, %v3674
    %v3778 = vadd.f32 %v3776, %v3777
    %v3779 = vpack.c.bf16 %v3778, %v3778
    %3780 = vmatprep.subr.bf16.mxu0 %v3317
    %3781 = vmatpush1.bf16.msra.mxu0 %v3316
    %3782 = vmatprep.subr.bf16.mxu0 %v3320
    %3783 = vmatpush1.bf16.msra.mxu0 %v3319
    %3784 = vmatprep.subr.bf16.mxu0 %v3323
    %3785 = vmatpush1.bf16.msra.mxu0 %v3322
    %3786 = vmatprep.subr.bf16.mxu0 %v3326
    %3787 = vmatpush1.bf16.msra.mxu0 %v3325
    %3788 = vmatprep.subr.bf16.mxu0 %v3329
    %3789 = vmatpush1.bf16.msra.mxu0 %v3328
    %3790 = vmatprep.subr.bf16.mxu0 %v3332
    %3791 = vmatpush1.bf16.msra.mxu0 %v3331
    %3792 = vmatprep.subr.bf16.mxu0 %v3335
    %3793 = vmatpush1.bf16.msra.mxu0 %v3334
    %3794 = vmatprep.subr.bf16.mxu0 %v3338
    %3795 = vmatpush1.bf16.msra.mxu0 %v3337
    %3796 = vmatprep.subr.bf16.mxu0 0
    %3797 = vmatpush1.bf16.msra.mxu0 0
    %3798 = vmatprep.subr.bf16.mxu0 0
    %3799 = vmatpush1.bf16.msra.mxu0 0
    %3800 = vmatprep.subr.bf16.mxu0 0
    %3801 = vmatpush1.bf16.msra.mxu0 0
    %3802 = vmatprep.subr.bf16.mxu0 0
    %3803 = vmatpush1.bf16.msra.mxu0 0
    %3804 = vmatprep.subr.bf16.mxu0 0
    %3805 = vmatpush1.bf16.msra.mxu0 0
    %3806 = vmatprep.subr.bf16.mxu0 0
    %3807 = vmatpush1.bf16.msra.mxu0 0
    %3808 = vmatprep.subr.bf16.mxu0 0
    %3809 = vmatpush1.bf16.msra.mxu0 0
    %3810 = vmatprep.subr.bf16.mxu0 0
    %3811 = vmatpush1.bf16.msra.mxu0 0
    %3812 = vmatprep.mubr.bf16.mxu0 0
    %3813 = vmatmul.mubr.bf16.gmra.mrb[0].mxu0 %v3779
    %v3814 = vpop.f32.mrb[0].mxu0
    %v3815 = vadd.f32 0.0, %v3814
    %v3816 = vpop.f32.mrb[0].mxu0
    %v3817 = vadd.f32 0.0, %v3816
    %v3818 = vpop.f32.mrb[0].mxu0
    %v3819 = vpop.f32.mrb[0].mxu0
    %3820 = vdwg.mxu0
    %3821 = vmatprep.subr.bf16.mxu0 0
    %3822 = vmatpush1.bf16.msra.mxu0 %v3318
    %3823 = vmatprep.subr.bf16.mxu0 0
    %3824 = vmatpush1.bf16.msra.mxu0 %v3321
    %3825 = vmatprep.subr.bf16.mxu0 0
    %3826 = vmatpush1.bf16.msra.mxu0 %v3324
    %3827 = vmatprep.subr.bf16.mxu0 0
    %3828 = vmatpush1.bf16.msra.mxu0 %v3327
    %3829 = vmatprep.subr.bf16.mxu0 0
    %3830 = vmatpush1.bf16.msra.mxu0 %v3330
    %3831 = vmatprep.subr.bf16.mxu0 0
    %3832 = vmatpush1.bf16.msra.mxu0 %v3333
    %3833 = vmatprep.subr.bf16.mxu0 0
    %3834 = vmatpush1.bf16.msra.mxu0 %v3336
    %3835 = vmatprep.subr.bf16.mxu0 0
    %3836 = vmatpush1.bf16.msra.mxu0 %v3339
    %3837 = vmatprep.subr.bf16.mxu0 0
    %3838 = vmatpush1.bf16.msra.mxu0 0
    %3839 = vmatprep.subr.bf16.mxu0 0
    %3840 = vmatpush1.bf16.msra.mxu0 0
    %3841 = vmatprep.subr.bf16.mxu0 0
    %3842 = vmatpush1.bf16.msra.mxu0 0
    %3843 = vmatprep.subr.bf16.mxu0 0
    %3844 = vmatpush1.bf16.msra.mxu0 0
    %3845 = vmatprep.subr.bf16.mxu0 0
    %3846 = vmatpush1.bf16.msra.mxu0 0
    %3847 = vmatprep.subr.bf16.mxu0 0
    %3848 = vmatpush1.bf16.msra.mxu0 0
    %3849 = vmatprep.subr.bf16.mxu0 0
    %3850 = vmatpush1.bf16.msra.mxu0 0
    %3851 = vmatprep.subr.bf16.mxu0 0
    %3852 = vmatpush1.bf16.msra.mxu0 0
    %3853 = vmatprep.mubr.bf16.mxu0 0
    %3854 = vmatmul.mubr.bf16.gmra.mrb[0].mxu0 %v3779
    %v3855 = vpop.f32.mrb[0].mxu0
    %v3856 = vadd.f32 0.0, %v3855
    %v3857 = vpop.f32.mrb[0].mxu0
    %v3858 = vpop.f32.mrb[0].mxu0
    %v3859 = vpop.f32.mrb[0].mxu0
    %3860 = vdwg.mxu0
    %v3861 = vadd.f32 %v721, %v3815
    %v3862 = vxor.u32 %v3861, 2147483648
    %v3863 = vmul.f32 %v3862, 1.442695
    %v3864 = vpow.pop %v3863
    %v3865 = vadd.f32 %v3864, 1.0
    %v3866 = vrcp.pop %v3865
    %v3867 = vmul.f32 1.0, %v3866
    %v3868 = vadd.f32 %v723, %v3817
    %v3869 = vxor.u32 %v3868, 2147483648
    %v3870 = vmul.f32 %v3869, 1.442695
    %v3871 = vpow.pop %v3870
    %v3872 = vadd.f32 %v3871, 1.0
    %v3873 = vrcp.pop %v3872
    %v3874 = vmul.f32 1.0, %v3873
    %v3875 = vadd.f32 %v3856, %v946
    %v3876 = vmul.f32 %v3867, %v3875
    %v3877 = vadd.f32 %v788, %v3876
    %v3878 = vtanh.pop %v3877
    %v3879 = vsub.f32 1.0, %v3874
    %v3880 = vmul.f32 %v3879, %v3878
    %v3881 = vmul.f32 %v3874, %v3778
    %v3882 = vadd.f32 %v3880, %v3881
    %v3883 = vpack.c.bf16 %v3882, %v3882
    %3884 = vmatprep.subr.bf16.mxu0 %v3317
    %3885 = vmatpush1.bf16.msra.mxu0 %v3316
    %3886 = vmatprep.subr.bf16.mxu0 %v3320
    %3887 = vmatpush1.bf16.msra.mxu0 %v3319
    %3888 = vmatprep.subr.bf16.mxu0 %v3323
    %3889 = vmatpush1.bf16.msra.mxu0 %v3322
    %3890 = vmatprep.subr.bf16.mxu0 %v3326
    %3891 = vmatpush1.bf16.msra.mxu0 %v3325
    %3892 = vmatprep.subr.bf16.mxu0 %v3329
    %3893 = vmatpush1.bf16.msra.mxu0 %v3328
    %3894 = vmatprep.subr.bf16.mxu0 %v3332
    %3895 = vmatpush1.bf16.msra.mxu0 %v3331
    %3896 = vmatprep.subr.bf16.mxu0 %v3335
    %3897 = vmatpush1.bf16.msra.mxu0 %v3334
    %3898 = vmatprep.subr.bf16.mxu0 %v3338
    %3899 = vmatpush1.bf16.msra.mxu0 %v3337
    %3900 = vmatprep.subr.bf16.mxu0 0
    %3901 = vmatpush1.bf16.msra.mxu0 0
    %3902 = vmatprep.subr.bf16.mxu0 0
    %3903 = vmatpush1.bf16.msra.mxu0 0
    %3904 = vmatprep.subr.bf16.mxu0 0
    %3905 = vmatpush1.bf16.msra.mxu0 0
    %3906 = vmatprep.subr.bf16.mxu0 0
    %3907 = vmatpush1.bf16.msra.mxu0 0
    %3908 = vmatprep.subr.bf16.mxu0 0
    %3909 = vmatpush1.bf16.msra.mxu0 0
    %3910 = vmatprep.subr.bf16.mxu0 0
    %3911 = vmatpush1.bf16.msra.mxu0 0
    %3912 = vmatprep.subr.bf16.mxu0 0
    %3913 = vmatpush1.bf16.msra.mxu0 0
    %3914 = vmatprep.subr.bf16.mxu0 0
    %3915 = vmatpush1.bf16.msra.mxu0 0
    %3916 = vmatprep.mubr.bf16.mxu0 0
    %3917 = vmatmul.mubr.bf16.gmra.mrb[0].mxu0 %v3883
    %v3918 = vpop.f32.mrb[0].mxu0
    %v3919 = vadd.f32 0.0, %v3918
    %v3920 = vpop.f32.mrb[0].mxu0
    %v3921 = vadd.f32 0.0, %v3920
    %v3922 = vpop.f32.mrb[0].mxu0
    %v3923 = vpop.f32.mrb[0].mxu0
    %3924 = vdwg.mxu0
    %3925 = vmatprep.subr.bf16.mxu0 0
    %3926 = vmatpush1.bf16.msra.mxu0 %v3318
    %3927 = vmatprep.subr.bf16.mxu0 0
    %3928 = vmatpush1.bf16.msra.mxu0 %v3321
    %3929 = vmatprep.subr.bf16.mxu0 0
    %3930 = vmatpush1.bf16.msra.mxu0 %v3324
    %3931 = vmatprep.subr.bf16.mxu0 0
    %3932 = vmatpush1.bf16.msra.mxu0 %v3327
    %3933 = vmatprep.subr.bf16.mxu0 0
    %3934 = vmatpush1.bf16.msra.mxu0 %v3330
    %3935 = vmatprep.subr.bf16.mxu0 0
    %3936 = vmatpush1.bf16.msra.mxu0 %v3333
    %3937 = vmatprep.subr.bf16.mxu0 0
    %3938 = vmatpush1.bf16.msra.mxu0 %v3336
    %3939 = vmatprep.subr.bf16.mxu0 0
    %3940 = vmatpush1.bf16.msra.mxu0 %v3339
    %3941 = vmatprep.subr.bf16.mxu0 0
    %3942 = vmatpush1.bf16.msra.mxu0 0
    %3943 = vmatprep.subr.bf16.mxu0 0
    %3944 = vmatpush1.bf16.msra.mxu0 0
    %3945 = vmatprep.subr.bf16.mxu0 0
    %3946 = vmatpush1.bf16.msra.mxu0 0
    %3947 = vmatprep.subr.bf16.mxu0 0
    %3948 = vmatpush1.bf16.msra.mxu0 0
    %3949 = vmatprep.subr.bf16.mxu0 0
    %3950 = vmatpush1.bf16.msra.mxu0 0
    %3951 = vmatprep.subr.bf16.mxu0 0
    %3952 = vmatpush1.bf16.msra.mxu0 0
    %3953 = vmatprep.subr.bf16.mxu0 0
    %3954 = vmatpush1.bf16.msra.mxu0 0
    %3955 = vmatprep.subr.bf16.mxu0 0
    %3956 = vmatpush1.bf16.msra.mxu0 0
    %3957 = vmatprep.mubr.bf16.mxu0 0
    %3958 = vmatmul.mubr.bf16.gmra.mrb[0].mxu0 %v3883
    %v3959 = vpop.f32.mrb[0].mxu0
    %v3960 = vadd.f32 0.0, %v3959
    %v3961 = vpop.f32.mrb[0].mxu0
    %v3962 = vpop.f32.mrb[0].mxu0
    %v3963 = vpop.f32.mrb[0].mxu0
    %3964 = vdwg.mxu0
    %v3965 = vadd.f32 %v725, %v3919
    %v3966 = vxor.u32 %v3965, 2147483648
    %v3967 = vmul.f32 %v3966, 1.442695
    %v3968 = vpow.pop %v3967
    %v3969 = vadd.f32 %v3968, 1.0
    %v3970 = vrcp.pop %v3969
    %v3971 = vmul.f32 1.0, %v3970
    %v3972 = vadd.f32 %v727, %v3921
    %v3973 = vxor.u32 %v3972, 2147483648
    %v3974 = vmul.f32 %v3973, 1.442695
    %v3975 = vpow.pop %v3974
    %v3976 = vadd.f32 %v3975, 1.0
    %v3977 = vrcp.pop %v3976
    %v3978 = vmul.f32 1.0, %v3977
    %v3979 = vadd.f32 %v3960, %v946
    %v3980 = vmul.f32 %v3971, %v3979
    %v3981 = vadd.f32 %v791, %v3980
    %v3982 = vtanh.pop %v3981
    %v3983 = vsub.f32 1.0, %v3978
    %v3984 = vmul.f32 %v3983, %v3982
    %v3985 = vmul.f32 %v3978, %v3882
    %v3986 = vadd.f32 %v3984, %v3985
    %v3987 = vpack.c.bf16 %v3986, %v3986
    %3988 = vmatprep.subr.bf16.mxu0 %v3317
    %3989 = vmatpush1.bf16.msra.mxu0 %v3316
    %3990 = vmatprep.subr.bf16.mxu0 %v3320
    %3991 = vmatpush1.bf16.msra.mxu0 %v3319
    %3992 = vmatprep.subr.bf16.mxu0 %v3323
    %3993 = vmatpush1.bf16.msra.mxu0 %v3322
    %3994 = vmatprep.subr.bf16.mxu0 %v3326
    %3995 = vmatpush1.bf16.msra.mxu0 %v3325
    %3996 = vmatprep.subr.bf16.mxu0 %v3329
    %3997 = vmatpush1.bf16.msra.mxu0 %v3328
    %3998 = vmatprep.subr.bf16.mxu0 %v3332
    %3999 = vmatpush1.bf16.msra.mxu0 %v3331
    %4000 = vmatprep.subr.bf16.mxu0 %v3335
    %4001 = vmatpush1.bf16.msra.mxu0 %v3334
    %4002 = vmatprep.subr.bf16.mxu0 %v3338
    %4003 = vmatpush1.bf16.msra.mxu0 %v3337
    %4004 = vmatprep.subr.bf16.mxu0 0
    %4005 = vmatpush1.bf16.msra.mxu0 0
    %4006 = vmatprep.subr.bf16.mxu0 0
    %4007 = vmatpush1.bf16.msra.mxu0 0
    %4008 = vmatprep.subr.bf16.mxu0 0
    %4009 = vmatpush1.bf16.msra.mxu0 0
    %4010 = vmatprep.subr.bf16.mxu0 0
    %4011 = vmatpush1.bf16.msra.mxu0 0
    %4012 = vmatprep.subr.bf16.mxu0 0
    %4013 = vmatpush1.bf16.msra.mxu0 0
    %4014 = vmatprep.subr.bf16.mxu0 0
    %4015 = vmatpush1.bf16.msra.mxu0 0
    %4016 = vmatprep.subr.bf16.mxu0 0
    %4017 = vmatpush1.bf16.msra.mxu0 0
    %4018 = vmatprep.subr.bf16.mxu0 0
    %4019 = vmatpush1.bf16.msra.mxu0 0
    %4020 = vmatprep.mubr.bf16.mxu0 0
    %4021 = vmatmul.mubr.bf16.gmra.mrb[0].mxu0 %v3987
    %v4022 = vpop.f32.mrb[0].mxu0
    %v4023 = vadd.f32 0.0, %v4022
    %v4024 = vpop.f32.mrb[0].mxu0
    %v4025 = vadd.f32 0.0, %v4024
    %v4026 = vpop.f32.mrb[0].mxu0
    %v4027 = vpop.f32.mrb[0].mxu0
    %4028 = vdwg.mxu0
    %4029 = vmatprep.subr.bf16.mxu0 0
    %4030 = vmatpush1.bf16.msra.mxu0 %v3318
    %4031 = vmatprep.subr.bf16.mxu0 0
    %4032 = vmatpush1.bf16.msra.mxu0 %v3321
    %4033 = vmatprep.subr.bf16.mxu0 0
    %4034 = vmatpush1.bf16.msra.mxu0 %v3324
    %4035 = vmatprep.subr.bf16.mxu0 0
    %4036 = vmatpush1.bf16.msra.mxu0 %v3327
    %4037 = vmatprep.subr.bf16.mxu0 0
    %4038 = vmatpush1.bf16.msra.mxu0 %v3330
    %4039 = vmatprep.subr.bf16.mxu0 0
    %4040 = vmatpush1.bf16.msra.mxu0 %v3333
    %4041 = vmatprep.subr.bf16.mxu0 0
    %4042 = vmatpush1.bf16.msra.mxu0 %v3336
    %4043 = vmatprep.subr.bf16.mxu0 0
    %4044 = vmatpush1.bf16.msra.mxu0 %v3339
    %4045 = vmatprep.subr.bf16.mxu0 0
    %4046 = vmatpush1.bf16.msra.mxu0 0
    %4047 = vmatprep.subr.bf16.mxu0 0
    %4048 = vmatpush1.bf16.msra.mxu0 0
    %4049 = vmatprep.subr.bf16.mxu0 0
    %4050 = vmatpush1.bf16.msra.mxu0 0
    %4051 = vmatprep.subr.bf16.mxu0 0
    %4052 = vmatpush1.bf16.msra.mxu0 0
    %4053 = vmatprep.subr.bf16.mxu0 0
    %4054 = vmatpush1.bf16.msra.mxu0 0
    %4055 = vmatprep.subr.bf16.mxu0 0
    %4056 = vmatpush1.bf16.msra.mxu0 0
    %4057 = vmatprep.subr.bf16.mxu0 0
    %4058 = vmatpush1.bf16.msra.mxu0 0
    %4059 = vmatprep.subr.bf16.mxu0 0
    %4060 = vmatpush1.bf16.msra.mxu0 0
    %4061 = vmatprep.mubr.bf16.mxu0 0
    %4062 = vmatmul.mubr.bf16.gmra.mrb[0].mxu0 %v3987
    %v4063 = vpop.f32.mrb[0].mxu0
    %v4064 = vadd.f32 0.0, %v4063
    %v4065 = vpop.f32.mrb[0].mxu0
    %v4066 = vpop.f32.mrb[0].mxu0
    %v4067 = vpop.f32.mrb[0].mxu0
    %4068 = vdwg.mxu0
    %v4069 = vadd.f32 %v731, %v4023
    %v4070 = vxor.u32 %v4069, 2147483648
    %v4071 = vmul.f32 %v4070, 1.442695
    %v4072 = vpow.pop %v4071
    %v4073 = vadd.f32 %v4072, 1.0
    %v4074 = vrcp.pop %v4073
    %v4075 = vmul.f32 1.0, %v4074
    %v4076 = vadd.f32 %v733, %v4025
    %v4077 = vxor.u32 %v4076, 2147483648
    %v4078 = vmul.f32 %v4077, 1.442695
    %v4079 = vpow.pop %v4078
    %v4080 = vadd.f32 %v4079, 1.0
    %v4081 = vrcp.pop %v4080
    %v4082 = vmul.f32 1.0, %v4081
    %v4083 = vadd.f32 %v4064, %v946
    %v4084 = vmul.f32 %v4075, %v4083
    %v4085 = vadd.f32 %v796, %v4084
    %v4086 = vtanh.pop %v4085
    %v4087 = vsub.f32 1.0, %v4082
    %v4088 = vmul.f32 %v4087, %v4086
    %v4089 = vmul.f32 %v4082, %v3986
    %v4090 = vadd.f32 %v4088, %v4089
    %v4091 = vpack.c.bf16 %v3570, %v3466
    %v4092 = vpack.c.bf16 %v3778, %v3674
    %v4093 = vpack.c.bf16 %v3986, %v3882
    %v4094 = vpack.c.bf16 %v4090, %v4090
    %s4095 = scalar_lea.vmem [#allocation7], 256
    %v4096 = vld [vmem:[%s4095] sm:$0xf]
    %v4097 = vld [vmem:[%s4095 + $0x4] sm:$0xf]
    %v4098 = vld [vmem:[%s4095 + $0x8] sm:$0xf]
    %v4099 = vld [vmem:[%s4095 + $0xc] sm:$0xf]
    %v4100 = vld [vmem:[%s4095 + $0x10] sm:$0xf]
    %v4101 = vld [vmem:[%s4095 + $0x14] sm:$0xf]
    %v4102 = vld [vmem:[%s4095 + $0x18] sm:$0xf]
    %v4103 = vld [vmem:[%s4095 + $0x1c] sm:$0xf]
    %v4104 = vld [vmem:[%s4095 + $0x20] sm:$0xf]
    %v4105 = vld [vmem:[%s4095 + $0x24] sm:$0xf]
    %v4106 = vld [vmem:[%s4095 + $0x28] sm:$0xf]
    %v4107 = vld [vmem:[%s4095 + $0x2c] sm:$0xf]
    %v4108 = vld [vmem:[%s4095 + $0x30] sm:$0xf]
    %v4109 = vld [vmem:[%s4095 + $0x34] sm:$0xf]
    %v4110 = vld [vmem:[%s4095 + $0x38] sm:$0xf]
    %v4111 = vld [vmem:[%s4095 + $0x3c] sm:$0xf]
    %s4112 = scalar_lea.vmem %s6, 4
    %v4113 = vld [vmem:[%s4112] sm:$0x1]
    %v4115 = vlaneseq
    %v4116 = vshrl.u32 %v4115, 7
    %v4117 = vsub.s32 0, %v4116
    %v4118 = vrot.slane %v4113, %v4117
    %v4136 = vunpack.c.l.b16 %v4096
    %v4137 = vunpack.c.l.b16 %v4097
    %v4138 = vunpack.c.l.b16 %v4098
    %v4139 = vunpack.c.l.b16 %v4099
    %v4140 = vunpack.c.l.b16 %v4100
    %v4141 = vunpack.c.l.b16 %v4101
    %v4142 = vunpack.c.l.b16 %v4102
    %v4143 = vunpack.c.l.b16 %v4103
    %v4144 = vunpack.c.l.b16 %v4104
    %v4145 = vunpack.c.l.b16 %v4105
    %v4146 = vunpack.c.l.b16 %v4106
    %v4147 = vunpack.c.l.b16 %v4107
    %v4148 = vunpack.c.l.b16 %v4108
    %v4149 = vunpack.c.l.b16 %v4109
    %v4150 = vunpack.c.l.b16 %v4110
    %v4151 = vunpack.c.l.b16 %v4111
    %v4152 = vpack.c.b16 %v4137, %v4136
    %v4153 = vpack.c.b16 %v4139, %v4138
    %v4154 = vpack.c.b16 %v4141, %v4140
    %v4155 = vpack.c.b16 %v4143, %v4142
    %v4156 = vpack.c.b16 %v4145, %v4144
    %v4157 = vpack.c.b16 %v4147, %v4146
    %v4158 = vpack.c.b16 %v4149, %v4148
    %v4159 = vpack.c.b16 %v4151, %v4150
    %4168 = vmatprep.subr.bf16.mxu0 0
    %4169 = vmatpush1.bf16.msra.mxu0 %v4152
    %4170 = vmatprep.subr.bf16.mxu0 0
    %4171 = vmatpush1.bf16.msra.mxu0 %v4153
    %4172 = vmatprep.subr.bf16.mxu0 0
    %4173 = vmatpush1.bf16.msra.mxu0 %v4154
    %4174 = vmatprep.subr.bf16.mxu0 0
    %4175 = vmatpush1.bf16.msra.mxu0 %v4155
    %4176 = vmatprep.subr.bf16.mxu0 0
    %4177 = vmatpush1.bf16.msra.mxu0 %v4156
    %4178 = vmatprep.subr.bf16.mxu0 0
    %4179 = vmatpush1.bf16.msra.mxu0 %v4157
    %4180 = vmatprep.subr.bf16.mxu0 0
    %4181 = vmatpush1.bf16.msra.mxu0 %v4158
    %4182 = vmatprep.subr.bf16.mxu0 0
    %4183 = vmatpush1.bf16.msra.mxu0 %v4159
    %4184 = vmatprep.subr.bf16.mxu0 0
    %4185 = vmatpush1.bf16.msra.mxu0 0
    %4186 = vmatprep.subr.bf16.mxu0 0
    %4187 = vmatpush1.bf16.msra.mxu0 0
    %4188 = vmatprep.subr.bf16.mxu0 0
    %4189 = vmatpush1.bf16.msra.mxu0 0
    %4190 = vmatprep.subr.bf16.mxu0 0
    %4191 = vmatpush1.bf16.msra.mxu0 0
    %4192 = vmatprep.subr.bf16.mxu0 0
    %4193 = vmatpush1.bf16.msra.mxu0 0
    %4194 = vmatprep.subr.bf16.mxu0 0
    %4195 = vmatpush1.bf16.msra.mxu0 0
    %4196 = vmatprep.subr.bf16.mxu0 0
    %4197 = vmatpush1.bf16.msra.mxu0 0
    %4198 = vmatprep.subr.bf16.mxu0 0
    %4199 = vmatpush1.bf16.msra.mxu0 0
    %4200 = vmatprep.mubr.bf16.mxu0 0
    %4201 = vmatmul.mubr.bf16.gmra.mrb[0].mxu0 %v4091
    %v4202 = vpop.f32.mrb[0].mxu0
    %v4203 = vadd.f32 %v4118, %v4202
    %v4204 = vpop.f32.mrb[0].mxu0
    %v4205 = vpop.f32.mrb[0].mxu0
    %v4206 = vadd.f32 %v4118, %v4205
    %v4207 = vpop.f32.mrb[0].mxu0
    %4208 = vmatprep.mubr.bf16.mxu0 0
    %4209 = vmatmul.mubr.bf16.gmra.mrb[0].mxu0 %v4092
    %v4210 = vpop.f32.mrb[0].mxu0
    %v4211 = vadd.f32 %v4118, %v4210
    %v4212 = vpop.f32.mrb[0].mxu0
    %v4213 = vpop.f32.mrb[0].mxu0
    %v4214 = vadd.f32 %v4118, %v4213
    %v4215 = vpop.f32.mrb[0].mxu0
    %4216 = vmatprep.mubr.bf16.mxu0 0
    %4217 = vmatmul.mubr.bf16.gmra.mrb[0].mxu0 %v4093
    %v4218 = vpop.f32.mrb[0].mxu0
    %v4219 = vadd.f32 %v4118, %v4218
    %v4220 = vpop.f32.mrb[0].mxu0
    %v4221 = vpop.f32.mrb[0].mxu0
    %v4222 = vadd.f32 %v4118, %v4221
    %v4223 = vpop.f32.mrb[0].mxu0
    %4224 = vmatprep.mubr.bf16.mxu0 0
    %4225 = vmatmul.mubr.bf16.gmra.mrb[0].mxu0 %v4094
    %v4226 = vpop.f32.mrb[0].mxu0
    %v4227 = vadd.f32 %v4118, %v4226
    %v4228 = vpop.f32.mrb[0].mxu0
    %v4229 = vpop.f32.mrb[0].mxu0
    %v4230 = vpop.f32.mrb[0].mxu0
    %4231 = vdwg.mxu0
    %4232 = vst [vmem:[%s7 + $0x8] sm:$0xff] %v4203
    %4233 = vst [vmem:[%s7 + $0x10] sm:$0xff] %v4206
    %4234 = vst [vmem:[%s7 + $0x18] sm:$0xff] %v4211
    %4235 = vst [vmem:[%s7 + $0x20] sm:$0xff] %v4214
    %4236 = vst [vmem:[%s7 + $0x28] sm:$0xff] %v4219
    %4237 = vst [vmem:[%s7 + $0x30] sm:$0xff] %v4222
    %4238 = vst [vmem:[%s7 + $0x38] sm:$0xff] %v4227
    // Predicated region
    $region46: #{language_model_forward.1} parent=1 // pred_check
      _
    $region47: #{language_model_forward.1} parent=1 // pred_check_branch
      %4240 = sbr.rel (0) target = $region49
    $region48: #{language_model_forward.1} parent=1 // pred_region
      _
    $region49: #{language_model_forward.1} parent=1 // pred_fallthru
      _
    // Predicated region
    $region50: #{language_model_forward.1} parent=1 // pred_check
      _
    $region51: #{language_model_forward.1} parent=1 // pred_check_branch
      %4242 = sbr.rel (0) target = $region53
    $region52: #{language_model_forward.1} parent=1 // pred_region
      _
    $region53: #{language_model_forward.1} parent=1 // pred_fallthru
      _
    %4243 = vsyncpa [#allocation3], 1
    %4244 = vsyncpa [#allocation5], 1
    %4245 = vsyncpa [#allocation8], 1

</llo_original>
